<compile_context>
chip_gen: v7x
topology: tpu7x:2x2x1
jax: 0.10.0
libtpu: 0.0.40
codegen_flags: <defaults>
</compile_context>

<pallas_src>
import functools

import numpy as np
import jax
import jax.numpy as jnp
from jax import lax
from jax.experimental import pallas as pl
from jax.experimental.pallas import tpu as pltpu


# ---------------------------------------------------------------------------
# Kernel
# ---------------------------------------------------------------------------
def _resize_conv_kernel(row0_ref,   # scalar prefetch (SMEM): (n_t,) int32 window starts
                        xg_ref,     # (1, Cin, H, Wp)   column-expanded original rows
                        rg_ref,     # (1, tile_hp, win) one-hot row-gather matrix
                        w_ref,      # (Cout, K*K*Cin)   conv weights, full im2col layout
                        b_ref,      # (Cout, 1)         bias
                        o_ref,      # (1, Cout, tile_h, Wo)  NCHW output tile
                        *, K, tile_h, win, Wo, Cin, conv_precision):
    t = pl.program_id(1)
    tile_hp = tile_h + K - 1

    # Contiguous window of original-resolution rows this tile needs (one pl.ds slice).
    r0 = row0_ref[t]
    xwin = xg_ref[0, :, pl.ds(r0, win), :]                     # (Cin, win, Wp)

    # Fused nearest-upsample + reflection-pad along H:
    # one batched 0/1 row-gather matmul (exact at HIGHEST), replaces the previous
    # fully-unrolled per-row copy loop.
    rg = jnp.broadcast_to(rg_ref[...], (Cin, tile_hp, win))    # hoisted, once per tile
    xr = jnp.einsum("cpr,crw->cpw", rg, xwin,
                    precision=lax.Precision.HIGHEST,
                    preferred_element_type=jnp.float32)        # (Cin, tile_hp, Wp)

    # Full im2col over (kh, kw): contraction = K*K*Cin -> single conv matmul.
    xcol = jnp.concatenate(
        [xr[:, kh:kh + tile_h, kw:kw + Wo]
         for kh in range(K) for kw in range(K)], axis=0)       # (K*K*Cin, tile_h, Wo)

    acc = jnp.einsum("oc,cpw->opw", w_ref[...], xcol,
                     precision=conv_precision,
                     preferred_element_type=jnp.float32)       # (Cout, tile_h, Wo)
    acc = acc + b_ref[...][:, :, None]
    o_ref[0] = acc.astype(o_ref.dtype)                         # lane-dense store (lanes=Wo)


# ---------------------------------------------------------------------------
# Helpers
# ---------------------------------------------------------------------------
def _reflect_upsample_map(length, pad_lo, up_size, scale):
    """padded-upsampled coordinate -> original coordinate (numpy int32, (length,))."""
    i = np.arange(length, dtype=np.int64) - pad_lo
    i = np.where(i < 0, -i, i)                             # reflect (edge-excluding), low
    i = np.where(i >= up_size, 2 * up_size - 2 - i, i)     # reflect, high
    return (i // scale).astype(np.int32)                   # undo nearest upsample


def _tile_working_set_bytes(th, H, Wp, Wo, Cin, Cout, K, s):
    thp = th + K - 1
    win = min(H, (thp - 1) // s + K // s + 3)
    return 4 * (2 * thp * win                  # row-gather block (double-buffered)
                + 3 * Cout * th * Wo           # output block (x2) + f32 accumulator
                + Cin * thp * Wp               # row-gathered tile
                + Cin * win * Wp               # row-window slice
                + 2 * K * K * Cin * th * Wo)   # im2col + slice temporaries


def _default_tile_budget():
    """Per-tile VMEM budget: smaller on v7x (64 MiB VMEM), larger on v5e/v6e (128 MiB)."""
    try:
        vmem = getattr(pltpu.get_tpu_info(), "vmem_capacity_bytes", 128 << 20)
    except Exception:
        vmem = 128 << 20
    return (8 << 20) if vmem <= (64 << 20) else (14 << 20)


def _pick_tile_h(Ho, H, Wp, Wo, Cin, Cout, K, s, n_batch, budget_bytes):
    cands = [d for d in range(8, Ho + 1, 8) if Ho % d == 0]
    if not cands:
        return Ho                      # tiny / odd output heights: single full tile
    if n_batch == 1 and len(cands) > 1:
        # keep >= 2 grid steps so both TensorCores (v7x megacore) get work
        cands = [d for d in cands if d <= max(8, Ho // 2)] or cands
    for cand in sorted(cands, reverse=True):
        if _tile_working_set_bytes(cand, H, Wp, Wo, Cin, Cout, K, s) <= budget_bytes:
            return cand
    return min(cands)


# ---------------------------------------------------------------------------
# Public wrapper (forward pass of ResizeConv2D)
# ---------------------------------------------------------------------------
def resize_conv2d(x, weight, bias, *, kernel_size, scale_factor=2,
                  output_size=None, tile_h=None,
                  conv_precision=lax.Precision.HIGHEST,
                  vmem_budget_bytes=None):
    """x: (N, Cin, H, W); weight: (Cout, Cin, K, K); bias: (Cout,).  Returns NCHW."""
    N, Cin, H, W = x.shape
    Cout, Cin_w, K, K2 = weight.shape
    assert K == kernel_size and K2 == K and Cin_w == Cin
    s = int(scale_factor)

    # ReflectionPad2d argument semantics from the module:
    #   odd K : pad = K//2 on all sides
    #   even K: (left, right, top, bottom) = (K//2, K//2 - 1, K//2, K//2 - 1)
    if K % 2 == 1:
        p_t = p_b = p_l = p_r = K // 2
    else:
        p_l, p_r, p_t, p_b = K // 2, K // 2 - 1, K // 2, K // 2 - 1

    sH, sW = s * H, s * W
    Hp, Wp = sH + p_t + p_b, sW + p_l + p_r
    Ho, Wo = Hp - K + 1, Wp - K + 1            # == sH, sW

    # Tiny gather maps (static numpy): padded-upsampled coordinate -> original coordinate.
    row_map = _reflect_upsample_map(Hp, p_t, sH, s)     # (Hp,)
    col_map = _reflect_upsample_map(Wp, p_l, sW, s)     # (Wp,)

    # Fused upsample+reflect along W: one cheap XLA gather on ORIGINAL-resolution rows.
    # (No per-tile W x Wp matmul; the full upsampled image is never materialized.)
    x_g = jnp.take(x, jnp.asarray(col_map), axis=3)     # (N, Cin, H, Wp)

    if vmem_budget_bytes is None:
        vmem_budget_bytes = _default_tile_budget()
    if tile_h is None:
        tile_h = _pick_tile_h(Ho, H, Wp, Wo, Cin, Cout, K, s, N, vmem_budget_bytes)
    assert Ho % tile_h == 0 and (tile_h % 8 == 0 or tile_h == Ho), (Ho, tile_h)
    n_t = Ho // tile_h
    tile_hp = tile_h + K - 1

    # Per-tile contiguous row windows + one-hot gather matrices (tiny, static).
    starts = np.arange(n_t) * tile_h
    rows = row_map[starts[:, None] + np.arange(tile_hp)[None, :]]     # (n_t, tile_hp)
    lo, hi = rows.min(axis=1), rows.max(axis=1)
    win = int((hi - lo + 1).max())
    row0 = np.clip(np.minimum(lo, H - win), 0, None).astype(np.int32)  # (n_t,)
    rel = rows - row0[:, None]
    assert (rel >= 0).all() and (rel < win).all()
    rg = (rel[..., None] == np.arange(win)[None, None, :]).astype(np.float32)

    # Weights: (Cout, Cin, Kh, Kw) -> (Cout, Kh*Kw*Cin), matching xcol's channel order.
    w2 = jnp.transpose(weight, (0, 2, 3, 1)).reshape(Cout, K * K * Cin)
    b2 = bias.reshape(Cout, 1)

    kernel = functools.partial(_resize_conv_kernel, K=K, tile_h=tile_h, win=win,
                               Wo=Wo, Cin=Cin, conv_precision=conv_precision)

    itemsize = 4
    flops = int(2 * N * Ho * Wo * K * K * Cin * Cout            # conv
                + 2 * N * n_t * Cin * tile_hp * win * Wp)       # row-gather matmul
    bytes_accessed = int(itemsize * (x_g.size + rg.size + w2.size + b2.size
                                     + N * Cout * Ho * Wo) + 4 * row0.size)

    est_fixed = itemsize * 2 * Cin * H * Wp                      # resident image block x2
    est_tile = _tile_working_set_bytes(tile_h, H, Wp, Wo, Cin, Cout, K, s)
    vmem_limit = int(min(56 << 20, max(24 << 20, 2 * (est_fixed + est_tile))))

    out = pl.pallas_call(
        kernel,
        out_shape=jax.ShapeDtypeStruct((N, Cout, Ho, Wo), x.dtype),
        grid_spec=pltpu.PrefetchScalarGridSpec(
            num_scalar_prefetch=1,
            grid=(N, n_t),
            in_specs=[
                pl.BlockSpec((1, Cin, H, Wp), lambda n, t, r0: (n, 0, 0, 0)),
                pl.BlockSpec((1, tile_hp, win), lambda n, t, r0: (t, 0, 0)),
                pl.BlockSpec((Cout, K * K * Cin), lambda n, t, r0: (0, 0)),
                pl.BlockSpec((Cout, 1), lambda n, t, r0: (0, 0)),
            ],
            out_specs=pl.BlockSpec((1, Cout, tile_h, Wo),
                                   lambda n, t, r0: (n, 0, t, 0)),
        ),
        compiler_params=pltpu.CompilerParams(
            dimension_semantics=("parallel", "parallel"),
            vmem_limit_bytes=vmem_limit),
        cost_estimate=pl.CostEstimate(flops=flops, transcendentals=0,
                                      bytes_accessed=bytes_accessed),
    )(jnp.asarray(row0), x_g, jnp.asarray(rg), w2, b2)

    if output_size is not None:
        return out.reshape(output_size)        # mimics torch .view on NCHW output
    return out


# ---------------------------------------------------------------------------
# Pure-JAX reference (explicit upsample + reflect pad + conv)
# ---------------------------------------------------------------------------
def _reference(x, weight, bias, *, kernel_size, scale_factor=2):
    s = scale_factor
    K = kernel_size
    x_up = jnp.repeat(jnp.repeat(x, s, axis=2), s, axis=3)
    if K % 2 == 1:
        p_t = p_b = p_l = p_r = K // 2
    else:
        p_l, p_r, p_t, p_b = K // 2, K // 2 - 1, K // 2, K // 2 - 1
    x_pad = jnp.pad(x_up, ((0, 0), (0, 0), (p_t, p_b), (p_l, p_r)), mode="reflect")
    out = lax.conv_general_dilated(
        x_pad, weight, window_strides=(1, 1), padding="VALID",
        dimension_numbers=("NCHW", "OIHW", "NCHW"),
        precision=lax.Precision.HIGHEST)
    return out + bias.reshape(1, -1, 1, 1)


def _make_params(key, Cout, Cin, K):
    k_w, k_b = jax.random.split(key)
    fan_in = Cin * K * K
    bound = 1.0 / (fan_in ** 0.5)
    w = jax.random.uniform(k_w, (Cout, Cin, K, K), jnp.float32, -bound, bound)
    b = jax.random.uniform(k_b, (Cout,), jnp.float32, -bound, bound)
    return w, b


if __name__ == "__main__":
    key = jax.random.PRNGKey(0)
    k1, k2, k3, k4 = jax.random.split(key, 4)

    # Case 1: odd kernel (K=3), 2 row-tiles to exercise the tiled path.
    N, Cin, H, W, Cout, K, s = 2, 4, 16, 16, 8, 3, 2
    x = jax.random.normal(k1, (N, Cin, H, W), dtype=jnp.float32)
    w, b = _make_params(k2, Cout, Cin, K)
    out = jax.block_until_ready(
        resize_conv2d(x, w, b, kernel_size=K, scale_factor=s, tile_h=16))
    ref = _reference(x, w, b, kernel_size=K, scale_factor=s)
    assert out.shape == (N, Cout, H * s, W * s), out.shape
    assert jnp.allclose(out, ref, atol=1e-3, rtol=1e-3), "mismatch (K=3)"

    # Case 2: even kernel (K=4, asymmetric reflection pad), non-square, auto tile_h.
    N2, Cin2, H2, W2, Cout2, K2 = 1, 3, 8, 12, 6, 4
    x2 = jax.random.normal(k3, (N2, Cin2, H2, W2), dtype=jnp.float32)
    w2_, b2_ = _make_params(k4, Cout2, Cin2, K2)
    out2 = jax.block_until_ready(
        resize_conv2d(x2, w2_, b2_, kernel_size=K2, scale_factor=s))
    ref2 = _reference(x2, w2_, b2_, kernel_size=K2, scale_factor=s)
    assert out2.shape == (N2, Cout2, H2 * s, W2 * s), out2.shape
    assert jnp.allclose(out2, ref2, atol=1e-3, rtol=1e-3), "mismatch (K=4)"

    print("KERNEL_OK")
</pallas_src>

<mosaic_0001>
module attributes {stable_mosaic.version = 11 : i64} {
  func.func @_resize_conv_kernel(%arg0: i32, %arg1: i32, %arg2: memref<2xi32, #tpu.memory_space<smem>>, %arg3: memref<1x4x16x34xf32, #tpu.memory_space<vmem>>, %arg4: memref<1x18x9xf32, #tpu.memory_space<vmem>>, %arg5: memref<8x36xf32, #tpu.memory_space<vmem>>, %arg6: memref<8x1xf32, #tpu.memory_space<vmem>>, %arg7: memref<1x8x16x32xf32, #tpu.memory_space<vmem>>) attributes {dimension_semantics = [#tpu.dimension_semantics<parallel>, #tpu.dimension_semantics<parallel>], iteration_bounds = array<i64: 2, 2>, scalar_prefetch = 1 : i64, scratch_operands = 0 : i64, tpu.core_type = #tpu.core_type<tc>, window_params = [{transform_indices = @transform_0, window_bounds = array<i64: 1, 4, 16, 34>}, {transform_indices = @transform_1, window_bounds = array<i64: 1, 18, 9>}, {pipeline_mode = #tpu.pipeline_mode<synchronous>, transform_indices = @transform_2, window_bounds = array<i64: 8, 36>}, {pipeline_mode = #tpu.pipeline_mode<synchronous>, transform_indices = @transform_3, window_bounds = array<i64: 8, 1>}, {transform_indices = @transform_4, window_bounds = array<i64: 1, 8, 16, 32>}]} {
    %0 = arith.index_cast %arg1 : i32 to index
    %1 = memref.load %arg2[%0] : memref<2xi32, #tpu.memory_space<smem>>
    %c0 = arith.constant 0 : index
    %c0_0 = arith.constant 0 : index
    %2 = arith.index_cast %1 : i32 to index
    %c0_1 = arith.constant 0 : index
    %3 = vector.load %arg3[%c0, %c0_0, %2, %c0_1] : memref<1x4x16x34xf32, #tpu.memory_space<vmem>>, vector<1x4x9x34xf32>
    %4 = vector.shape_cast %3 : vector<1x4x9x34xf32> to vector<4x9x34xf32>
    %c0_2 = arith.constant 0 : index
    %c0_3 = arith.constant 0 : index
    %c0_4 = arith.constant 0 : index
    %5 = vector.load %arg4[%c0_2, %c0_3, %c0_4] : memref<1x18x9xf32, #tpu.memory_space<vmem>>, vector<1x18x9xf32>
    %6 = vector.shape_cast %5 : vector<1x18x9xf32> to vector<1x18x9xf32>
    %7 = vector.broadcast %6 : vector<1x18x9xf32> to vector<4x18x9xf32>
    "tpu.trace_start"() <{level = 10 : i32, message = "cpr,crw->cpw"}> : () -> ()
    %cst = arith.constant dense<0.000000e+00> : vector<4x18x34xf32>
    %8 = tpu.matmul %7, %4, %cst {dimension_numbers = #tpu.dot_dimension_numbers<[2], [1], [1], [2], [0, 0, 0, 1, 1, 2], [0], [0]>, precision = #tpu.contract_precision<fp32>} : vector<4x18x9xf32>, vector<4x9x34xf32>, vector<4x18x34xf32> -> vector<4x18x34xf32>
    "tpu.trace_stop"() : () -> ()
    %9 = vector.extract_strided_slice %8 {offsets = [0, 0, 0], sizes = [4, 16, 32], strides = [1, 1, 1]} : vector<4x18x34xf32> to vector<4x16x32xf32>
    %10 = vector.extract_strided_slice %8 {offsets = [0, 0, 1], sizes = [4, 16, 32], strides = [1, 1, 1]} : vector<4x18x34xf32> to vector<4x16x32xf32>
    %11 = vector.extract_strided_slice %8 {offsets = [0, 0, 2], sizes = [4, 16, 32], strides = [1, 1, 1]} : vector<4x18x34xf32> to vector<4x16x32xf32>
    %12 = vector.extract_strided_slice %8 {offsets = [0, 1, 0], sizes = [4, 16, 32], strides = [1, 1, 1]} : vector<4x18x34xf32> to vector<4x16x32xf32>
    %13 = vector.extract_strided_slice %8 {offsets = [0, 1, 1], sizes = [4, 16, 32], strides = [1, 1, 1]} : vector<4x18x34xf32> to vector<4x16x32xf32>
    %14 = vector.extract_strided_slice %8 {offsets = [0, 1, 2], sizes = [4, 16, 32], strides = [1, 1, 1]} : vector<4x18x34xf32> to vector<4x16x32xf32>
    %15 = vector.extract_strided_slice %8 {offsets = [0, 2, 0], sizes = [4, 16, 32], strides = [1, 1, 1]} : vector<4x18x34xf32> to vector<4x16x32xf32>
    %16 = vector.extract_strided_slice %8 {offsets = [0, 2, 1], sizes = [4, 16, 32], strides = [1, 1, 1]} : vector<4x18x34xf32> to vector<4x16x32xf32>
    %17 = vector.extract_strided_slice %8 {offsets = [0, 2, 2], sizes = [4, 16, 32], strides = [1, 1, 1]} : vector<4x18x34xf32> to vector<4x16x32xf32>
    %18 = tpu.concatenate %9, %10, %11, %12, %13, %14, %15, %16, %17 in 0 : vector<4x16x32xf32>, vector<4x16x32xf32>, vector<4x16x32xf32>, vector<4x16x32xf32>, vector<4x16x32xf32>, vector<4x16x32xf32>, vector<4x16x32xf32>, vector<4x16x32xf32>, vector<4x16x32xf32> -> vector<36x16x32xf32>
    %c0_5 = arith.constant 0 : index
    %c0_6 = arith.constant 0 : index
    %19 = vector.load %arg5[%c0_5, %c0_6] : memref<8x36xf32, #tpu.memory_space<vmem>>, vector<8x36xf32>
    "tpu.trace_start"() <{level = 10 : i32, message = "oc,cpw->opw"}> : () -> ()
    %cst_7 = arith.constant dense<0.000000e+00> : vector<8x16x32xf32>
    %20 = tpu.matmul %19, %18, %cst_7 {dimension_numbers = #tpu.dot_dimension_numbers<[1], [0], [0], [1, 2], [0, 0, 1, 1, 1, 2], [], []>, precision = #tpu.contract_precision<fp32>} : vector<8x36xf32>, vector<36x16x32xf32>, vector<8x16x32xf32> -> vector<8x16x32xf32>
    "tpu.trace_stop"() : () -> ()
    %c0_8 = arith.constant 0 : index
    %c0_9 = arith.constant 0 : index
    %21 = vector.load %arg6[%c0_8, %c0_9] : memref<8x1xf32, #tpu.memory_space<vmem>>, vector<8x1xf32>
    %22 = vector.shape_cast %21 : vector<8x1xf32> to vector<8x1x1xf32>
    %23 = vector.broadcast %22 : vector<8x1x1xf32> to vector<8x16x32xf32>
    %24 = arith.addf %20, %23 : vector<8x16x32xf32>
    %c0_10 = arith.constant 0 : index
    %c0_11 = arith.constant 0 : index
    %c0_12 = arith.constant 0 : index
    %c0_13 = arith.constant 0 : index
    %25 = vector.load %arg7[%c0_10, %c0_11, %c0_12, %c0_13] : memref<1x8x16x32xf32, #tpu.memory_space<vmem>>, vector<1x8x16x32xf32>
    %26 = vector.shape_cast %25 : vector<1x8x16x32xf32> to vector<8x16x32xf32>
    %27 = vector.shape_cast %24 : vector<8x16x32xf32> to vector<1x8x16x32xf32>
    tpu.vector_store %arg7[%c0_10, %c0_11, %c0_12, %c0_13], %27 {strides = array<i32>} : memref<1x8x16x32xf32, #tpu.memory_space<vmem>>, vector<1x8x16x32xf32>,
    return
  }
  func.func @transform_0(%arg0: i32, %arg1: i32, %arg2: memref<2xi32, #tpu.memory_space<smem>>) -> (i32, i32, i32, i32) {
    %c0_i32 = arith.constant 0 : i32
    %c0_i32_0 = arith.constant 0 : i32
    %c0_i32_1 = arith.constant 0 : i32
    %c0_i32_2 = arith.constant 0 : i32
    return %arg0, %c0_i32, %c0_i32_0, %c0_i32_1 : i32, i32, i32, i32
  }
  func.func @transform_1(%arg0: i32, %arg1: i32, %arg2: memref<2xi32, #tpu.memory_space<smem>>) -> (i32, i32, i32) {
    %c0_i32 = arith.constant 0 : i32
    %c0_i32_0 = arith.constant 0 : i32
    %c0_i32_1 = arith.constant 0 : i32
    return %arg1, %c0_i32, %c0_i32_0 : i32, i32, i32
  }
  func.func @transform_2(%arg0: i32, %arg1: i32, %arg2: memref<2xi32, #tpu.memory_space<smem>>) -> (i32, i32) {
    %c0_i32 = arith.constant 0 : i32
    %c0_i32_0 = arith.constant 0 : i32
    %c0_i32_1 = arith.constant 0 : i32
    return %c0_i32, %c0_i32_0 : i32, i32
  }
  func.func @transform_3(%arg0: i32, %arg1: i32, %arg2: memref<2xi32, #tpu.memory_space<smem>>) -> (i32, i32) {
    %c0_i32 = arith.constant 0 : i32
    %c0_i32_0 = arith.constant 0 : i32
    %c0_i32_1 = arith.constant 0 : i32
    return %c0_i32, %c0_i32_0 : i32, i32
  }
  func.func @transform_4(%arg0: i32, %arg1: i32, %arg2: memref<2xi32, #tpu.memory_space<smem>>) -> (i32, i32, i32, i32) {
    %c0_i32 = arith.constant 0 : i32
    %c0_i32_0 = arith.constant 0 : i32
    %c0_i32_1 = arith.constant 0 : i32
    return %arg0, %c0_i32, %arg1, %c0_i32_0 : i32, i32, i32, i32
  }
}

</mosaic_0001>

<llo_original>
// kernel: tpu_custom_call.1
$region0: #{tpu_custom_call.1}
  #allocation0 [shape = 'u32[]', space=smem, size = 0x4, offset = 0x4, fixed_abs, tag = 'smem constant byte address 0x4 - core index']
  #allocation1 [shape = 'u32[144,128]{1,0:T(1,128)}', space=vmem, size = 0x12000, scoped, tag = 'internal scratch']
  #allocation2 [shape = 's32[1]{0}', space=sflag, size = 0x4, scoped, tag = 'scoped memory for tpu_custom_call.1']
  #allocation3 [shape = 'u8[512]{0}', space=smem, size = 0x200, scoped, tag = 'prefetched SMEM operand 0']
  #allocation8 [shape = 's32[]', space=sflag, size = 0x4, offset = 0, fixed_abs, tag = 'sflag constant byte address 0x0 - dummy sync flag']
  %s0 = inlined_call_operand.vmem [shape: s32[2], index: 0, kind: input, shape index: {}]
  %s1 = inlined_call_operand.hbm [shape: f32[2,4,16,34], index: 1, kind: input, shape index: {}]
  %s2 = inlined_call_operand.vmem [shape: f32[2,18,9], index: 2, kind: input, shape index: {}]
  %s3 = inlined_call_operand.vmem [shape: f32[8,36], index: 3, kind: input, shape index: {}]
  %s4 = inlined_call_operand.vmem [shape: f32[8,1], index: 4, kind: input, shape index: {}]
  %s5 = inlined_call_operand.hbm [shape: f32[2,8,32,32], index: 5, kind: output, shape index: {}]
  %s6 = sld [smem:[#allocation0]]
  $region53: #{tpu_custom_call.1} parent=0
    _
  %s8 = ssub.s32 1, %s6
  %s9 = scalar_select 0, %s8, %s6
  %s10 = sshll.u32 %s0, 4
  %s11 = int_to_ptr.vmem [resolvable:$true] %s10
  %13 = dma.vmem_to_smem %s11, 16, [#allocation3], [#allocation2]
  %14 = dma.done [#allocation2], 16
  %15 = sfence
  $region1: #{tpu_custom_call.1} parent=0
    #allocation4 [shape = 'u8[65536]{0}', space=vmem, size = 0x10000, scoped, tag = 'input window, operand 1']
    #allocation5 [shape = 's32[2]{0}', space=sflag, size = 0x8, scoped, tag = 'scoped memory for tpu_custom_call.1']
    #allocation6 [shape = 's32[2]{0}', space=sflag, size = 0x8, scoped, tag = 'scoped memory for tpu_custom_call.1']
    #allocation7 [shape = 'u8[131072]{0}', space=vmem, size = 0x20000, scoped, tag = 'output window, operand 0']
    %16 = vsyncpa [#allocation5], 0
    %s17 = scalar_lea.sflag [#allocation5], 1
    %18 = vsyncpa %s17, 0
    %19 = vsyncpa [#allocation6], 0
    %s20 = scalar_lea.sflag [#allocation6], 1
    %21 = vsyncpa %s20, 0
    loop: start=0, step=1, limit=6
    $region2: #{tpu_custom_call.1} parent=1 // loop_pre_header
      _
    $region3: #{tpu_custom_call.1} parent=1 // loop_header
      %s23 = sphi 0, %s27
      %p24 = scmp.ge.s32.totalorder %s23, 6
      %s30 = sphi 0, %s42
      %s31 = sphi 0, %s38
      %s32 = sphi 0, %s30
      %s33 = sphi 0, %s31
      %s34 = sphi 0, %s32
      %s35 = sphi 0, %s33
      %s45 = sphi 0, %s47
      %s48 = sphi 0, %s45
      %s49 = sphi 0, %s48
      %s65 = sphi 0, %s49
      %s71 = sphi 0, %s73
      %s74 = sphi 0, %s71
      %s75 = sphi 0, %s74
      %s91 = sphi 0, %s75
      %s95 = sphi 0, %s95
      %s97 = sphi 0, %s95
      %s98 = sphi 0, %s97
      %s112 = sphi 0, %s98
      %s116 = sphi 0, %s116
      %s118 = sphi 0, %s116
      %s119 = sphi 0, %s118
      %s133 = sphi 0, %s119
      %s141 = sphi 0, %s143
      %s144 = sphi 0, %s141
      %s145 = sphi 0, %s144
      %s161 = sphi 0, %s145
    $region4: #{tpu_custom_call.1} parent=1 // loop_header_branch
      %26 = sbr.rel (%p24) target = $region8
    $region5: #{tpu_custom_call.1} parent=1 // loop_body
      %s28 = ssub.s32 %s23, 1
      %s29 = ssub.s32 %s23, 2
      %s36 = sadd.s32 1, %s31
      %p37 = scmp.ge.s32.totalorder %s36, 2
      %s38 = scalar_select %p37, 0, %s36
      %s39 = sadd.s32 1, %s30
      %s40 = scalar_select %p37, %s39, %s30
      %p41 = scmp.ge.s32.totalorder %s40, 2
      %s42 = scalar_select %p41, 0, %s40
      %s43 = ssub.s32 %s30, %s42
      %p44 = scmp.eq.s32.totalorder %s43, 0
      %s46 = sadd.s32 %s45, 1
      %s47 = scalar_select %p44, %s45, %s46
      %p50 = pneg %p44
      %p51 = scmp.eq.s32.totalorder %s23, 3
      %p52 = por %p50, %p51
      %p53 = scmp.ne.s32.totalorder %s45, %s48
      %p54 = scmp.eq.s32.totalorder %s23, 0
      %p55 = por %p53, %p54
      %p56 = scmp.ne.s32.totalorder %s45, %s48
      %p57 = scmp.eq.s32.totalorder %s28, 3
      %p58 = por %p56, %p57
      %p59 = scmp.ne.s32.totalorder %s48, %s49
      %p60 = scmp.eq.s32.totalorder %s28, 0
      %p61 = por %p59, %p60
      %p62 = scmp.ne.s32.totalorder %s48, %s49
      %p63 = scmp.eq.s32.totalorder %s29, 3
      %p64 = por %p62, %p63
      %p66 = scmp.ne.s32.totalorder %s49, %s65
      %p67 = scmp.eq.s32.totalorder %s29, 0
      %p68 = por %p66, %p67
      %s69 = ssub.s32 %s31, %s38
      %p70 = scmp.eq.s32.totalorder %s69, 0
      %s72 = sadd.s32 %s71, 1
      %s73 = scalar_select %p70, %s71, %s72
      %p76 = pneg %p70
      %p77 = scmp.eq.s32.totalorder %s23, 3
      %p78 = por %p76, %p77
      %p79 = scmp.ne.s32.totalorder %s71, %s74
      %p80 = scmp.eq.s32.totalorder %s23, 0
      %p81 = por %p79, %p80
      %p82 = scmp.ne.s32.totalorder %s71, %s74
      %p83 = scmp.eq.s32.totalorder %s28, 3
      %p84 = por %p82, %p83
      %p85 = scmp.ne.s32.totalorder %s74, %s75
      %p86 = scmp.eq.s32.totalorder %s28, 0
      %p87 = por %p85, %p86
      %p88 = scmp.ne.s32.totalorder %s74, %s75
      %p89 = scmp.eq.s32.totalorder %s29, 3
      %p90 = por %p88, %p89
      %p92 = scmp.ne.s32.totalorder %s75, %s91
      %p93 = scmp.eq.s32.totalorder %s29, 0
      %p94 = por %p92, %p93
      %s96 = sadd.s32 %s95, 1
      %p99 = scmp.eq.s32.totalorder %s23, 3
      %p100 = scmp.ne.s32.totalorder %s95, %s97
      %p101 = scmp.eq.s32.totalorder %s23, 0
      %p102 = por %p100, %p101
      %p103 = scmp.ne.s32.totalorder %s95, %s97
      %p104 = scmp.eq.s32.totalorder %s28, 3
      %p105 = por %p103, %p104
      %p106 = scmp.ne.s32.totalorder %s97, %s98
      %p107 = scmp.eq.s32.totalorder %s28, 0
      %p108 = por %p106, %p107
      %p109 = scmp.ne.s32.totalorder %s97, %s98
      %p110 = scmp.eq.s32.totalorder %s29, 3
      %p111 = por %p109, %p110
      %p113 = scmp.ne.s32.totalorder %s98, %s112
      %p114 = scmp.eq.s32.totalorder %s29, 0
      %p115 = por %p113, %p114
      %s117 = sadd.s32 %s116, 1
      %p120 = scmp.eq.s32.totalorder %s23, 3
      %p121 = scmp.ne.s32.totalorder %s116, %s118
      %p122 = scmp.eq.s32.totalorder %s23, 0
      %p123 = por %p121, %p122
      %p124 = scmp.ne.s32.totalorder %s116, %s118
      %p125 = scmp.eq.s32.totalorder %s28, 3
      %p126 = por %p124, %p125
      %p127 = scmp.ne.s32.totalorder %s118, %s119
      %p128 = scmp.eq.s32.totalorder %s28, 0
      %p129 = por %p127, %p128
      %p130 = scmp.ne.s32.totalorder %s118, %s119
      %p131 = scmp.eq.s32.totalorder %s29, 3
      %p132 = por %p130, %p131
      %p134 = scmp.ne.s32.totalorder %s119, %s133
      %p135 = scmp.eq.s32.totalorder %s29, 0
      %p136 = por %p134, %p135
      %s137 = ssub.s32 %s30, %s42
      %s138 = ssub.s32 %s31, %s38
      %s139 = sor.u32 %s137, %s138
      %p140 = scmp.eq.s32.totalorder %s139, 0
      %s142 = sadd.s32 %s141, 1
      %s143 = scalar_select %p140, %s141, %s142
      %p146 = pneg %p140
      %p147 = scmp.eq.s32.totalorder %s23, 3
      %p148 = por %p146, %p147
      %p149 = scmp.ne.s32.totalorder %s141, %s144
      %p150 = scmp.eq.s32.totalorder %s23, 0
      %p151 = por %p149, %p150
      %p152 = scmp.ne.s32.totalorder %s141, %s144
      %p153 = scmp.eq.s32.totalorder %s28, 3
      %p154 = por %p152, %p153
      %p155 = scmp.ne.s32.totalorder %s144, %s145
      %p156 = scmp.eq.s32.totalorder %s28, 0
      %p157 = por %p155, %p156
      %p158 = scmp.ne.s32.totalorder %s144, %s145
      %p159 = scmp.eq.s32.totalorder %s29, 3
      %p160 = por %p158, %p159
      %p162 = scmp.ne.s32.totalorder %s145, %s161
      %p163 = scmp.eq.s32.totalorder %s29, 0
      %p164 = por %p162, %p163
      %p165 = scmp.le.s32.totalorder 1, %s23
      %p166 = scmp.lt.s32.totalorder %s23, 5
      %p167 = pnand %p165, %p166
      %p168 = pneg %p167
      // Predicated region
      $region9: #{tpu_custom_call.1} parent=5 // pred_check
        _
      $region10: #{tpu_custom_call.1} parent=5 // pred_check_branch
        %170 = sbr.rel (%p167) target = $region12
      $region11: #{tpu_custom_call.1} parent=5 // pred_region
        %s171 = ssub.s32 %s23, 1
        // Predicated region
        $region13: #{tpu_custom_call.1} parent=11 // pred_check
          %p172 = pneg %p108
        $region14: #{tpu_custom_call.1} parent=11 // pred_check_branch
          %174 = sbr.rel (%p172) target = $region16
        $region15: #{tpu_custom_call.1} parent=11 // pred_region
          _
        $region16: #{tpu_custom_call.1} parent=11 // pred_fallthru
          _
        // Predicated region
        $region17: #{tpu_custom_call.1} parent=11 // pred_check
          %p175 = pneg %p129
        $region18: #{tpu_custom_call.1} parent=11 // pred_check_branch
          %177 = sbr.rel (%p175) target = $region20
        $region19: #{tpu_custom_call.1} parent=11 // pred_region
          _
        $region20: #{tpu_custom_call.1} parent=11 // pred_fallthru
          _
      $region12: #{tpu_custom_call.1} parent=5 // pred_fallthru
        _
      %p178 = scmp.lt.s32.totalorder %s23, 4
      // Predicated region
      $region21: #{tpu_custom_call.1} parent=5 // pred_check
        %p179 = pneg %p178
      $region22: #{tpu_custom_call.1} parent=5 // pred_check_branch
        %181 = sbr.rel (%p179) target = $region24
      $region23: #{tpu_custom_call.1} parent=5 // pred_region
        // Predicated region
        $region25: #{tpu_custom_call.1} parent=23 // pred_check
          %p182 = pneg %p55
        $region26: #{tpu_custom_call.1} parent=23 // pred_check_branch
          %184 = sbr.rel (%p182) target = $region28
        $region27: #{tpu_custom_call.1} parent=23 // pred_region
          %s185 = sand.u32 %s45, 1
          %s186 = scalar_lea.sflag [#allocation5], %s185
          %s187 = sand.u32 %s45, 1
          %s188 = smul.addr %s187, 64
          %s189 = scalar_lea.vmem [#allocation4], %s188
          %s191 = ssub.s32 1024, 1024
          %192 = vsyncadd %s186, %s191
          %s193 = smul.addr %s30, 8
          %s194 = smul.addr %s193, 128
          %s195 = scalar_lea.hbm %s1, %s194
          %s196 = sshll.u32 %s189, 4
          %s197 = int_to_ptr.vmem [resolvable:$true] %s196
          %202 = dma.hbm_to_vmem [thread:$0]  %s195, 1024, %s197, %s186, 128, 128, 8
        $region28: #{tpu_custom_call.1} parent=23 // pred_fallthru
          _
        // Predicated region
        $region29: #{tpu_custom_call.1} parent=23 // pred_check
          %p203 = pneg %p81
        $region30: #{tpu_custom_call.1} parent=23 // pred_check_branch
          %205 = sbr.rel (%p203) target = $region32
        $region31: #{tpu_custom_call.1} parent=23 // pred_region
          %p206 = scmp.lt.s32.totalorder %s31, 1
          %s207 = scalar_select %p206, %s31, 1
          %s208 = smul.addr %s207, 3
          %s209 = smul.addr %s208, 8
          %s210 = scalar_lea.vmem %s2, %s209
        $region32: #{tpu_custom_call.1} parent=23 // pred_fallthru
          _
      $region24: #{tpu_custom_call.1} parent=5 // pred_fallthru
        _
      %p211 = scmp.le.s32.totalorder 1, %s23
      %p212 = scmp.lt.s32.totalorder %s23, 5
      %p213 = pnand %p211, %p212
      %p214 = pneg %p213
      // Predicated region
      $region33: #{tpu_custom_call.1} parent=5 // pred_check
        _
      $region34: #{tpu_custom_call.1} parent=5 // pred_check_branch
        %216 = sbr.rel (%p213) target = $region36
      $region35: #{tpu_custom_call.1} parent=5 // pred_region
        %s217 = ssub.s32 %s23, 1
        %s218 = sand.u32 %s48, 1
        %s219 = scalar_lea.sflag [#allocation5], %s218
        %s220 = sand.u32 %s48, 1
        %s221 = smul.addr %s220, 64
        %s222 = scalar_lea.vmem [#allocation4], %s221
        // Predicated region
        $region37: #{tpu_custom_call.1} parent=35 // pred_check
          %p223 = pneg %p61
        $region38: #{tpu_custom_call.1} parent=35 // pred_check_branch
          %225 = sbr.rel (%p223) target = $region40
        $region39: #{tpu_custom_call.1} parent=35 // pred_region
          %226 = dma.done %s219, 1024
        $region40: #{tpu_custom_call.1} parent=35 // pred_fallthru
          _
        %s227 = sand.u32 %s48, 1
        %s228 = scalar_lea.sflag [#allocation5], %s227
        %s229 = sand.u32 %s48, 1
        %s230 = smul.addr %s229, 64
        %s231 = scalar_lea.vmem [#allocation4], %s230
        %p232 = pneg %p61
        %p233 = pneg %p58
        %p234 = scmp.lt.s32.totalorder %s33, 1
        %s235 = scalar_select %p234, %s33, 1
        %s236 = smul.addr %s235, 3
        %s237 = smul.addr %s236, 8
        %s238 = scalar_lea.vmem %s2, %s237
        %p239 = pneg %p87
        %p240 = pneg %p84
        %p241 = pneg %p108
        %p242 = pneg %p105
        %p243 = pneg %p129
        %p244 = pneg %p126
        %p245 = pneg %p157
        %p246 = pneg %p154
        %s247 = sand.u32 %s144, 1
        %s248 = scalar_lea.sflag [#allocation6], %s247
        %s249 = sand.u32 %s144, 1
        %s250 = smul.addr %s249, 128
        %s251 = scalar_lea.vmem [#allocation7], %s250
        %p252 = scmp.lt.s32.totalorder %s33, 1
        %s253 = scalar_select %p252, %s33, 1
        %s254 = smul.addr %s253, 3
        %s255 = smul.addr %s254, 8
        %s256 = scalar_lea.vmem %s2, %s255
        %s257 = smul.u32 2, %s33
        %s258 = sld [smem:[#allocation3 + %s33]]
        %s259 = scalar_lea.vmem %s222, %s258 [#allocation4]
        %v260 = vld [vmem:[%s259] sm:$0xff]
        %v261 = vld [vmem:[%s259 + $0x8] sm:$0x1]
        %v262 = vld [vmem:[%s259 + $0x10] sm:$0xff]
        %v263 = vld [vmem:[%s259 + $0x18] sm:$0x1]
        %v264 = vld [vmem:[%s259 + $0x20] sm:$0xff]
        %v265 = vld [vmem:[%s259 + $0x28] sm:$0x1]
        %v266 = vld [vmem:[%s259 + $0x30] sm:$0xff]
        %v267 = vld [vmem:[%s259 + $0x38] sm:$0x1]
        %v268 = vld [vmem:[%s256] sm:$0xff]
        %v269 = vld [vmem:[%s256 + $0x8] sm:$0xff]
        %v270 = vld [vmem:[%s256 + $0x10] sm:$0x3]
        %vm271 = vcmask 72704
        %v273 = vsel %vm271, %v268, 0
        %v276 = vsel %vm271, %v269, 0
        %v279 = vsel %vm271, %v270, 0
        %vm281 = vcmask 1040384
        %v283 = vsel %vm281, %v261, 0
        %285 = vmatprep.subr.mxu0 0.0
        %v286 = vand.u32 %v260, 4294901760
        %287 = vmatpush1.msra.mxu0 %v286
        %288 = vmatprep.subr.mxu0 0.0
        %v289 = vand.u32 %v283, 4294901760
        %290 = vmatpush1.msra.mxu0 %v289
        %291 = vmatprep.subr.mxu0 0.0
        %292 = vmatpush1.msra.mxu0 0.0
        %293 = vmatprep.subr.mxu0 0.0
        %294 = vmatpush1.msra.mxu0 0.0
        %295 = vmatprep.subr.mxu0 0.0
        %296 = vmatpush1.msra.mxu0 0.0
        %297 = vmatprep.subr.mxu0 0.0
        %298 = vmatpush1.msra.mxu0 0.0
        %299 = vmatprep.subr.mxu0 0.0
        %300 = vmatpush1.msra.mxu0 0.0
        %301 = vmatprep.subr.mxu0 0.0
        %302 = vmatpush1.msra.mxu0 0.0
        %303 = vmatprep.subr.mxu0 0.0
        %304 = vmatpush1.msra.mxu0 0.0
        %305 = vmatprep.subr.mxu0 0.0
        %306 = vmatpush1.msra.mxu0 0.0
        %307 = vmatprep.subr.mxu0 0.0
        %308 = vmatpush1.msra.mxu0 0.0
        %309 = vmatprep.subr.mxu0 0.0
        %310 = vmatpush1.msra.mxu0 0.0
        %311 = vmatprep.subr.mxu0 0.0
        %312 = vmatpush1.msra.mxu0 0.0
        %313 = vmatprep.subr.mxu0 0.0
        %314 = vmatpush1.msra.mxu0 0.0
        %315 = vmatprep.subr.mxu0 0.0
        %316 = vmatpush1.msra.mxu0 0.0
        %317 = vmatprep.subr.mxu0 0.0
        %318 = vmatpush1.msra.mxu0 0.0
        %319 = vmatprep.subr.mxu0 0.0
        %320 = vmatpush1.msra.mxu0 0.0
        %321 = vmatprep.subr.mxu0 0.0
        %322 = vmatpush1.msra.mxu0 0.0
        %323 = vmatprep.subr.mxu0 0.0
        %324 = vmatpush1.msra.mxu0 0.0
        %325 = vmatprep.subr.mxu0 0.0
        %326 = vmatpush1.msra.mxu0 0.0
        %327 = vmatprep.subr.mxu0 0.0
        %328 = vmatpush1.msra.mxu0 0.0
        %329 = vmatprep.subr.mxu0 0.0
        %330 = vmatpush1.msra.mxu0 0.0
        %331 = vmatprep.subr.mxu0 0.0
        %332 = vmatpush1.msra.mxu0 0.0
        %333 = vmatprep.subr.mxu0 0.0
        %334 = vmatpush1.msra.mxu0 0.0
        %335 = vmatprep.subr.mxu0 0.0
        %336 = vmatpush1.msra.mxu0 0.0
        %337 = vmatprep.subr.mxu0 0.0
        %338 = vmatpush1.msra.mxu0 0.0
        %339 = vmatprep.subr.mxu0 0.0
        %340 = vmatpush1.msra.mxu0 0.0
        %341 = vmatprep.subr.mxu0 0.0
        %342 = vmatpush1.msra.mxu0 0.0
        %343 = vmatprep.subr.mxu0 0.0
        %344 = vmatpush1.msra.mxu0 0.0
        %345 = vmatprep.subr.mxu0 0.0
        %346 = vmatpush1.msra.mxu0 0.0
        %347 = vmatprep.subr.mxu0 0.0
        %348 = vmatpush1.msra.mxu0 0.0
        %349 = vmatprep.subr.mxu0 0.0
        %350 = vmatpush1.msra.mxu0 0.0
        %351 = vmatprep.mubr.f32.mxu0 0.0
        %v352 = vand.u32 %v273, 4294901760
        %v353 = vsub.f32 %v273, %v352
        %v354 = vand.u32 %v353, 4294901760
        %v355 = vsub.f32 %v353, %v354
        %v356 = vand.u32 %v355, 4294901760
        %357 = vmatmul.mubr.f32.gmra.mrb[0].mxu0 %v356
        %v358 = vpop.f32.mrb[0].mxu0
        %v359 = vadd.f32 0.0, %v358
        %v360 = vpop.f32.mrb[0].mxu0
        %361 = vmatprep.mubr.f32.mxu0 0.0
        %v362 = vand.u32 %v276, 4294901760
        %v363 = vsub.f32 %v276, %v362
        %v364 = vand.u32 %v363, 4294901760
        %v365 = vsub.f32 %v363, %v364
        %v366 = vand.u32 %v365, 4294901760
        %367 = vmatmul.mubr.f32.gmra.mrb[0].mxu0 %v366
        %v368 = vpop.f32.mrb[0].mxu0
        %v369 = vadd.f32 0.0, %v368
        %v370 = vpop.f32.mrb[0].mxu0
        %371 = vmatprep.mubr.f32.mxu0 0.0
        %v372 = vand.u32 %v279, 4294901760
        %v373 = vsub.f32 %v279, %v372
        %v374 = vand.u32 %v373, 4294901760
        %v375 = vsub.f32 %v373, %v374
        %v376 = vand.u32 %v375, 4294901760
        %377 = vmatmul.mubr.f32.gmra.mrb[0].mxu0 %v376
        %v378 = vpop.f32.mrb[0].mxu0
        %v379 = vadd.f32 0.0, %v378
        %v380 = vpop.f32.mrb[0].mxu0
        %381 = vdwg.mxu0
        %382 = vmatprep.subr.mxu0 0.0
        %v383 = vand.u32 %v260, 4294901760
        %v384 = vsub.f32 %v260, %v383
        %v385 = vand.u32 %v384, 4294901760
        %v386 = vsub.f32 %v384, %v385
        %v387 = vand.u32 %v386, 4294901760
        %388 = vmatpush1.msra.mxu0 %v387
        %389 = vmatprep.subr.mxu0 0.0
        %v390 = vand.u32 %v283, 4294901760
        %v391 = vsub.f32 %v283, %v390
        %v392 = vand.u32 %v391, 4294901760
        %v393 = vsub.f32 %v391, %v392
        %v394 = vand.u32 %v393, 4294901760
        %395 = vmatpush1.msra.mxu0 %v394
        %396 = vmatprep.subr.mxu0 0.0
        %397 = vmatpush1.msra.mxu0 0.0
        %398 = vmatprep.subr.mxu0 0.0
        %399 = vmatpush1.msra.mxu0 0.0
        %400 = vmatprep.subr.mxu0 0.0
        %401 = vmatpush1.msra.mxu0 0.0
        %402 = vmatprep.subr.mxu0 0.0
        %403 = vmatpush1.msra.mxu0 0.0
        %404 = vmatprep.subr.mxu0 0.0
        %405 = vmatpush1.msra.mxu0 0.0
        %406 = vmatprep.subr.mxu0 0.0
        %407 = vmatpush1.msra.mxu0 0.0
        %408 = vmatprep.subr.mxu0 0.0
        %409 = vmatpush1.msra.mxu0 0.0
        %410 = vmatprep.subr.mxu0 0.0
        %411 = vmatpush1.msra.mxu0 0.0
        %412 = vmatprep.subr.mxu0 0.0
        %413 = vmatpush1.msra.mxu0 0.0
        %414 = vmatprep.subr.mxu0 0.0
        %415 = vmatpush1.msra.mxu0 0.0
        %416 = vmatprep.subr.mxu0 0.0
        %417 = vmatpush1.msra.mxu0 0.0
        %418 = vmatprep.subr.mxu0 0.0
        %419 = vmatpush1.msra.mxu0 0.0
        %420 = vmatprep.subr.mxu0 0.0
        %421 = vmatpush1.msra.mxu0 0.0
        %422 = vmatprep.subr.mxu0 0.0
        %423 = vmatpush1.msra.mxu0 0.0
        %424 = vmatprep.subr.mxu0 0.0
        %425 = vmatpush1.msra.mxu0 0.0
        %426 = vmatprep.subr.mxu0 0.0
        %427 = vmatpush1.msra.mxu0 0.0
        %428 = vmatprep.subr.mxu0 0.0
        %429 = vmatpush1.msra.mxu0 0.0
        %430 = vmatprep.subr.mxu0 0.0
        %431 = vmatpush1.msra.mxu0 0.0
        %432 = vmatprep.subr.mxu0 0.0
        %433 = vmatpush1.msra.mxu0 0.0
        %434 = vmatprep.subr.mxu0 0.0
        %435 = vmatpush1.msra.mxu0 0.0
        %436 = vmatprep.subr.mxu0 0.0
        %437 = vmatpush1.msra.mxu0 0.0
        %438 = vmatprep.subr.mxu0 0.0
        %439 = vmatpush1.msra.mxu0 0.0
        %440 = vmatprep.subr.mxu0 0.0
        %441 = vmatpush1.msra.mxu0 0.0
        %442 = vmatprep.subr.mxu0 0.0
        %443 = vmatpush1.msra.mxu0 0.0
        %444 = vmatprep.subr.mxu0 0.0
        %445 = vmatpush1.msra.mxu0 0.0
        %446 = vmatprep.subr.mxu0 0.0
        %447 = vmatpush1.msra.mxu0 0.0
        %448 = vmatprep.subr.mxu0 0.0
        %449 = vmatpush1.msra.mxu0 0.0
        %450 = vmatprep.subr.mxu0 0.0
        %451 = vmatpush1.msra.mxu0 0.0
        %452 = vmatprep.subr.mxu0 0.0
        %453 = vmatpush1.msra.mxu0 0.0
        %454 = vmatprep.subr.mxu0 0.0
        %455 = vmatpush1.msra.mxu0 0.0
        %456 = vmatprep.mubr.f32.mxu0 0.0
        %v457 = vand.u32 %v273, 4294901760
        %458 = vmatmul.mubr.f32.gmra.mrb[0].mxu0 %v457
        %v459 = vpop.f32.mrb[0].mxu0
        %v460 = vadd.f32 %v359, %v459
        %v461 = vpop.f32.mrb[0].mxu0
        %462 = vmatprep.mubr.f32.mxu0 0.0
        %v463 = vand.u32 %v276, 4294901760
        %464 = vmatmul.mubr.f32.gmra.mrb[0].mxu0 %v463
        %v465 = vpop.f32.mrb[0].mxu0
        %v466 = vadd.f32 %v369, %v465
        %v467 = vpop.f32.mrb[0].mxu0
        %468 = vmatprep.mubr.f32.mxu0 0.0
        %v469 = vand.u32 %v279, 4294901760
        %470 = vmatmul.mubr.f32.gmra.mrb[0].mxu0 %v469
        %v471 = vpop.f32.mrb[0].mxu0
        %v472 = vadd.f32 %v379, %v471
        %v473 = vpop.f32.mrb[0].mxu0
        %474 = vdwg.mxu0
        %475 = vmatprep.subr.mxu0 0.0
        %v476 = vand.u32 %v260, 4294901760
        %v477 = vsub.f32 %v260, %v476
        %478 = vmatpush1.msra.mxu0 %v477
        %479 = vmatprep.subr.mxu0 0.0
        %v480 = vand.u32 %v283, 4294901760
        %v481 = vsub.f32 %v283, %v480
        %482 = vmatpush1.msra.mxu0 %v481
        %483 = vmatprep.subr.mxu0 0.0
        %484 = vmatpush1.msra.mxu0 0.0
        %485 = vmatprep.subr.mxu0 0.0
        %486 = vmatpush1.msra.mxu0 0.0
        %487 = vmatprep.subr.mxu0 0.0
        %488 = vmatpush1.msra.mxu0 0.0
        %489 = vmatprep.subr.mxu0 0.0
        %490 = vmatpush1.msra.mxu0 0.0
        %491 = vmatprep.subr.mxu0 0.0
        %492 = vmatpush1.msra.mxu0 0.0
        %493 = vmatprep.subr.mxu0 0.0
        %494 = vmatpush1.msra.mxu0 0.0
        %495 = vmatprep.subr.mxu0 0.0
        %496 = vmatpush1.msra.mxu0 0.0
        %497 = vmatprep.subr.mxu0 0.0
        %498 = vmatpush1.msra.mxu0 0.0
        %499 = vmatprep.subr.mxu0 0.0
        %500 = vmatpush1.msra.mxu0 0.0
        %501 = vmatprep.subr.mxu0 0.0
        %502 = vmatpush1.msra.mxu0 0.0
        %503 = vmatprep.subr.mxu0 0.0
        %504 = vmatpush1.msra.mxu0 0.0
        %505 = vmatprep.subr.mxu0 0.0
        %506 = vmatpush1.msra.mxu0 0.0
        %507 = vmatprep.subr.mxu0 0.0
        %508 = vmatpush1.msra.mxu0 0.0
        %509 = vmatprep.subr.mxu0 0.0
        %510 = vmatpush1.msra.mxu0 0.0
        %511 = vmatprep.subr.mxu0 0.0
        %512 = vmatpush1.msra.mxu0 0.0
        %513 = vmatprep.subr.mxu0 0.0
        %514 = vmatpush1.msra.mxu0 0.0
        %515 = vmatprep.subr.mxu0 0.0
        %516 = vmatpush1.msra.mxu0 0.0
        %517 = vmatprep.subr.mxu0 0.0
        %518 = vmatpush1.msra.mxu0 0.0
        %519 = vmatprep.subr.mxu0 0.0
        %520 = vmatpush1.msra.mxu0 0.0
        %521 = vmatprep.subr.mxu0 0.0
        %522 = vmatpush1.msra.mxu0 0.0
        %523 = vmatprep.subr.mxu0 0.0
        %524 = vmatpush1.msra.mxu0 0.0
        %525 = vmatprep.subr.mxu0 0.0
        %526 = vmatpush1.msra.mxu0 0.0
        %527 = vmatprep.subr.mxu0 0.0
        %528 = vmatpush1.msra.mxu0 0.0
        %529 = vmatprep.subr.mxu0 0.0
        %530 = vmatpush1.msra.mxu0 0.0
        %531 = vmatprep.subr.mxu0 0.0
        %532 = vmatpush1.msra.mxu0 0.0
        %533 = vmatprep.subr.mxu0 0.0
        %534 = vmatpush1.msra.mxu0 0.0
        %535 = vmatprep.subr.mxu0 0.0
        %536 = vmatpush1.msra.mxu0 0.0
        %537 = vmatprep.subr.mxu0 0.0
        %538 = vmatpush1.msra.mxu0 0.0
        %539 = vmatprep.subr.mxu0 0.0
        %540 = vmatpush1.msra.mxu0 0.0
        %541 = vmatprep.subr.mxu0 0.0
        %542 = vmatpush1.msra.mxu0 0.0
        %543 = vmatprep.mubr.f32.mxu0 0.0
        %v544 = vand.u32 %v273, 4294901760
        %v545 = vsub.f32 %v273, %v544
        %546 = vmatmul.mubr.f32.gmra.mrb[0].mxu0 %v545
        %v547 = vpop.f32.mrb[0].mxu0
        %v548 = vadd.f32 %v460, %v547
        %v549 = vpop.f32.mrb[0].mxu0
        %550 = vmatprep.mubr.f32.mxu0 0.0
        %v551 = vand.u32 %v276, 4294901760
        %v552 = vsub.f32 %v276, %v551
        %553 = vmatmul.mubr.f32.gmra.mrb[0].mxu0 %v552
        %v554 = vpop.f32.mrb[0].mxu0
        %v555 = vadd.f32 %v466, %v554
        %v556 = vpop.f32.mrb[0].mxu0
        %557 = vmatprep.mubr.f32.mxu0 0.0
        %v558 = vand.u32 %v279, 4294901760
        %v559 = vsub.f32 %v279, %v558
        %560 = vmatmul.mubr.f32.gmra.mrb[0].mxu0 %v559
        %v561 = vpop.f32.mrb[0].mxu0
        %v562 = vadd.f32 %v472, %v561
        %v563 = vpop.f32.mrb[0].mxu0
        %564 = vdwg.mxu0
        %565 = vmatprep.subr.mxu0 0.0
        %v566 = vand.u32 %v260, 4294901760
        %567 = vmatpush1.msra.mxu0 %v566
        %568 = vmatprep.subr.mxu0 0.0
        %v569 = vand.u32 %v283, 4294901760
        %570 = vmatpush1.msra.mxu0 %v569
        %571 = vmatprep.subr.mxu0 0.0
        %572 = vmatpush1.msra.mxu0 0.0
        %573 = vmatprep.subr.mxu0 0.0
        %574 = vmatpush1.msra.mxu0 0.0
        %575 = vmatprep.subr.mxu0 0.0
        %576 = vmatpush1.msra.mxu0 0.0
        %577 = vmatprep.subr.mxu0 0.0
        %578 = vmatpush1.msra.mxu0 0.0
        %579 = vmatprep.subr.mxu0 0.0
        %580 = vmatpush1.msra.mxu0 0.0
        %581 = vmatprep.subr.mxu0 0.0
        %582 = vmatpush1.msra.mxu0 0.0
        %583 = vmatprep.subr.mxu0 0.0
        %584 = vmatpush1.msra.mxu0 0.0
        %585 = vmatprep.subr.mxu0 0.0
        %586 = vmatpush1.msra.mxu0 0.0
        %587 = vmatprep.subr.mxu0 0.0
        %588 = vmatpush1.msra.mxu0 0.0
        %589 = vmatprep.subr.mxu0 0.0
        %590 = vmatpush1.msra.mxu0 0.0
        %591 = vmatprep.subr.mxu0 0.0
        %592 = vmatpush1.msra.mxu0 0.0
        %593 = vmatprep.subr.mxu0 0.0
        %594 = vmatpush1.msra.mxu0 0.0
        %595 = vmatprep.subr.mxu0 0.0
        %596 = vmatpush1.msra.mxu0 0.0
        %597 = vmatprep.subr.mxu0 0.0
        %598 = vmatpush1.msra.mxu0 0.0
        %599 = vmatprep.subr.mxu0 0.0
        %600 = vmatpush1.msra.mxu0 0.0
        %601 = vmatprep.subr.mxu0 0.0
        %602 = vmatpush1.msra.mxu0 0.0
        %603 = vmatprep.subr.mxu0 0.0
        %604 = vmatpush1.msra.mxu0 0.0
        %605 = vmatprep.subr.mxu0 0.0
        %606 = vmatpush1.msra.mxu0 0.0
        %607 = vmatprep.subr.mxu0 0.0
        %608 = vmatpush1.msra.mxu0 0.0
        %609 = vmatprep.subr.mxu0 0.0
        %610 = vmatpush1.msra.mxu0 0.0
        %611 = vmatprep.subr.mxu0 0.0
        %612 = vmatpush1.msra.mxu0 0.0
        %613 = vmatprep.subr.mxu0 0.0
        %614 = vmatpush1.msra.mxu0 0.0
        %615 = vmatprep.subr.mxu0 0.0
        %616 = vmatpush1.msra.mxu0 0.0
        %617 = vmatprep.subr.mxu0 0.0
        %618 = vmatpush1.msra.mxu0 0.0
        %619 = vmatprep.subr.mxu0 0.0
        %620 = vmatpush1.msra.mxu0 0.0
        %621 = vmatprep.subr.mxu0 0.0
        %622 = vmatpush1.msra.mxu0 0.0
        %623 = vmatprep.subr.mxu0 0.0
        %624 = vmatpush1.msra.mxu0 0.0
        %625 = vmatprep.subr.mxu0 0.0
        %626 = vmatpush1.msra.mxu0 0.0
        %627 = vmatprep.subr.mxu0 0.0
        %628 = vmatpush1.msra.mxu0 0.0
        %629 = vmatprep.subr.mxu0 0.0
        %630 = vmatpush1.msra.mxu0 0.0
        %631 = vmatprep.mubr.f32.mxu0 0.0
        %v632 = vand.u32 %v273, 4294901760
        %v633 = vsub.f32 %v273, %v632
        %v634 = vand.u32 %v633, 4294901760
        %635 = vmatmul.mubr.f32.gmra.mrb[0].mxu0 %v634
        %v636 = vpop.f32.mrb[0].mxu0
        %v637 = vadd.f32 %v548, %v636
        %v638 = vpop.f32.mrb[0].mxu0
        %639 = vmatprep.mubr.f32.mxu0 0.0
        %v640 = vand.u32 %v276, 4294901760
        %v641 = vsub.f32 %v276, %v640
        %v642 = vand.u32 %v641, 4294901760
        %643 = vmatmul.mubr.f32.gmra.mrb[0].mxu0 %v642
        %v644 = vpop.f32.mrb[0].mxu0
        %v645 = vadd.f32 %v555, %v644
        %v646 = vpop.f32.mrb[0].mxu0
        %647 = vmatprep.mubr.f32.mxu0 0.0
        %v648 = vand.u32 %v279, 4294901760
        %v649 = vsub.f32 %v279, %v648
        %v650 = vand.u32 %v649, 4294901760
        %651 = vmatmul.mubr.f32.gmra.mrb[0].mxu0 %v650
        %v652 = vpop.f32.mrb[0].mxu0
        %v653 = vadd.f32 %v562, %v652
        %v654 = vpop.f32.mrb[0].mxu0
        %655 = vdwg.mxu0
        %656 = vmatprep.subr.mxu0 0.0
        %v657 = vand.u32 %v260, 4294901760
        %v658 = vsub.f32 %v260, %v657
        %v659 = vand.u32 %v658, 4294901760
        %660 = vmatpush1.msra.mxu0 %v659
        %661 = vmatprep.subr.mxu0 0.0
        %v662 = vand.u32 %v283, 4294901760
        %v663 = vsub.f32 %v283, %v662
        %v664 = vand.u32 %v663, 4294901760
        %665 = vmatpush1.msra.mxu0 %v664
        %666 = vmatprep.subr.mxu0 0.0
        %667 = vmatpush1.msra.mxu0 0.0
        %668 = vmatprep.subr.mxu0 0.0
        %669 = vmatpush1.msra.mxu0 0.0
        %670 = vmatprep.subr.mxu0 0.0
        %671 = vmatpush1.msra.mxu0 0.0
        %672 = vmatprep.subr.mxu0 0.0
        %673 = vmatpush1.msra.mxu0 0.0
        %674 = vmatprep.subr.mxu0 0.0
        %675 = vmatpush1.msra.mxu0 0.0
        %676 = vmatprep.subr.mxu0 0.0
        %677 = vmatpush1.msra.mxu0 0.0
        %678 = vmatprep.subr.mxu0 0.0
        %679 = vmatpush1.msra.mxu0 0.0
        %680 = vmatprep.subr.mxu0 0.0
        %681 = vmatpush1.msra.mxu0 0.0
        %682 = vmatprep.subr.mxu0 0.0
        %683 = vmatpush1.msra.mxu0 0.0
        %684 = vmatprep.subr.mxu0 0.0
        %685 = vmatpush1.msra.mxu0 0.0
        %686 = vmatprep.subr.mxu0 0.0
        %687 = vmatpush1.msra.mxu0 0.0
        %688 = vmatprep.subr.mxu0 0.0
        %689 = vmatpush1.msra.mxu0 0.0
        %690 = vmatprep.subr.mxu0 0.0
        %691 = vmatpush1.msra.mxu0 0.0
        %692 = vmatprep.subr.mxu0 0.0
        %693 = vmatpush1.msra.mxu0 0.0
        %694 = vmatprep.subr.mxu0 0.0
        %695 = vmatpush1.msra.mxu0 0.0
        %696 = vmatprep.subr.mxu0 0.0
        %697 = vmatpush1.msra.mxu0 0.0
        %698 = vmatprep.subr.mxu0 0.0
        %699 = vmatpush1.msra.mxu0 0.0
        %700 = vmatprep.subr.mxu0 0.0
        %701 = vmatpush1.msra.mxu0 0.0
        %702 = vmatprep.subr.mxu0 0.0
        %703 = vmatpush1.msra.mxu0 0.0
        %704 = vmatprep.subr.mxu0 0.0
        %705 = vmatpush1.msra.mxu0 0.0
        %706 = vmatprep.subr.mxu0 0.0
        %707 = vmatpush1.msra.mxu0 0.0
        %708 = vmatprep.subr.mxu0 0.0
        %709 = vmatpush1.msra.mxu0 0.0
        %710 = vmatprep.subr.mxu0 0.0
        %711 = vmatpush1.msra.mxu0 0.0
        %712 = vmatprep.subr.mxu0 0.0
        %713 = vmatpush1.msra.mxu0 0.0
        %714 = vmatprep.subr.mxu0 0.0
        %715 = vmatpush1.msra.mxu0 0.0
        %716 = vmatprep.subr.mxu0 0.0
        %717 = vmatpush1.msra.mxu0 0.0
        %718 = vmatprep.subr.mxu0 0.0
        %719 = vmatpush1.msra.mxu0 0.0
        %720 = vmatprep.subr.mxu0 0.0
        %721 = vmatpush1.msra.mxu0 0.0
        %722 = vmatprep.subr.mxu0 0.0
        %723 = vmatpush1.msra.mxu0 0.0
        %724 = vmatprep.subr.mxu0 0.0
        %725 = vmatpush1.msra.mxu0 0.0
        %726 = vmatprep.mubr.f32.mxu0 0.0
        %v727 = vand.u32 %v273, 4294901760
        %728 = vmatmul.mubr.f32.gmra.mrb[0].mxu0 %v727
        %v729 = vpop.f32.mrb[0].mxu0
        %v730 = vadd.f32 %v637, %v729
        %v731 = vpop.f32.mrb[0].mxu0
        %732 = vmatprep.mubr.f32.mxu0 0.0
        %v733 = vand.u32 %v276, 4294901760
        %734 = vmatmul.mubr.f32.gmra.mrb[0].mxu0 %v733
        %v735 = vpop.f32.mrb[0].mxu0
        %v736 = vadd.f32 %v645, %v735
        %v737 = vpop.f32.mrb[0].mxu0
        %738 = vmatprep.mubr.f32.mxu0 0.0
        %v739 = vand.u32 %v279, 4294901760
        %740 = vmatmul.mubr.f32.gmra.mrb[0].mxu0 %v739
        %v741 = vpop.f32.mrb[0].mxu0
        %v742 = vadd.f32 %v653, %v741
        %v743 = vpop.f32.mrb[0].mxu0
        %744 = vdwg.mxu0
        %745 = vmatprep.subr.mxu0 0.0
        %v746 = vand.u32 %v260, 4294901760
        %747 = vmatpush1.msra.mxu0 %v746
        %748 = vmatprep.subr.mxu0 0.0
        %v749 = vand.u32 %v283, 4294901760
        %750 = vmatpush1.msra.mxu0 %v749
        %751 = vmatprep.subr.mxu0 0.0
        %752 = vmatpush1.msra.mxu0 0.0
        %753 = vmatprep.subr.mxu0 0.0
        %754 = vmatpush1.msra.mxu0 0.0
        %755 = vmatprep.subr.mxu0 0.0
        %756 = vmatpush1.msra.mxu0 0.0
        %757 = vmatprep.subr.mxu0 0.0
        %758 = vmatpush1.msra.mxu0 0.0
        %759 = vmatprep.subr.mxu0 0.0
        %760 = vmatpush1.msra.mxu0 0.0
        %761 = vmatprep.subr.mxu0 0.0
        %762 = vmatpush1.msra.mxu0 0.0
        %763 = vmatprep.subr.mxu0 0.0
        %764 = vmatpush1.msra.mxu0 0.0
        %765 = vmatprep.subr.mxu0 0.0
        %766 = vmatpush1.msra.mxu0 0.0
        %767 = vmatprep.subr.mxu0 0.0
        %768 = vmatpush1.msra.mxu0 0.0
        %769 = vmatprep.subr.mxu0 0.0
        %770 = vmatpush1.msra.mxu0 0.0
        %771 = vmatprep.subr.mxu0 0.0
        %772 = vmatpush1.msra.mxu0 0.0
        %773 = vmatprep.subr.mxu0 0.0
        %774 = vmatpush1.msra.mxu0 0.0
        %775 = vmatprep.subr.mxu0 0.0
        %776 = vmatpush1.msra.mxu0 0.0
        %777 = vmatprep.subr.mxu0 0.0
        %778 = vmatpush1.msra.mxu0 0.0
        %779 = vmatprep.subr.mxu0 0.0
        %780 = vmatpush1.msra.mxu0 0.0
        %781 = vmatprep.subr.mxu0 0.0
        %782 = vmatpush1.msra.mxu0 0.0
        %783 = vmatprep.subr.mxu0 0.0
        %784 = vmatpush1.msra.mxu0 0.0
        %785 = vmatprep.subr.mxu0 0.0
        %786 = vmatpush1.msra.mxu0 0.0
        %787 = vmatprep.subr.mxu0 0.0
        %788 = vmatpush1.msra.mxu0 0.0
        %789 = vmatprep.subr.mxu0 0.0
        %790 = vmatpush1.msra.mxu0 0.0
        %791 = vmatprep.subr.mxu0 0.0
        %792 = vmatpush1.msra.mxu0 0.0
        %793 = vmatprep.subr.mxu0 0.0
        %794 = vmatpush1.msra.mxu0 0.0
        %795 = vmatprep.subr.mxu0 0.0
        %796 = vmatpush1.msra.mxu0 0.0
        %797 = vmatprep.subr.mxu0 0.0
        %798 = vmatpush1.msra.mxu0 0.0
        %799 = vmatprep.subr.mxu0 0.0
        %800 = vmatpush1.msra.mxu0 0.0
        %801 = vmatprep.subr.mxu0 0.0
        %802 = vmatpush1.msra.mxu0 0.0
        %803 = vmatprep.subr.mxu0 0.0
        %804 = vmatpush1.msra.mxu0 0.0
        %805 = vmatprep.subr.mxu0 0.0
        %806 = vmatpush1.msra.mxu0 0.0
        %807 = vmatprep.subr.mxu0 0.0
        %808 = vmatpush1.msra.mxu0 0.0
        %809 = vmatprep.subr.mxu0 0.0
        %810 = vmatpush1.msra.mxu0 0.0
        %811 = vmatprep.mubr.f32.mxu0 0.0
        %v812 = vand.u32 %v273, 4294901760
        %813 = vmatmul.mubr.f32.gmra.mrb[0].mxu0 %v812
        %v814 = vpop.f32.mrb[0].mxu0
        %v815 = vadd.f32 %v730, %v814
        %v816 = vpop.f32.mrb[0].mxu0
        %817 = vmatprep.mubr.f32.mxu0 0.0
        %v818 = vand.u32 %v276, 4294901760
        %819 = vmatmul.mubr.f32.gmra.mrb[0].mxu0 %v818
        %v820 = vpop.f32.mrb[0].mxu0
        %v821 = vadd.f32 %v736, %v820
        %v822 = vpop.f32.mrb[0].mxu0
        %823 = vmatprep.mubr.f32.mxu0 0.0
        %v824 = vand.u32 %v279, 4294901760
        %825 = vmatmul.mubr.f32.gmra.mrb[0].mxu0 %v824
        %v826 = vpop.f32.mrb[0].mxu0
        %v827 = vadd.f32 %v742, %v826
        %v828 = vpop.f32.mrb[0].mxu0
        %829 = vdwg.mxu0
        %v831 = vsel %vm281, %v263, 0
        %833 = vmatprep.subr.mxu0 0.0
        %v834 = vand.u32 %v262, 4294901760
        %835 = vmatpush1.msra.mxu0 %v834
        %836 = vmatprep.subr.mxu0 0.0
        %v837 = vand.u32 %v831, 4294901760
        %838 = vmatpush1.msra.mxu0 %v837
        %839 = vmatprep.subr.mxu0 0.0
        %840 = vmatpush1.msra.mxu0 0.0
        %841 = vmatprep.subr.mxu0 0.0
        %842 = vmatpush1.msra.mxu0 0.0
        %843 = vmatprep.subr.mxu0 0.0
        %844 = vmatpush1.msra.mxu0 0.0
        %845 = vmatprep.subr.mxu0 0.0
        %846 = vmatpush1.msra.mxu0 0.0
        %847 = vmatprep.subr.mxu0 0.0
        %848 = vmatpush1.msra.mxu0 0.0
        %849 = vmatprep.subr.mxu0 0.0
        %850 = vmatpush1.msra.mxu0 0.0
        %851 = vmatprep.subr.mxu0 0.0
        %852 = vmatpush1.msra.mxu0 0.0
        %853 = vmatprep.subr.mxu0 0.0
        %854 = vmatpush1.msra.mxu0 0.0
        %855 = vmatprep.subr.mxu0 0.0
        %856 = vmatpush1.msra.mxu0 0.0
        %857 = vmatprep.subr.mxu0 0.0
        %858 = vmatpush1.msra.mxu0 0.0
        %859 = vmatprep.subr.mxu0 0.0
        %860 = vmatpush1.msra.mxu0 0.0
        %861 = vmatprep.subr.mxu0 0.0
        %862 = vmatpush1.msra.mxu0 0.0
        %863 = vmatprep.subr.mxu0 0.0
        %864 = vmatpush1.msra.mxu0 0.0
        %865 = vmatprep.subr.mxu0 0.0
        %866 = vmatpush1.msra.mxu0 0.0
        %867 = vmatprep.subr.mxu0 0.0
        %868 = vmatpush1.msra.mxu0 0.0
        %869 = vmatprep.subr.mxu0 0.0
        %870 = vmatpush1.msra.mxu0 0.0
        %871 = vmatprep.subr.mxu0 0.0
        %872 = vmatpush1.msra.mxu0 0.0
        %873 = vmatprep.subr.mxu0 0.0
        %874 = vmatpush1.msra.mxu0 0.0
        %875 = vmatprep.subr.mxu0 0.0
        %876 = vmatpush1.msra.mxu0 0.0
        %877 = vmatprep.subr.mxu0 0.0
        %878 = vmatpush1.msra.mxu0 0.0
        %879 = vmatprep.subr.mxu0 0.0
        %880 = vmatpush1.msra.mxu0 0.0
        %881 = vmatprep.subr.mxu0 0.0
        %882 = vmatpush1.msra.mxu0 0.0
        %883 = vmatprep.subr.mxu0 0.0
        %884 = vmatpush1.msra.mxu0 0.0
        %885 = vmatprep.subr.mxu0 0.0
        %886 = vmatpush1.msra.mxu0 0.0
        %887 = vmatprep.subr.mxu0 0.0
        %888 = vmatpush1.msra.mxu0 0.0
        %889 = vmatprep.subr.mxu0 0.0
        %890 = vmatpush1.msra.mxu0 0.0
        %891 = vmatprep.subr.mxu0 0.0
        %892 = vmatpush1.msra.mxu0 0.0
        %893 = vmatprep.subr.mxu0 0.0
        %894 = vmatpush1.msra.mxu0 0.0
        %895 = vmatprep.subr.mxu0 0.0
        %896 = vmatpush1.msra.mxu0 0.0
        %897 = vmatprep.subr.mxu0 0.0
        %898 = vmatpush1.msra.mxu0 0.0
        %899 = vmatprep.mubr.f32.mxu0 0.0
        %v900 = vand.u32 %v273, 4294901760
        %v901 = vsub.f32 %v273, %v900
        %v902 = vand.u32 %v901, 4294901760
        %v903 = vsub.f32 %v901, %v902
        %v904 = vand.u32 %v903, 4294901760
        %905 = vmatmul.mubr.f32.gmra.mrb[0].mxu0 %v904
        %v906 = vpop.f32.mrb[0].mxu0
        %v907 = vadd.f32 0.0, %v906
        %v908 = vpop.f32.mrb[0].mxu0
        %909 = vmatprep.mubr.f32.mxu0 0.0
        %v910 = vand.u32 %v276, 4294901760
        %v911 = vsub.f32 %v276, %v910
        %v912 = vand.u32 %v911, 4294901760
        %v913 = vsub.f32 %v911, %v912
        %v914 = vand.u32 %v913, 4294901760
        %915 = vmatmul.mubr.f32.gmra.mrb[0].mxu0 %v914
        %v916 = vpop.f32.mrb[0].mxu0
        %v917 = vadd.f32 0.0, %v916
        %v918 = vpop.f32.mrb[0].mxu0
        %919 = vmatprep.mubr.f32.mxu0 0.0
        %v920 = vand.u32 %v279, 4294901760
        %v921 = vsub.f32 %v279, %v920
        %v922 = vand.u32 %v921, 4294901760
        %v923 = vsub.f32 %v921, %v922
        %v924 = vand.u32 %v923, 4294901760
        %925 = vmatmul.mubr.f32.gmra.mrb[0].mxu0 %v924
        %v926 = vpop.f32.mrb[0].mxu0
        %v927 = vadd.f32 0.0, %v926
        %v928 = vpop.f32.mrb[0].mxu0
        %929 = vdwg.mxu0
        %930 = vmatprep.subr.mxu0 0.0
        %v931 = vand.u32 %v262, 4294901760
        %v932 = vsub.f32 %v262, %v931
        %v933 = vand.u32 %v932, 4294901760
        %v934 = vsub.f32 %v932, %v933
        %v935 = vand.u32 %v934, 4294901760
        %936 = vmatpush1.msra.mxu0 %v935
        %937 = vmatprep.subr.mxu0 0.0
        %v938 = vand.u32 %v831, 4294901760
        %v939 = vsub.f32 %v831, %v938
        %v940 = vand.u32 %v939, 4294901760
        %v941 = vsub.f32 %v939, %v940
        %v942 = vand.u32 %v941, 4294901760
        %943 = vmatpush1.msra.mxu0 %v942
        %944 = vmatprep.subr.mxu0 0.0
        %945 = vmatpush1.msra.mxu0 0.0
        %946 = vmatprep.subr.mxu0 0.0
        %947 = vmatpush1.msra.mxu0 0.0
        %948 = vmatprep.subr.mxu0 0.0
        %949 = vmatpush1.msra.mxu0 0.0
        %950 = vmatprep.subr.mxu0 0.0
        %951 = vmatpush1.msra.mxu0 0.0
        %952 = vmatprep.subr.mxu0 0.0
        %953 = vmatpush1.msra.mxu0 0.0
        %954 = vmatprep.subr.mxu0 0.0
        %955 = vmatpush1.msra.mxu0 0.0
        %956 = vmatprep.subr.mxu0 0.0
        %957 = vmatpush1.msra.mxu0 0.0
        %958 = vmatprep.subr.mxu0 0.0
        %959 = vmatpush1.msra.mxu0 0.0
        %960 = vmatprep.subr.mxu0 0.0
        %961 = vmatpush1.msra.mxu0 0.0
        %962 = vmatprep.subr.mxu0 0.0
        %963 = vmatpush1.msra.mxu0 0.0
        %964 = vmatprep.subr.mxu0 0.0
        %965 = vmatpush1.msra.mxu0 0.0
        %966 = vmatprep.subr.mxu0 0.0
        %967 = vmatpush1.msra.mxu0 0.0
        %968 = vmatprep.subr.mxu0 0.0
        %969 = vmatpush1.msra.mxu0 0.0
        %970 = vmatprep.subr.mxu0 0.0
        %971 = vmatpush1.msra.mxu0 0.0
        %972 = vmatprep.subr.mxu0 0.0
        %973 = vmatpush1.msra.mxu0 0.0
        %974 = vmatprep.subr.mxu0 0.0
        %975 = vmatpush1.msra.mxu0 0.0
        %976 = vmatprep.subr.mxu0 0.0
        %977 = vmatpush1.msra.mxu0 0.0
        %978 = vmatprep.subr.mxu0 0.0
        %979 = vmatpush1.msra.mxu0 0.0
        %980 = vmatprep.subr.mxu0 0.0
        %981 = vmatpush1.msra.mxu0 0.0
        %982 = vmatprep.subr.mxu0 0.0
        %983 = vmatpush1.msra.mxu0 0.0
        %984 = vmatprep.subr.mxu0 0.0
        %985 = vmatpush1.msra.mxu0 0.0
        %986 = vmatprep.subr.mxu0 0.0
        %987 = vmatpush1.msra.mxu0 0.0
        %988 = vmatprep.subr.mxu0 0.0
        %989 = vmatpush1.msra.mxu0 0.0
        %990 = vmatprep.subr.mxu0 0.0
        %991 = vmatpush1.msra.mxu0 0.0
        %992 = vmatprep.subr.mxu0 0.0
        %993 = vmatpush1.msra.mxu0 0.0
        %994 = vmatprep.subr.mxu0 0.0
        %995 = vmatpush1.msra.mxu0 0.0
        %996 = vmatprep.subr.mxu0 0.0
        %997 = vmatpush1.msra.mxu0 0.0
        %998 = vmatprep.subr.mxu0 0.0
        %999 = vmatpush1.msra.mxu0 0.0
        %1000 = vmatprep.subr.mxu0 0.0
        %1001 = vmatpush1.msra.mxu0 0.0
        %1002 = vmatprep.subr.mxu0 0.0
        %1003 = vmatpush1.msra.mxu0 0.0
        %1004 = vmatprep.mubr.f32.mxu0 0.0
        %v1005 = vand.u32 %v273, 4294901760
        %1006 = vmatmul.mubr.f32.gmra.mrb[0].mxu0 %v1005
        %v1007 = vpop.f32.mrb[0].mxu0
        %v1008 = vadd.f32 %v907, %v1007
        %v1009 = vpop.f32.mrb[0].mxu0
        %1010 = vmatprep.mubr.f32.mxu0 0.0
        %v1011 = vand.u32 %v276, 4294901760
        %1012 = vmatmul.mubr.f32.gmra.mrb[0].mxu0 %v1011
        %v1013 = vpop.f32.mrb[0].mxu0
        %v1014 = vadd.f32 %v917, %v1013
        %v1015 = vpop.f32.mrb[0].mxu0
        %1016 = vmatprep.mubr.f32.mxu0 0.0
        %v1017 = vand.u32 %v279, 4294901760
        %1018 = vmatmul.mubr.f32.gmra.mrb[0].mxu0 %v1017
        %v1019 = vpop.f32.mrb[0].mxu0
        %v1020 = vadd.f32 %v927, %v1019
        %v1021 = vpop.f32.mrb[0].mxu0
        %1022 = vdwg.mxu0
        %1023 = vmatprep.subr.mxu0 0.0
        %v1024 = vand.u32 %v262, 4294901760
        %v1025 = vsub.f32 %v262, %v1024
        %1026 = vmatpush1.msra.mxu0 %v1025
        %1027 = vmatprep.subr.mxu0 0.0
        %v1028 = vand.u32 %v831, 4294901760
        %v1029 = vsub.f32 %v831, %v1028
        %1030 = vmatpush1.msra.mxu0 %v1029
        %1031 = vmatprep.subr.mxu0 0.0
        %1032 = vmatpush1.msra.mxu0 0.0
        %1033 = vmatprep.subr.mxu0 0.0
        %1034 = vmatpush1.msra.mxu0 0.0
        %1035 = vmatprep.subr.mxu0 0.0
        %1036 = vmatpush1.msra.mxu0 0.0
        %1037 = vmatprep.subr.mxu0 0.0
        %1038 = vmatpush1.msra.mxu0 0.0
        %1039 = vmatprep.subr.mxu0 0.0
        %1040 = vmatpush1.msra.mxu0 0.0
        %1041 = vmatprep.subr.mxu0 0.0
        %1042 = vmatpush1.msra.mxu0 0.0
        %1043 = vmatprep.subr.mxu0 0.0
        %1044 = vmatpush1.msra.mxu0 0.0
        %1045 = vmatprep.subr.mxu0 0.0
        %1046 = vmatpush1.msra.mxu0 0.0
        %1047 = vmatprep.subr.mxu0 0.0
        %1048 = vmatpush1.msra.mxu0 0.0
        %1049 = vmatprep.subr.mxu0 0.0
        %1050 = vmatpush1.msra.mxu0 0.0
        %1051 = vmatprep.subr.mxu0 0.0
        %1052 = vmatpush1.msra.mxu0 0.0
        %1053 = vmatprep.subr.mxu0 0.0
        %1054 = vmatpush1.msra.mxu0 0.0
        %1055 = vmatprep.subr.mxu0 0.0
        %1056 = vmatpush1.msra.mxu0 0.0
        %1057 = vmatprep.subr.mxu0 0.0
        %1058 = vmatpush1.msra.mxu0 0.0
        %1059 = vmatprep.subr.mxu0 0.0
        %1060 = vmatpush1.msra.mxu0 0.0
        %1061 = vmatprep.subr.mxu0 0.0
        %1062 = vmatpush1.msra.mxu0 0.0
        %1063 = vmatprep.subr.mxu0 0.0
        %1064 = vmatpush1.msra.mxu0 0.0
        %1065 = vmatprep.subr.mxu0 0.0
        %1066 = vmatpush1.msra.mxu0 0.0
        %1067 = vmatprep.subr.mxu0 0.0
        %1068 = vmatpush1.msra.mxu0 0.0
        %1069 = vmatprep.subr.mxu0 0.0
        %1070 = vmatpush1.msra.mxu0 0.0
        %1071 = vmatprep.subr.mxu0 0.0
        %1072 = vmatpush1.msra.mxu0 0.0
        %1073 = vmatprep.subr.mxu0 0.0
        %1074 = vmatpush1.msra.mxu0 0.0
        %1075 = vmatprep.subr.mxu0 0.0
        %1076 = vmatpush1.msra.mxu0 0.0
        %1077 = vmatprep.subr.mxu0 0.0
        %1078 = vmatpush1.msra.mxu0 0.0
        %1079 = vmatprep.subr.mxu0 0.0
        %1080 = vmatpush1.msra.mxu0 0.0
        %1081 = vmatprep.subr.mxu0 0.0
        %1082 = vmatpush1.msra.mxu0 0.0
        %1083 = vmatprep.subr.mxu0 0.0
        %1084 = vmatpush1.msra.mxu0 0.0
        %1085 = vmatprep.subr.mxu0 0.0
        %1086 = vmatpush1.msra.mxu0 0.0
        %1087 = vmatprep.subr.mxu0 0.0
        %1088 = vmatpush1.msra.mxu0 0.0
        %1089 = vmatprep.subr.mxu0 0.0
        %1090 = vmatpush1.msra.mxu0 0.0
        %1091 = vmatprep.mubr.f32.mxu0 0.0
        %v1092 = vand.u32 %v273, 4294901760
        %v1093 = vsub.f32 %v273, %v1092
        %1094 = vmatmul.mubr.f32.gmra.mrb[0].mxu0 %v1093
        %v1095 = vpop.f32.mrb[0].mxu0
        %v1096 = vadd.f32 %v1008, %v1095
        %v1097 = vpop.f32.mrb[0].mxu0
        %1098 = vmatprep.mubr.f32.mxu0 0.0
        %v1099 = vand.u32 %v276, 4294901760
        %v1100 = vsub.f32 %v276, %v1099
        %1101 = vmatmul.mubr.f32.gmra.mrb[0].mxu0 %v1100
        %v1102 = vpop.f32.mrb[0].mxu0
        %v1103 = vadd.f32 %v1014, %v1102
        %v1104 = vpop.f32.mrb[0].mxu0
        %1105 = vmatprep.mubr.f32.mxu0 0.0
        %v1106 = vand.u32 %v279, 4294901760
        %v1107 = vsub.f32 %v279, %v1106
        %1108 = vmatmul.mubr.f32.gmra.mrb[0].mxu0 %v1107
        %v1109 = vpop.f32.mrb[0].mxu0
        %v1110 = vadd.f32 %v1020, %v1109
        %v1111 = vpop.f32.mrb[0].mxu0
        %1112 = vdwg.mxu0
        %1113 = vmatprep.subr.mxu0 0.0
        %v1114 = vand.u32 %v262, 4294901760
        %1115 = vmatpush1.msra.mxu0 %v1114
        %1116 = vmatprep.subr.mxu0 0.0
        %v1117 = vand.u32 %v831, 4294901760
        %1118 = vmatpush1.msra.mxu0 %v1117
        %1119 = vmatprep.subr.mxu0 0.0
        %1120 = vmatpush1.msra.mxu0 0.0
        %1121 = vmatprep.subr.mxu0 0.0
        %1122 = vmatpush1.msra.mxu0 0.0
        %1123 = vmatprep.subr.mxu0 0.0
        %1124 = vmatpush1.msra.mxu0 0.0
        %1125 = vmatprep.subr.mxu0 0.0
        %1126 = vmatpush1.msra.mxu0 0.0
        %1127 = vmatprep.subr.mxu0 0.0
        %1128 = vmatpush1.msra.mxu0 0.0
        %1129 = vmatprep.subr.mxu0 0.0
        %1130 = vmatpush1.msra.mxu0 0.0
        %1131 = vmatprep.subr.mxu0 0.0
        %1132 = vmatpush1.msra.mxu0 0.0
        %1133 = vmatprep.subr.mxu0 0.0
        %1134 = vmatpush1.msra.mxu0 0.0
        %1135 = vmatprep.subr.mxu0 0.0
        %1136 = vmatpush1.msra.mxu0 0.0
        %1137 = vmatprep.subr.mxu0 0.0
        %1138 = vmatpush1.msra.mxu0 0.0
        %1139 = vmatprep.subr.mxu0 0.0
        %1140 = vmatpush1.msra.mxu0 0.0
        %1141 = vmatprep.subr.mxu0 0.0
        %1142 = vmatpush1.msra.mxu0 0.0
        %1143 = vmatprep.subr.mxu0 0.0
        %1144 = vmatpush1.msra.mxu0 0.0
        %1145 = vmatprep.subr.mxu0 0.0
        %1146 = vmatpush1.msra.mxu0 0.0
        %1147 = vmatprep.subr.mxu0 0.0
        %1148 = vmatpush1.msra.mxu0 0.0
        %1149 = vmatprep.subr.mxu0 0.0
        %1150 = vmatpush1.msra.mxu0 0.0
        %1151 = vmatprep.subr.mxu0 0.0
        %1152 = vmatpush1.msra.mxu0 0.0
        %1153 = vmatprep.subr.mxu0 0.0
        %1154 = vmatpush1.msra.mxu0 0.0
        %1155 = vmatprep.subr.mxu0 0.0
        %1156 = vmatpush1.msra.mxu0 0.0
        %1157 = vmatprep.subr.mxu0 0.0
        %1158 = vmatpush1.msra.mxu0 0.0
        %1159 = vmatprep.subr.mxu0 0.0
        %1160 = vmatpush1.msra.mxu0 0.0
        %1161 = vmatprep.subr.mxu0 0.0
        %1162 = vmatpush1.msra.mxu0 0.0
        %1163 = vmatprep.subr.mxu0 0.0
        %1164 = vmatpush1.msra.mxu0 0.0
        %1165 = vmatprep.subr.mxu0 0.0
        %1166 = vmatpush1.msra.mxu0 0.0
        %1167 = vmatprep.subr.mxu0 0.0
        %1168 = vmatpush1.msra.mxu0 0.0
        %1169 = vmatprep.subr.mxu0 0.0
        %1170 = vmatpush1.msra.mxu0 0.0
        %1171 = vmatprep.subr.mxu0 0.0
        %1172 = vmatpush1.msra.mxu0 0.0
        %1173 = vmatprep.subr.mxu0 0.0
        %1174 = vmatpush1.msra.mxu0 0.0
        %1175 = vmatprep.subr.mxu0 0.0
        %1176 = vmatpush1.msra.mxu0 0.0
        %1177 = vmatprep.subr.mxu0 0.0
        %1178 = vmatpush1.msra.mxu0 0.0
        %1179 = vmatprep.mubr.f32.mxu0 0.0
        %v1180 = vand.u32 %v273, 4294901760
        %v1181 = vsub.f32 %v273, %v1180
        %v1182 = vand.u32 %v1181, 4294901760
        %1183 = vmatmul.mubr.f32.gmra.mrb[0].mxu0 %v1182
        %v1184 = vpop.f32.mrb[0].mxu0
        %v1185 = vadd.f32 %v1096, %v1184
        %v1186 = vpop.f32.mrb[0].mxu0
        %1187 = vmatprep.mubr.f32.mxu0 0.0
        %v1188 = vand.u32 %v276, 4294901760
        %v1189 = vsub.f32 %v276, %v1188
        %v1190 = vand.u32 %v1189, 4294901760
        %1191 = vmatmul.mubr.f32.gmra.mrb[0].mxu0 %v1190
        %v1192 = vpop.f32.mrb[0].mxu0
        %v1193 = vadd.f32 %v1103, %v1192
        %v1194 = vpop.f32.mrb[0].mxu0
        %1195 = vmatprep.mubr.f32.mxu0 0.0
        %v1196 = vand.u32 %v279, 4294901760
        %v1197 = vsub.f32 %v279, %v1196
        %v1198 = vand.u32 %v1197, 4294901760
        %1199 = vmatmul.mubr.f32.gmra.mrb[0].mxu0 %v1198
        %v1200 = vpop.f32.mrb[0].mxu0
        %v1201 = vadd.f32 %v1110, %v1200
        %v1202 = vpop.f32.mrb[0].mxu0
        %1203 = vdwg.mxu0
        %1204 = vmatprep.subr.mxu0 0.0
        %v1205 = vand.u32 %v262, 4294901760
        %v1206 = vsub.f32 %v262, %v1205
        %v1207 = vand.u32 %v1206, 4294901760
        %1208 = vmatpush1.msra.mxu0 %v1207
        %1209 = vmatprep.subr.mxu0 0.0
        %v1210 = vand.u32 %v831, 4294901760
        %v1211 = vsub.f32 %v831, %v1210
        %v1212 = vand.u32 %v1211, 4294901760
        %1213 = vmatpush1.msra.mxu0 %v1212
        %1214 = vmatprep.subr.mxu0 0.0
        %1215 = vmatpush1.msra.mxu0 0.0
        %1216 = vmatprep.subr.mxu0 0.0
        %1217 = vmatpush1.msra.mxu0 0.0
        %1218 = vmatprep.subr.mxu0 0.0
        %1219 = vmatpush1.msra.mxu0 0.0
        %1220 = vmatprep.subr.mxu0 0.0
        %1221 = vmatpush1.msra.mxu0 0.0
        %1222 = vmatprep.subr.mxu0 0.0
        %1223 = vmatpush1.msra.mxu0 0.0
        %1224 = vmatprep.subr.mxu0 0.0
        %1225 = vmatpush1.msra.mxu0 0.0
        %1226 = vmatprep.subr.mxu0 0.0
        %1227 = vmatpush1.msra.mxu0 0.0
        %1228 = vmatprep.subr.mxu0 0.0
        %1229 = vmatpush1.msra.mxu0 0.0
        %1230 = vmatprep.subr.mxu0 0.0
        %1231 = vmatpush1.msra.mxu0 0.0
        %1232 = vmatprep.subr.mxu0 0.0
        %1233 = vmatpush1.msra.mxu0 0.0
        %1234 = vmatprep.subr.mxu0 0.0
        %1235 = vmatpush1.msra.mxu0 0.0
        %1236 = vmatprep.subr.mxu0 0.0
        %1237 = vmatpush1.msra.mxu0 0.0
        %1238 = vmatprep.subr.mxu0 0.0
        %1239 = vmatpush1.msra.mxu0 0.0
        %1240 = vmatprep.subr.mxu0 0.0
        %1241 = vmatpush1.msra.mxu0 0.0
        %1242 = vmatprep.subr.mxu0 0.0
        %1243 = vmatpush1.msra.mxu0 0.0
        %1244 = vmatprep.subr.mxu0 0.0
        %1245 = vmatpush1.msra.mxu0 0.0
        %1246 = vmatprep.subr.mxu0 0.0
        %1247 = vmatpush1.msra.mxu0 0.0
        %1248 = vmatprep.subr.mxu0 0.0
        %1249 = vmatpush1.msra.mxu0 0.0
        %1250 = vmatprep.subr.mxu0 0.0
        %1251 = vmatpush1.msra.mxu0 0.0
        %1252 = vmatprep.subr.mxu0 0.0
        %1253 = vmatpush1.msra.mxu0 0.0
        %1254 = vmatprep.subr.mxu0 0.0
        %1255 = vmatpush1.msra.mxu0 0.0
        %1256 = vmatprep.subr.mxu0 0.0
        %1257 = vmatpush1.msra.mxu0 0.0
        %1258 = vmatprep.subr.mxu0 0.0
        %1259 = vmatpush1.msra.mxu0 0.0
        %1260 = vmatprep.subr.mxu0 0.0
        %1261 = vmatpush1.msra.mxu0 0.0
        %1262 = vmatprep.subr.mxu0 0.0
        %1263 = vmatpush1.msra.mxu0 0.0
        %1264 = vmatprep.subr.mxu0 0.0
        %1265 = vmatpush1.msra.mxu0 0.0
        %1266 = vmatprep.subr.mxu0 0.0
        %1267 = vmatpush1.msra.mxu0 0.0
        %1268 = vmatprep.subr.mxu0 0.0
        %1269 = vmatpush1.msra.mxu0 0.0
        %1270 = vmatprep.subr.mxu0 0.0
        %1271 = vmatpush1.msra.mxu0 0.0
        %1272 = vmatprep.subr.mxu0 0.0
        %1273 = vmatpush1.msra.mxu0 0.0
        %1274 = vmatprep.mubr.f32.mxu0 0.0
        %v1275 = vand.u32 %v273, 4294901760
        %1276 = vmatmul.mubr.f32.gmra.mrb[0].mxu0 %v1275
        %v1277 = vpop.f32.mrb[0].mxu0
        %v1278 = vadd.f32 %v1185, %v1277
        %v1279 = vpop.f32.mrb[0].mxu0
        %1280 = vmatprep.mubr.f32.mxu0 0.0
        %v1281 = vand.u32 %v276, 4294901760
        %1282 = vmatmul.mubr.f32.gmra.mrb[0].mxu0 %v1281
        %v1283 = vpop.f32.mrb[0].mxu0
        %v1284 = vadd.f32 %v1193, %v1283
        %v1285 = vpop.f32.mrb[0].mxu0
        %1286 = vmatprep.mubr.f32.mxu0 0.0
        %v1287 = vand.u32 %v279, 4294901760
        %1288 = vmatmul.mubr.f32.gmra.mrb[0].mxu0 %v1287
        %v1289 = vpop.f32.mrb[0].mxu0
        %v1290 = vadd.f32 %v1201, %v1289
        %v1291 = vpop.f32.mrb[0].mxu0
        %1292 = vdwg.mxu0
        %1293 = vmatprep.subr.mxu0 0.0
        %v1294 = vand.u32 %v262, 4294901760
        %1295 = vmatpush1.msra.mxu0 %v1294
        %1296 = vmatprep.subr.mxu0 0.0
        %v1297 = vand.u32 %v831, 4294901760
        %1298 = vmatpush1.msra.mxu0 %v1297
        %1299 = vmatprep.subr.mxu0 0.0
        %1300 = vmatpush1.msra.mxu0 0.0
        %1301 = vmatprep.subr.mxu0 0.0
        %1302 = vmatpush1.msra.mxu0 0.0
        %1303 = vmatprep.subr.mxu0 0.0
        %1304 = vmatpush1.msra.mxu0 0.0
        %1305 = vmatprep.subr.mxu0 0.0
        %1306 = vmatpush1.msra.mxu0 0.0
        %1307 = vmatprep.subr.mxu0 0.0
        %1308 = vmatpush1.msra.mxu0 0.0
        %1309 = vmatprep.subr.mxu0 0.0
        %1310 = vmatpush1.msra.mxu0 0.0
        %1311 = vmatprep.subr.mxu0 0.0
        %1312 = vmatpush1.msra.mxu0 0.0
        %1313 = vmatprep.subr.mxu0 0.0
        %1314 = vmatpush1.msra.mxu0 0.0
        %1315 = vmatprep.subr.mxu0 0.0
        %1316 = vmatpush1.msra.mxu0 0.0
        %1317 = vmatprep.subr.mxu0 0.0
        %1318 = vmatpush1.msra.mxu0 0.0
        %1319 = vmatprep.subr.mxu0 0.0
        %1320 = vmatpush1.msra.mxu0 0.0
        %1321 = vmatprep.subr.mxu0 0.0
        %1322 = vmatpush1.msra.mxu0 0.0
        %1323 = vmatprep.subr.mxu0 0.0
        %1324 = vmatpush1.msra.mxu0 0.0
        %1325 = vmatprep.subr.mxu0 0.0
        %1326 = vmatpush1.msra.mxu0 0.0
        %1327 = vmatprep.subr.mxu0 0.0
        %1328 = vmatpush1.msra.mxu0 0.0
        %1329 = vmatprep.subr.mxu0 0.0
        %1330 = vmatpush1.msra.mxu0 0.0
        %1331 = vmatprep.subr.mxu0 0.0
        %1332 = vmatpush1.msra.mxu0 0.0
        %1333 = vmatprep.subr.mxu0 0.0
        %1334 = vmatpush1.msra.mxu0 0.0
        %1335 = vmatprep.subr.mxu0 0.0
        %1336 = vmatpush1.msra.mxu0 0.0
        %1337 = vmatprep.subr.mxu0 0.0
        %1338 = vmatpush1.msra.mxu0 0.0
        %1339 = vmatprep.subr.mxu0 0.0
        %1340 = vmatpush1.msra.mxu0 0.0
        %1341 = vmatprep.subr.mxu0 0.0
        %1342 = vmatpush1.msra.mxu0 0.0
        %1343 = vmatprep.subr.mxu0 0.0
        %1344 = vmatpush1.msra.mxu0 0.0
        %1345 = vmatprep.subr.mxu0 0.0
        %1346 = vmatpush1.msra.mxu0 0.0
        %1347 = vmatprep.subr.mxu0 0.0
        %1348 = vmatpush1.msra.mxu0 0.0
        %1349 = vmatprep.subr.mxu0 0.0
        %1350 = vmatpush1.msra.mxu0 0.0
        %1351 = vmatprep.subr.mxu0 0.0
        %1352 = vmatpush1.msra.mxu0 0.0
        %1353 = vmatprep.subr.mxu0 0.0
        %1354 = vmatpush1.msra.mxu0 0.0
        %1355 = vmatprep.subr.mxu0 0.0
        %1356 = vmatpush1.msra.mxu0 0.0
        %1357 = vmatprep.subr.mxu0 0.0
        %1358 = vmatpush1.msra.mxu0 0.0
        %1359 = vmatprep.mubr.f32.mxu0 0.0
        %v1360 = vand.u32 %v273, 4294901760
        %1361 = vmatmul.mubr.f32.gmra.mrb[0].mxu0 %v1360
        %v1362 = vpop.f32.mrb[0].mxu0
        %v1363 = vadd.f32 %v1278, %v1362
        %v1364 = vpop.f32.mrb[0].mxu0
        %1365 = vmatprep.mubr.f32.mxu0 0.0
        %v1366 = vand.u32 %v276, 4294901760
        %1367 = vmatmul.mubr.f32.gmra.mrb[0].mxu0 %v1366
        %v1368 = vpop.f32.mrb[0].mxu0
        %v1369 = vadd.f32 %v1284, %v1368
        %v1370 = vpop.f32.mrb[0].mxu0
        %1371 = vmatprep.mubr.f32.mxu0 0.0
        %v1372 = vand.u32 %v279, 4294901760
        %1373 = vmatmul.mubr.f32.gmra.mrb[0].mxu0 %v1372
        %v1374 = vpop.f32.mrb[0].mxu0
        %v1375 = vadd.f32 %v1290, %v1374
        %v1376 = vpop.f32.mrb[0].mxu0
        %1377 = vdwg.mxu0
        %v1379 = vsel %vm281, %v265, 0
        %1381 = vmatprep.subr.mxu0 0.0
        %v1382 = vand.u32 %v264, 4294901760
        %1383 = vmatpush1.msra.mxu0 %v1382
        %1384 = vmatprep.subr.mxu0 0.0
        %v1385 = vand.u32 %v1379, 4294901760
        %1386 = vmatpush1.msra.mxu0 %v1385
        %1387 = vmatprep.subr.mxu0 0.0
        %1388 = vmatpush1.msra.mxu0 0.0
        %1389 = vmatprep.subr.mxu0 0.0
        %1390 = vmatpush1.msra.mxu0 0.0
        %1391 = vmatprep.subr.mxu0 0.0
        %1392 = vmatpush1.msra.mxu0 0.0
        %1393 = vmatprep.subr.mxu0 0.0
        %1394 = vmatpush1.msra.mxu0 0.0
        %1395 = vmatprep.subr.mxu0 0.0
        %1396 = vmatpush1.msra.mxu0 0.0
        %1397 = vmatprep.subr.mxu0 0.0
        %1398 = vmatpush1.msra.mxu0 0.0
        %1399 = vmatprep.subr.mxu0 0.0
        %1400 = vmatpush1.msra.mxu0 0.0
        %1401 = vmatprep.subr.mxu0 0.0
        %1402 = vmatpush1.msra.mxu0 0.0
        %1403 = vmatprep.subr.mxu0 0.0
        %1404 = vmatpush1.msra.mxu0 0.0
        %1405 = vmatprep.subr.mxu0 0.0
        %1406 = vmatpush1.msra.mxu0 0.0
        %1407 = vmatprep.subr.mxu0 0.0
        %1408 = vmatpush1.msra.mxu0 0.0
        %1409 = vmatprep.subr.mxu0 0.0
        %1410 = vmatpush1.msra.mxu0 0.0
        %1411 = vmatprep.subr.mxu0 0.0
        %1412 = vmatpush1.msra.mxu0 0.0
        %1413 = vmatprep.subr.mxu0 0.0
        %1414 = vmatpush1.msra.mxu0 0.0
        %1415 = vmatprep.subr.mxu0 0.0
        %1416 = vmatpush1.msra.mxu0 0.0
        %1417 = vmatprep.subr.mxu0 0.0
        %1418 = vmatpush1.msra.mxu0 0.0
        %1419 = vmatprep.subr.mxu0 0.0
        %1420 = vmatpush1.msra.mxu0 0.0
        %1421 = vmatprep.subr.mxu0 0.0
        %1422 = vmatpush1.msra.mxu0 0.0
        %1423 = vmatprep.subr.mxu0 0.0
        %1424 = vmatpush1.msra.mxu0 0.0
        %1425 = vmatprep.subr.mxu0 0.0
        %1426 = vmatpush1.msra.mxu0 0.0
        %1427 = vmatprep.subr.mxu0 0.0
        %1428 = vmatpush1.msra.mxu0 0.0
        %1429 = vmatprep.subr.mxu0 0.0
        %1430 = vmatpush1.msra.mxu0 0.0
        %1431 = vmatprep.subr.mxu0 0.0
        %1432 = vmatpush1.msra.mxu0 0.0
        %1433 = vmatprep.subr.mxu0 0.0
        %1434 = vmatpush1.msra.mxu0 0.0
        %1435 = vmatprep.subr.mxu0 0.0
        %1436 = vmatpush1.msra.mxu0 0.0
        %1437 = vmatprep.subr.mxu0 0.0
        %1438 = vmatpush1.msra.mxu0 0.0
        %1439 = vmatprep.subr.mxu0 0.0
        %1440 = vmatpush1.msra.mxu0 0.0
        %1441 = vmatprep.subr.mxu0 0.0
        %1442 = vmatpush1.msra.mxu0 0.0
        %1443 = vmatprep.subr.mxu0 0.0
        %1444 = vmatpush1.msra.mxu0 0.0
        %1445 = vmatprep.subr.mxu0 0.0
        %1446 = vmatpush1.msra.mxu0 0.0
        %1447 = vmatprep.mubr.f32.mxu0 0.0
        %v1448 = vand.u32 %v273, 4294901760
        %v1449 = vsub.f32 %v273, %v1448
        %v1450 = vand.u32 %v1449, 4294901760
        %v1451 = vsub.f32 %v1449, %v1450
        %v1452 = vand.u32 %v1451, 4294901760
        %1453 = vmatmul.mubr.f32.gmra.mrb[0].mxu0 %v1452
        %v1454 = vpop.f32.mrb[0].mxu0
        %v1455 = vadd.f32 0.0, %v1454
        %v1456 = vpop.f32.mrb[0].mxu0
        %1457 = vmatprep.mubr.f32.mxu0 0.0
        %v1458 = vand.u32 %v276, 4294901760
        %v1459 = vsub.f32 %v276, %v1458
        %v1460 = vand.u32 %v1459, 4294901760
        %v1461 = vsub.f32 %v1459, %v1460
        %v1462 = vand.u32 %v1461, 4294901760
        %1463 = vmatmul.mubr.f32.gmra.mrb[0].mxu0 %v1462
        %v1464 = vpop.f32.mrb[0].mxu0
        %v1465 = vadd.f32 0.0, %v1464
        %v1466 = vpop.f32.mrb[0].mxu0
        %1467 = vmatprep.mubr.f32.mxu0 0.0
        %v1468 = vand.u32 %v279, 4294901760
        %v1469 = vsub.f32 %v279, %v1468
        %v1470 = vand.u32 %v1469, 4294901760
        %v1471 = vsub.f32 %v1469, %v1470
        %v1472 = vand.u32 %v1471, 4294901760
        %1473 = vmatmul.mubr.f32.gmra.mrb[0].mxu0 %v1472
        %v1474 = vpop.f32.mrb[0].mxu0
        %v1475 = vadd.f32 0.0, %v1474
        %v1476 = vpop.f32.mrb[0].mxu0
        %1477 = vdwg.mxu0
        %1478 = vmatprep.subr.mxu0 0.0
        %v1479 = vand.u32 %v264, 4294901760
        %v1480 = vsub.f32 %v264, %v1479
        %v1481 = vand.u32 %v1480, 4294901760
        %v1482 = vsub.f32 %v1480, %v1481
        %v1483 = vand.u32 %v1482, 4294901760
        %1484 = vmatpush1.msra.mxu0 %v1483
        %1485 = vmatprep.subr.mxu0 0.0
        %v1486 = vand.u32 %v1379, 4294901760
        %v1487 = vsub.f32 %v1379, %v1486
        %v1488 = vand.u32 %v1487, 4294901760
        %v1489 = vsub.f32 %v1487, %v1488
        %v1490 = vand.u32 %v1489, 4294901760
        %1491 = vmatpush1.msra.mxu0 %v1490
        %1492 = vmatprep.subr.mxu0 0.0
        %1493 = vmatpush1.msra.mxu0 0.0
        %1494 = vmatprep.subr.mxu0 0.0
        %1495 = vmatpush1.msra.mxu0 0.0
        %1496 = vmatprep.subr.mxu0 0.0
        %1497 = vmatpush1.msra.mxu0 0.0
        %1498 = vmatprep.subr.mxu0 0.0
        %1499 = vmatpush1.msra.mxu0 0.0
        %1500 = vmatprep.subr.mxu0 0.0
        %1501 = vmatpush1.msra.mxu0 0.0
        %1502 = vmatprep.subr.mxu0 0.0
        %1503 = vmatpush1.msra.mxu0 0.0
        %1504 = vmatprep.subr.mxu0 0.0
        %1505 = vmatpush1.msra.mxu0 0.0
        %1506 = vmatprep.subr.mxu0 0.0
        %1507 = vmatpush1.msra.mxu0 0.0
        %1508 = vmatprep.subr.mxu0 0.0
        %1509 = vmatpush1.msra.mxu0 0.0
        %1510 = vmatprep.subr.mxu0 0.0
        %1511 = vmatpush1.msra.mxu0 0.0
        %1512 = vmatprep.subr.mxu0 0.0
        %1513 = vmatpush1.msra.mxu0 0.0
        %1514 = vmatprep.subr.mxu0 0.0
        %1515 = vmatpush1.msra.mxu0 0.0
        %1516 = vmatprep.subr.mxu0 0.0
        %1517 = vmatpush1.msra.mxu0 0.0
        %1518 = vmatprep.subr.mxu0 0.0
        %1519 = vmatpush1.msra.mxu0 0.0
        %1520 = vmatprep.subr.mxu0 0.0
        %1521 = vmatpush1.msra.mxu0 0.0
        %1522 = vmatprep.subr.mxu0 0.0
        %1523 = vmatpush1.msra.mxu0 0.0
        %1524 = vmatprep.subr.mxu0 0.0
        %1525 = vmatpush1.msra.mxu0 0.0
        %1526 = vmatprep.subr.mxu0 0.0
        %1527 = vmatpush1.msra.mxu0 0.0
        %1528 = vmatprep.subr.mxu0 0.0
        %1529 = vmatpush1.msra.mxu0 0.0
        %1530 = vmatprep.subr.mxu0 0.0
        %1531 = vmatpush1.msra.mxu0 0.0
        %1532 = vmatprep.subr.mxu0 0.0
        %1533 = vmatpush1.msra.mxu0 0.0
        %1534 = vmatprep.subr.mxu0 0.0
        %1535 = vmatpush1.msra.mxu0 0.0
        %1536 = vmatprep.subr.mxu0 0.0
        %1537 = vmatpush1.msra.mxu0 0.0
        %1538 = vmatprep.subr.mxu0 0.0
        %1539 = vmatpush1.msra.mxu0 0.0
        %1540 = vmatprep.subr.mxu0 0.0
        %1541 = vmatpush1.msra.mxu0 0.0
        %1542 = vmatprep.subr.mxu0 0.0
        %1543 = vmatpush1.msra.mxu0 0.0
        %1544 = vmatprep.subr.mxu0 0.0
        %1545 = vmatpush1.msra.mxu0 0.0
        %1546 = vmatprep.subr.mxu0 0.0
        %1547 = vmatpush1.msra.mxu0 0.0
        %1548 = vmatprep.subr.mxu0 0.0
        %1549 = vmatpush1.msra.mxu0 0.0
        %1550 = vmatprep.subr.mxu0 0.0
        %1551 = vmatpush1.msra.mxu0 0.0
        %1552 = vmatprep.mubr.f32.mxu0 0.0
        %v1553 = vand.u32 %v273, 4294901760
        %1554 = vmatmul.mubr.f32.gmra.mrb[0].mxu0 %v1553
        %v1555 = vpop.f32.mrb[0].mxu0
        %v1556 = vadd.f32 %v1455, %v1555
        %v1557 = vpop.f32.mrb[0].mxu0
        %1558 = vmatprep.mubr.f32.mxu0 0.0
        %v1559 = vand.u32 %v276, 4294901760
        %1560 = vmatmul.mubr.f32.gmra.mrb[0].mxu0 %v1559
        %v1561 = vpop.f32.mrb[0].mxu0
        %v1562 = vadd.f32 %v1465, %v1561
        %v1563 = vpop.f32.mrb[0].mxu0
        %1564 = vmatprep.mubr.f32.mxu0 0.0
        %v1565 = vand.u32 %v279, 4294901760
        %1566 = vmatmul.mubr.f32.gmra.mrb[0].mxu0 %v1565
        %v1567 = vpop.f32.mrb[0].mxu0
        %v1568 = vadd.f32 %v1475, %v1567
        %v1569 = vpop.f32.mrb[0].mxu0
        %1570 = vdwg.mxu0
        %1571 = vmatprep.subr.mxu0 0.0
        %v1572 = vand.u32 %v264, 4294901760
        %v1573 = vsub.f32 %v264, %v1572
        %1574 = vmatpush1.msra.mxu0 %v1573
        %1575 = vmatprep.subr.mxu0 0.0
        %v1576 = vand.u32 %v1379, 4294901760
        %v1577 = vsub.f32 %v1379, %v1576
        %1578 = vmatpush1.msra.mxu0 %v1577
        %1579 = vmatprep.subr.mxu0 0.0
        %1580 = vmatpush1.msra.mxu0 0.0
        %1581 = vmatprep.subr.mxu0 0.0
        %1582 = vmatpush1.msra.mxu0 0.0
        %1583 = vmatprep.subr.mxu0 0.0
        %1584 = vmatpush1.msra.mxu0 0.0
        %1585 = vmatprep.subr.mxu0 0.0
        %1586 = vmatpush1.msra.mxu0 0.0
        %1587 = vmatprep.subr.mxu0 0.0
        %1588 = vmatpush1.msra.mxu0 0.0
        %1589 = vmatprep.subr.mxu0 0.0
        %1590 = vmatpush1.msra.mxu0 0.0
        %1591 = vmatprep.subr.mxu0 0.0
        %1592 = vmatpush1.msra.mxu0 0.0
        %1593 = vmatprep.subr.mxu0 0.0
        %1594 = vmatpush1.msra.mxu0 0.0
        %1595 = vmatprep.subr.mxu0 0.0
        %1596 = vmatpush1.msra.mxu0 0.0
        %1597 = vmatprep.subr.mxu0 0.0
        %1598 = vmatpush1.msra.mxu0 0.0
        %1599 = vmatprep.subr.mxu0 0.0
        %1600 = vmatpush1.msra.mxu0 0.0
        %1601 = vmatprep.subr.mxu0 0.0
        %1602 = vmatpush1.msra.mxu0 0.0
        %1603 = vmatprep.subr.mxu0 0.0
        %1604 = vmatpush1.msra.mxu0 0.0
        %1605 = vmatprep.subr.mxu0 0.0
        %1606 = vmatpush1.msra.mxu0 0.0
        %1607 = vmatprep.subr.mxu0 0.0
        %1608 = vmatpush1.msra.mxu0 0.0
        %1609 = vmatprep.subr.mxu0 0.0
        %1610 = vmatpush1.msra.mxu0 0.0
        %1611 = vmatprep.subr.mxu0 0.0
        %1612 = vmatpush1.msra.mxu0 0.0
        %1613 = vmatprep.subr.mxu0 0.0
        %1614 = vmatpush1.msra.mxu0 0.0
        %1615 = vmatprep.subr.mxu0 0.0
        %1616 = vmatpush1.msra.mxu0 0.0
        %1617 = vmatprep.subr.mxu0 0.0
        %1618 = vmatpush1.msra.mxu0 0.0
        %1619 = vmatprep.subr.mxu0 0.0
        %1620 = vmatpush1.msra.mxu0 0.0
        %1621 = vmatprep.subr.mxu0 0.0
        %1622 = vmatpush1.msra.mxu0 0.0
        %1623 = vmatprep.subr.mxu0 0.0
        %1624 = vmatpush1.msra.mxu0 0.0
        %1625 = vmatprep.subr.mxu0 0.0
        %1626 = vmatpush1.msra.mxu0 0.0
        %1627 = vmatprep.subr.mxu0 0.0
        %1628 = vmatpush1.msra.mxu0 0.0
        %1629 = vmatprep.subr.mxu0 0.0
        %1630 = vmatpush1.msra.mxu0 0.0
        %1631 = vmatprep.subr.mxu0 0.0
        %1632 = vmatpush1.msra.mxu0 0.0
        %1633 = vmatprep.subr.mxu0 0.0
        %1634 = vmatpush1.msra.mxu0 0.0
        %1635 = vmatprep.subr.mxu0 0.0
        %1636 = vmatpush1.msra.mxu0 0.0
        %1637 = vmatprep.subr.mxu0 0.0
        %1638 = vmatpush1.msra.mxu0 0.0
        %1639 = vmatprep.mubr.f32.mxu0 0.0
        %v1640 = vand.u32 %v273, 4294901760
        %v1641 = vsub.f32 %v273, %v1640
        %1642 = vmatmul.mubr.f32.gmra.mrb[0].mxu0 %v1641
        %v1643 = vpop.f32.mrb[0].mxu0
        %v1644 = vadd.f32 %v1556, %v1643
        %v1645 = vpop.f32.mrb[0].mxu0
        %1646 = vmatprep.mubr.f32.mxu0 0.0
        %v1647 = vand.u32 %v276, 4294901760
        %v1648 = vsub.f32 %v276, %v1647
        %1649 = vmatmul.mubr.f32.gmra.mrb[0].mxu0 %v1648
        %v1650 = vpop.f32.mrb[0].mxu0
        %v1651 = vadd.f32 %v1562, %v1650
        %v1652 = vpop.f32.mrb[0].mxu0
        %1653 = vmatprep.mubr.f32.mxu0 0.0
        %v1654 = vand.u32 %v279, 4294901760
        %v1655 = vsub.f32 %v279, %v1654
        %1656 = vmatmul.mubr.f32.gmra.mrb[0].mxu0 %v1655
        %v1657 = vpop.f32.mrb[0].mxu0
        %v1658 = vadd.f32 %v1568, %v1657
        %v1659 = vpop.f32.mrb[0].mxu0
        %1660 = vdwg.mxu0
        %1661 = vmatprep.subr.mxu0 0.0
        %v1662 = vand.u32 %v264, 4294901760
        %1663 = vmatpush1.msra.mxu0 %v1662
        %1664 = vmatprep.subr.mxu0 0.0
        %v1665 = vand.u32 %v1379, 4294901760
        %1666 = vmatpush1.msra.mxu0 %v1665
        %1667 = vmatprep.subr.mxu0 0.0
        %1668 = vmatpush1.msra.mxu0 0.0
        %1669 = vmatprep.subr.mxu0 0.0
        %1670 = vmatpush1.msra.mxu0 0.0
        %1671 = vmatprep.subr.mxu0 0.0
        %1672 = vmatpush1.msra.mxu0 0.0
        %1673 = vmatprep.subr.mxu0 0.0
        %1674 = vmatpush1.msra.mxu0 0.0
        %1675 = vmatprep.subr.mxu0 0.0
        %1676 = vmatpush1.msra.mxu0 0.0
        %1677 = vmatprep.subr.mxu0 0.0
        %1678 = vmatpush1.msra.mxu0 0.0
        %1679 = vmatprep.subr.mxu0 0.0
        %1680 = vmatpush1.msra.mxu0 0.0
        %1681 = vmatprep.subr.mxu0 0.0
        %1682 = vmatpush1.msra.mxu0 0.0
        %1683 = vmatprep.subr.mxu0 0.0
        %1684 = vmatpush1.msra.mxu0 0.0
        %1685 = vmatprep.subr.mxu0 0.0
        %1686 = vmatpush1.msra.mxu0 0.0
        %1687 = vmatprep.subr.mxu0 0.0
        %1688 = vmatpush1.msra.mxu0 0.0
        %1689 = vmatprep.subr.mxu0 0.0
        %1690 = vmatpush1.msra.mxu0 0.0
        %1691 = vmatprep.subr.mxu0 0.0
        %1692 = vmatpush1.msra.mxu0 0.0
        %1693 = vmatprep.subr.mxu0 0.0
        %1694 = vmatpush1.msra.mxu0 0.0
        %1695 = vmatprep.subr.mxu0 0.0
        %1696 = vmatpush1.msra.mxu0 0.0
        %1697 = vmatprep.subr.mxu0 0.0
        %1698 = vmatpush1.msra.mxu0 0.0
        %1699 = vmatprep.subr.mxu0 0.0
        %1700 = vmatpush1.msra.mxu0 0.0
        %1701 = vmatprep.subr.mxu0 0.0
        %1702 = vmatpush1.msra.mxu0 0.0
        %1703 = vmatprep.subr.mxu0 0.0
        %1704 = vmatpush1.msra.mxu0 0.0
        %1705 = vmatprep.subr.mxu0 0.0
        %1706 = vmatpush1.msra.mxu0 0.0
        %1707 = vmatprep.subr.mxu0 0.0
        %1708 = vmatpush1.msra.mxu0 0.0
        %1709 = vmatprep.subr.mxu0 0.0
        %1710 = vmatpush1.msra.mxu0 0.0
        %1711 = vmatprep.subr.mxu0 0.0
        %1712 = vmatpush1.msra.mxu0 0.0
        %1713 = vmatprep.subr.mxu0 0.0
        %1714 = vmatpush1.msra.mxu0 0.0
        %1715 = vmatprep.subr.mxu0 0.0
        %1716 = vmatpush1.msra.mxu0 0.0
        %1717 = vmatprep.subr.mxu0 0.0
        %1718 = vmatpush1.msra.mxu0 0.0
        %1719 = vmatprep.subr.mxu0 0.0
        %1720 = vmatpush1.msra.mxu0 0.0
        %1721 = vmatprep.subr.mxu0 0.0
        %1722 = vmatpush1.msra.mxu0 0.0
        %1723 = vmatprep.subr.mxu0 0.0
        %1724 = vmatpush1.msra.mxu0 0.0
        %1725 = vmatprep.subr.mxu0 0.0
        %1726 = vmatpush1.msra.mxu0 0.0
        %1727 = vmatprep.mubr.f32.mxu0 0.0
        %v1728 = vand.u32 %v273, 4294901760
        %v1729 = vsub.f32 %v273, %v1728
        %v1730 = vand.u32 %v1729, 4294901760
        %1731 = vmatmul.mubr.f32.gmra.mrb[0].mxu0 %v1730
        %v1732 = vpop.f32.mrb[0].mxu0
        %v1733 = vadd.f32 %v1644, %v1732
        %v1734 = vpop.f32.mrb[0].mxu0
        %1735 = vmatprep.mubr.f32.mxu0 0.0
        %v1736 = vand.u32 %v276, 4294901760
        %v1737 = vsub.f32 %v276, %v1736
        %v1738 = vand.u32 %v1737, 4294901760
        %1739 = vmatmul.mubr.f32.gmra.mrb[0].mxu0 %v1738
        %v1740 = vpop.f32.mrb[0].mxu0
        %v1741 = vadd.f32 %v1651, %v1740
        %v1742 = vpop.f32.mrb[0].mxu0
        %1743 = vmatprep.mubr.f32.mxu0 0.0
        %v1744 = vand.u32 %v279, 4294901760
        %v1745 = vsub.f32 %v279, %v1744
        %v1746 = vand.u32 %v1745, 4294901760
        %1747 = vmatmul.mubr.f32.gmra.mrb[0].mxu0 %v1746
        %v1748 = vpop.f32.mrb[0].mxu0
        %v1749 = vadd.f32 %v1658, %v1748
        %v1750 = vpop.f32.mrb[0].mxu0
        %1751 = vdwg.mxu0
        %1752 = vmatprep.subr.mxu0 0.0
        %v1753 = vand.u32 %v264, 4294901760
        %v1754 = vsub.f32 %v264, %v1753
        %v1755 = vand.u32 %v1754, 4294901760
        %1756 = vmatpush1.msra.mxu0 %v1755
        %1757 = vmatprep.subr.mxu0 0.0
        %v1758 = vand.u32 %v1379, 4294901760
        %v1759 = vsub.f32 %v1379, %v1758
        %v1760 = vand.u32 %v1759, 4294901760
        %1761 = vmatpush1.msra.mxu0 %v1760
        %1762 = vmatprep.subr.mxu0 0.0
        %1763 = vmatpush1.msra.mxu0 0.0
        %1764 = vmatprep.subr.mxu0 0.0
        %1765 = vmatpush1.msra.mxu0 0.0
        %1766 = vmatprep.subr.mxu0 0.0
        %1767 = vmatpush1.msra.mxu0 0.0
        %1768 = vmatprep.subr.mxu0 0.0
        %1769 = vmatpush1.msra.mxu0 0.0
        %1770 = vmatprep.subr.mxu0 0.0
        %1771 = vmatpush1.msra.mxu0 0.0
        %1772 = vmatprep.subr.mxu0 0.0
        %1773 = vmatpush1.msra.mxu0 0.0
        %1774 = vmatprep.subr.mxu0 0.0
        %1775 = vmatpush1.msra.mxu0 0.0
        %1776 = vmatprep.subr.mxu0 0.0
        %1777 = vmatpush1.msra.mxu0 0.0
        %1778 = vmatprep.subr.mxu0 0.0
        %1779 = vmatpush1.msra.mxu0 0.0
        %1780 = vmatprep.subr.mxu0 0.0
        %1781 = vmatpush1.msra.mxu0 0.0
        %1782 = vmatprep.subr.mxu0 0.0
        %1783 = vmatpush1.msra.mxu0 0.0
        %1784 = vmatprep.subr.mxu0 0.0
        %1785 = vmatpush1.msra.mxu0 0.0
        %1786 = vmatprep.subr.mxu0 0.0
        %1787 = vmatpush1.msra.mxu0 0.0
        %1788 = vmatprep.subr.mxu0 0.0
        %1789 = vmatpush1.msra.mxu0 0.0
        %1790 = vmatprep.subr.mxu0 0.0
        %1791 = vmatpush1.msra.mxu0 0.0
        %1792 = vmatprep.subr.mxu0 0.0
        %1793 = vmatpush1.msra.mxu0 0.0
        %1794 = vmatprep.subr.mxu0 0.0
        %1795 = vmatpush1.msra.mxu0 0.0
        %1796 = vmatprep.subr.mxu0 0.0
        %1797 = vmatpush1.msra.mxu0 0.0
        %1798 = vmatprep.subr.mxu0 0.0
        %1799 = vmatpush1.msra.mxu0 0.0
        %1800 = vmatprep.subr.mxu0 0.0
        %1801 = vmatpush1.msra.mxu0 0.0
        %1802 = vmatprep.subr.mxu0 0.0
        %1803 = vmatpush1.msra.mxu0 0.0
        %1804 = vmatprep.subr.mxu0 0.0
        %1805 = vmatpush1.msra.mxu0 0.0
        %1806 = vmatprep.subr.mxu0 0.0
        %1807 = vmatpush1.msra.mxu0 0.0
        %1808 = vmatprep.subr.mxu0 0.0
        %1809 = vmatpush1.msra.mxu0 0.0
        %1810 = vmatprep.subr.mxu0 0.0
        %1811 = vmatpush1.msra.mxu0 0.0
        %1812 = vmatprep.subr.mxu0 0.0
        %1813 = vmatpush1.msra.mxu0 0.0
        %1814 = vmatprep.subr.mxu0 0.0
        %1815 = vmatpush1.msra.mxu0 0.0
        %1816 = vmatprep.subr.mxu0 0.0
        %1817 = vmatpush1.msra.mxu0 0.0
        %1818 = vmatprep.subr.mxu0 0.0
        %1819 = vmatpush1.msra.mxu0 0.0
        %1820 = vmatprep.subr.mxu0 0.0
        %1821 = vmatpush1.msra.mxu0 0.0
        %1822 = vmatprep.mubr.f32.mxu0 0.0
        %v1823 = vand.u32 %v273, 4294901760
        %1824 = vmatmul.mubr.f32.gmra.mrb[0].mxu0 %v1823
        %v1825 = vpop.f32.mrb[0].mxu0
        %v1826 = vadd.f32 %v1733, %v1825
        %v1827 = vpop.f32.mrb[0].mxu0
        %1828 = vmatprep.mubr.f32.mxu0 0.0
        %v1829 = vand.u32 %v276, 4294901760
        %1830 = vmatmul.mubr.f32.gmra.mrb[0].mxu0 %v1829
        %v1831 = vpop.f32.mrb[0].mxu0
        %v1832 = vadd.f32 %v1741, %v1831
        %v1833 = vpop.f32.mrb[0].mxu0
        %1834 = vmatprep.mubr.f32.mxu0 0.0
        %v1835 = vand.u32 %v279, 4294901760
        %1836 = vmatmul.mubr.f32.gmra.mrb[0].mxu0 %v1835
        %v1837 = vpop.f32.mrb[0].mxu0
        %v1838 = vadd.f32 %v1749, %v1837
        %v1839 = vpop.f32.mrb[0].mxu0
        %1840 = vdwg.mxu0
        %1841 = vmatprep.subr.mxu0 0.0
        %v1842 = vand.u32 %v264, 4294901760
        %1843 = vmatpush1.msra.mxu0 %v1842
        %1844 = vmatprep.subr.mxu0 0.0
        %v1845 = vand.u32 %v1379, 4294901760
        %1846 = vmatpush1.msra.mxu0 %v1845
        %1847 = vmatprep.subr.mxu0 0.0
        %1848 = vmatpush1.msra.mxu0 0.0
        %1849 = vmatprep.subr.mxu0 0.0
        %1850 = vmatpush1.msra.mxu0 0.0
        %1851 = vmatprep.subr.mxu0 0.0
        %1852 = vmatpush1.msra.mxu0 0.0
        %1853 = vmatprep.subr.mxu0 0.0
        %1854 = vmatpush1.msra.mxu0 0.0
        %1855 = vmatprep.subr.mxu0 0.0
        %1856 = vmatpush1.msra.mxu0 0.0
        %1857 = vmatprep.subr.mxu0 0.0
        %1858 = vmatpush1.msra.mxu0 0.0
        %1859 = vmatprep.subr.mxu0 0.0
        %1860 = vmatpush1.msra.mxu0 0.0
        %1861 = vmatprep.subr.mxu0 0.0
        %1862 = vmatpush1.msra.mxu0 0.0
        %1863 = vmatprep.subr.mxu0 0.0
        %1864 = vmatpush1.msra.mxu0 0.0
        %1865 = vmatprep.subr.mxu0 0.0
        %1866 = vmatpush1.msra.mxu0 0.0
        %1867 = vmatprep.subr.mxu0 0.0
        %1868 = vmatpush1.msra.mxu0 0.0
        %1869 = vmatprep.subr.mxu0 0.0
        %1870 = vmatpush1.msra.mxu0 0.0
        %1871 = vmatprep.subr.mxu0 0.0
        %1872 = vmatpush1.msra.mxu0 0.0
        %1873 = vmatprep.subr.mxu0 0.0
        %1874 = vmatpush1.msra.mxu0 0.0
        %1875 = vmatprep.subr.mxu0 0.0
        %1876 = vmatpush1.msra.mxu0 0.0
        %1877 = vmatprep.subr.mxu0 0.0
        %1878 = vmatpush1.msra.mxu0 0.0
        %1879 = vmatprep.subr.mxu0 0.0
        %1880 = vmatpush1.msra.mxu0 0.0
        %1881 = vmatprep.subr.mxu0 0.0
        %1882 = vmatpush1.msra.mxu0 0.0
        %1883 = vmatprep.subr.mxu0 0.0
        %1884 = vmatpush1.msra.mxu0 0.0
        %1885 = vmatprep.subr.mxu0 0.0
        %1886 = vmatpush1.msra.mxu0 0.0
        %1887 = vmatprep.subr.mxu0 0.0
        %1888 = vmatpush1.msra.mxu0 0.0
        %1889 = vmatprep.subr.mxu0 0.0
        %1890 = vmatpush1.msra.mxu0 0.0
        %1891 = vmatprep.subr.mxu0 0.0
        %1892 = vmatpush1.msra.mxu0 0.0
        %1893 = vmatprep.subr.mxu0 0.0
        %1894 = vmatpush1.msra.mxu0 0.0
        %1895 = vmatprep.subr.mxu0 0.0
        %1896 = vmatpush1.msra.mxu0 0.0
        %1897 = vmatprep.subr.mxu0 0.0
        %1898 = vmatpush1.msra.mxu0 0.0
        %1899 = vmatprep.subr.mxu0 0.0
        %1900 = vmatpush1.msra.mxu0 0.0
        %1901 = vmatprep.subr.mxu0 0.0
        %1902 = vmatpush1.msra.mxu0 0.0
        %1903 = vmatprep.subr.mxu0 0.0
        %1904 = vmatpush1.msra.mxu0 0.0
        %1905 = vmatprep.subr.mxu0 0.0
        %1906 = vmatpush1.msra.mxu0 0.0
        %1907 = vmatprep.mubr.f32.mxu0 0.0
        %v1908 = vand.u32 %v273, 4294901760
        %1909 = vmatmul.mubr.f32.gmra.mrb[0].mxu0 %v1908
        %v1910 = vpop.f32.mrb[0].mxu0
        %v1911 = vadd.f32 %v1826, %v1910
        %v1912 = vpop.f32.mrb[0].mxu0
        %1913 = vmatprep.mubr.f32.mxu0 0.0
        %v1914 = vand.u32 %v276, 4294901760
        %1915 = vmatmul.mubr.f32.gmra.mrb[0].mxu0 %v1914
        %v1916 = vpop.f32.mrb[0].mxu0
        %v1917 = vadd.f32 %v1832, %v1916
        %v1918 = vpop.f32.mrb[0].mxu0
        %1919 = vmatprep.mubr.f32.mxu0 0.0
        %v1920 = vand.u32 %v279, 4294901760
        %1921 = vmatmul.mubr.f32.gmra.mrb[0].mxu0 %v1920
        %v1922 = vpop.f32.mrb[0].mxu0
        %v1923 = vadd.f32 %v1838, %v1922
        %v1924 = vpop.f32.mrb[0].mxu0
        %1925 = vdwg.mxu0
        %v1927 = vsel %vm281, %v267, 0
        %1929 = vmatprep.subr.mxu0 0.0
        %v1930 = vand.u32 %v266, 4294901760
        %1931 = vmatpush1.msra.mxu0 %v1930
        %1932 = vmatprep.subr.mxu0 0.0
        %v1933 = vand.u32 %v1927, 4294901760
        %1934 = vmatpush1.msra.mxu0 %v1933
        %1935 = vmatprep.subr.mxu0 0.0
        %1936 = vmatpush1.msra.mxu0 0.0
        %1937 = vmatprep.subr.mxu0 0.0
        %1938 = vmatpush1.msra.mxu0 0.0
        %1939 = vmatprep.subr.mxu0 0.0
        %1940 = vmatpush1.msra.mxu0 0.0
        %1941 = vmatprep.subr.mxu0 0.0
        %1942 = vmatpush1.msra.mxu0 0.0
        %1943 = vmatprep.subr.mxu0 0.0
        %1944 = vmatpush1.msra.mxu0 0.0
        %1945 = vmatprep.subr.mxu0 0.0
        %1946 = vmatpush1.msra.mxu0 0.0
        %1947 = vmatprep.subr.mxu0 0.0
        %1948 = vmatpush1.msra.mxu0 0.0
        %1949 = vmatprep.subr.mxu0 0.0
        %1950 = vmatpush1.msra.mxu0 0.0
        %1951 = vmatprep.subr.mxu0 0.0
        %1952 = vmatpush1.msra.mxu0 0.0
        %1953 = vmatprep.subr.mxu0 0.0
        %1954 = vmatpush1.msra.mxu0 0.0
        %1955 = vmatprep.subr.mxu0 0.0
        %1956 = vmatpush1.msra.mxu0 0.0
        %1957 = vmatprep.subr.mxu0 0.0
        %1958 = vmatpush1.msra.mxu0 0.0
        %1959 = vmatprep.subr.mxu0 0.0
        %1960 = vmatpush1.msra.mxu0 0.0
        %1961 = vmatprep.subr.mxu0 0.0
        %1962 = vmatpush1.msra.mxu0 0.0
        %1963 = vmatprep.subr.mxu0 0.0
        %1964 = vmatpush1.msra.mxu0 0.0
        %1965 = vmatprep.subr.mxu0 0.0
        %1966 = vmatpush1.msra.mxu0 0.0
        %1967 = vmatprep.subr.mxu0 0.0
        %1968 = vmatpush1.msra.mxu0 0.0
        %1969 = vmatprep.subr.mxu0 0.0
        %1970 = vmatpush1.msra.mxu0 0.0
        %1971 = vmatprep.subr.mxu0 0.0
        %1972 = vmatpush1.msra.mxu0 0.0
        %1973 = vmatprep.subr.mxu0 0.0
        %1974 = vmatpush1.msra.mxu0 0.0
        %1975 = vmatprep.subr.mxu0 0.0
        %1976 = vmatpush1.msra.mxu0 0.0
        %1977 = vmatprep.subr.mxu0 0.0
        %1978 = vmatpush1.msra.mxu0 0.0
        %1979 = vmatprep.subr.mxu0 0.0
        %1980 = vmatpush1.msra.mxu0 0.0
        %1981 = vmatprep.subr.mxu0 0.0
        %1982 = vmatpush1.msra.mxu0 0.0
        %1983 = vmatprep.subr.mxu0 0.0
        %1984 = vmatpush1.msra.mxu0 0.0
        %1985 = vmatprep.subr.mxu0 0.0
        %1986 = vmatpush1.msra.mxu0 0.0
        %1987 = vmatprep.subr.mxu0 0.0
        %1988 = vmatpush1.msra.mxu0 0.0
        %1989 = vmatprep.subr.mxu0 0.0
        %1990 = vmatpush1.msra.mxu0 0.0
        %1991 = vmatprep.subr.mxu0 0.0
        %1992 = vmatpush1.msra.mxu0 0.0
        %1993 = vmatprep.subr.mxu0 0.0
        %1994 = vmatpush1.msra.mxu0 0.0
        %1995 = vmatprep.mubr.f32.mxu0 0.0
        %v1996 = vand.u32 %v273, 4294901760
        %v1997 = vsub.f32 %v273, %v1996
        %v1998 = vand.u32 %v1997, 4294901760
        %v1999 = vsub.f32 %v1997, %v1998
        %v2000 = vand.u32 %v1999, 4294901760
        %2001 = vmatmul.mubr.f32.gmra.mrb[0].mxu0 %v2000
        %v2002 = vpop.f32.mrb[0].mxu0
        %v2003 = vadd.f32 0.0, %v2002
        %v2004 = vpop.f32.mrb[0].mxu0
        %2005 = vmatprep.mubr.f32.mxu0 0.0
        %v2006 = vand.u32 %v276, 4294901760
        %v2007 = vsub.f32 %v276, %v2006
        %v2008 = vand.u32 %v2007, 4294901760
        %v2009 = vsub.f32 %v2007, %v2008
        %v2010 = vand.u32 %v2009, 4294901760
        %2011 = vmatmul.mubr.f32.gmra.mrb[0].mxu0 %v2010
        %v2012 = vpop.f32.mrb[0].mxu0
        %v2013 = vadd.f32 0.0, %v2012
        %v2014 = vpop.f32.mrb[0].mxu0
        %2015 = vmatprep.mubr.f32.mxu0 0.0
        %v2016 = vand.u32 %v279, 4294901760
        %v2017 = vsub.f32 %v279, %v2016
        %v2018 = vand.u32 %v2017, 4294901760
        %v2019 = vsub.f32 %v2017, %v2018
        %v2020 = vand.u32 %v2019, 4294901760
        %2021 = vmatmul.mubr.f32.gmra.mrb[0].mxu0 %v2020
        %v2022 = vpop.f32.mrb[0].mxu0
        %v2023 = vadd.f32 0.0, %v2022
        %v2024 = vpop.f32.mrb[0].mxu0
        %2025 = vdwg.mxu0
        %2026 = vmatprep.subr.mxu0 0.0
        %v2027 = vand.u32 %v266, 4294901760
        %v2028 = vsub.f32 %v266, %v2027
        %v2029 = vand.u32 %v2028, 4294901760
        %v2030 = vsub.f32 %v2028, %v2029
        %v2031 = vand.u32 %v2030, 4294901760
        %2032 = vmatpush1.msra.mxu0 %v2031
        %2033 = vmatprep.subr.mxu0 0.0
        %v2034 = vand.u32 %v1927, 4294901760
        %v2035 = vsub.f32 %v1927, %v2034
        %v2036 = vand.u32 %v2035, 4294901760
        %v2037 = vsub.f32 %v2035, %v2036
        %v2038 = vand.u32 %v2037, 4294901760
        %2039 = vmatpush1.msra.mxu0 %v2038
        %2040 = vmatprep.subr.mxu0 0.0
        %2041 = vmatpush1.msra.mxu0 0.0
        %2042 = vmatprep.subr.mxu0 0.0
        %2043 = vmatpush1.msra.mxu0 0.0
        %2044 = vmatprep.subr.mxu0 0.0
        %2045 = vmatpush1.msra.mxu0 0.0
        %2046 = vmatprep.subr.mxu0 0.0
        %2047 = vmatpush1.msra.mxu0 0.0
        %2048 = vmatprep.subr.mxu0 0.0
        %2049 = vmatpush1.msra.mxu0 0.0
        %2050 = vmatprep.subr.mxu0 0.0
        %2051 = vmatpush1.msra.mxu0 0.0
        %2052 = vmatprep.subr.mxu0 0.0
        %2053 = vmatpush1.msra.mxu0 0.0
        %2054 = vmatprep.subr.mxu0 0.0
        %2055 = vmatpush1.msra.mxu0 0.0
        %2056 = vmatprep.subr.mxu0 0.0
        %2057 = vmatpush1.msra.mxu0 0.0
        %2058 = vmatprep.subr.mxu0 0.0
        %2059 = vmatpush1.msra.mxu0 0.0
        %2060 = vmatprep.subr.mxu0 0.0
        %2061 = vmatpush1.msra.mxu0 0.0
        %2062 = vmatprep.subr.mxu0 0.0
        %2063 = vmatpush1.msra.mxu0 0.0
        %2064 = vmatprep.subr.mxu0 0.0
        %2065 = vmatpush1.msra.mxu0 0.0
        %2066 = vmatprep.subr.mxu0 0.0
        %2067 = vmatpush1.msra.mxu0 0.0
        %2068 = vmatprep.subr.mxu0 0.0
        %2069 = vmatpush1.msra.mxu0 0.0
        %2070 = vmatprep.subr.mxu0 0.0
        %2071 = vmatpush1.msra.mxu0 0.0
        %2072 = vmatprep.subr.mxu0 0.0
        %2073 = vmatpush1.msra.mxu0 0.0
        %2074 = vmatprep.subr.mxu0 0.0
        %2075 = vmatpush1.msra.mxu0 0.0
        %2076 = vmatprep.subr.mxu0 0.0
        %2077 = vmatpush1.msra.mxu0 0.0
        %2078 = vmatprep.subr.mxu0 0.0
        %2079 = vmatpush1.msra.mxu0 0.0
        %2080 = vmatprep.subr.mxu0 0.0
        %2081 = vmatpush1.msra.mxu0 0.0
        %2082 = vmatprep.subr.mxu0 0.0
        %2083 = vmatpush1.msra.mxu0 0.0
        %2084 = vmatprep.subr.mxu0 0.0
        %2085 = vmatpush1.msra.mxu0 0.0
        %2086 = vmatprep.subr.mxu0 0.0
        %2087 = vmatpush1.msra.mxu0 0.0
        %2088 = vmatprep.subr.mxu0 0.0
        %2089 = vmatpush1.msra.mxu0 0.0
        %2090 = vmatprep.subr.mxu0 0.0
        %2091 = vmatpush1.msra.mxu0 0.0
        %2092 = vmatprep.subr.mxu0 0.0
        %2093 = vmatpush1.msra.mxu0 0.0
        %2094 = vmatprep.subr.mxu0 0.0
        %2095 = vmatpush1.msra.mxu0 0.0
        %2096 = vmatprep.subr.mxu0 0.0
        %2097 = vmatpush1.msra.mxu0 0.0
        %2098 = vmatprep.subr.mxu0 0.0
        %2099 = vmatpush1.msra.mxu0 0.0
        %2100 = vmatprep.mubr.f32.mxu0 0.0
        %v2101 = vand.u32 %v273, 4294901760
        %2102 = vmatmul.mubr.f32.gmra.mrb[0].mxu0 %v2101
        %v2103 = vpop.f32.mrb[0].mxu0
        %v2104 = vadd.f32 %v2003, %v2103
        %v2105 = vpop.f32.mrb[0].mxu0
        %2106 = vmatprep.mubr.f32.mxu0 0.0
        %v2107 = vand.u32 %v276, 4294901760
        %2108 = vmatmul.mubr.f32.gmra.mrb[0].mxu0 %v2107
        %v2109 = vpop.f32.mrb[0].mxu0
        %v2110 = vadd.f32 %v2013, %v2109
        %v2111 = vpop.f32.mrb[0].mxu0
        %2112 = vmatprep.mubr.f32.mxu0 0.0
        %v2113 = vand.u32 %v279, 4294901760
        %2114 = vmatmul.mubr.f32.gmra.mrb[0].mxu0 %v2113
        %v2115 = vpop.f32.mrb[0].mxu0
        %v2116 = vadd.f32 %v2023, %v2115
        %v2117 = vpop.f32.mrb[0].mxu0
        %2118 = vdwg.mxu0
        %2119 = vmatprep.subr.mxu0 0.0
        %v2120 = vand.u32 %v266, 4294901760
        %v2121 = vsub.f32 %v266, %v2120
        %2122 = vmatpush1.msra.mxu0 %v2121
        %2123 = vmatprep.subr.mxu0 0.0
        %v2124 = vand.u32 %v1927, 4294901760
        %v2125 = vsub.f32 %v1927, %v2124
        %2126 = vmatpush1.msra.mxu0 %v2125
        %2127 = vmatprep.subr.mxu0 0.0
        %2128 = vmatpush1.msra.mxu0 0.0
        %2129 = vmatprep.subr.mxu0 0.0
        %2130 = vmatpush1.msra.mxu0 0.0
        %2131 = vmatprep.subr.mxu0 0.0
        %2132 = vmatpush1.msra.mxu0 0.0
        %2133 = vmatprep.subr.mxu0 0.0
        %2134 = vmatpush1.msra.mxu0 0.0
        %2135 = vmatprep.subr.mxu0 0.0
        %2136 = vmatpush1.msra.mxu0 0.0
        %2137 = vmatprep.subr.mxu0 0.0
        %2138 = vmatpush1.msra.mxu0 0.0
        %2139 = vmatprep.subr.mxu0 0.0
        %2140 = vmatpush1.msra.mxu0 0.0
        %2141 = vmatprep.subr.mxu0 0.0
        %2142 = vmatpush1.msra.mxu0 0.0
        %2143 = vmatprep.subr.mxu0 0.0
        %2144 = vmatpush1.msra.mxu0 0.0
        %2145 = vmatprep.subr.mxu0 0.0
        %2146 = vmatpush1.msra.mxu0 0.0
        %2147 = vmatprep.subr.mxu0 0.0
        %2148 = vmatpush1.msra.mxu0 0.0
        %2149 = vmatprep.subr.mxu0 0.0
        %2150 = vmatpush1.msra.mxu0 0.0
        %2151 = vmatprep.subr.mxu0 0.0
        %2152 = vmatpush1.msra.mxu0 0.0
        %2153 = vmatprep.subr.mxu0 0.0
        %2154 = vmatpush1.msra.mxu0 0.0
        %2155 = vmatprep.subr.mxu0 0.0
        %2156 = vmatpush1.msra.mxu0 0.0
        %2157 = vmatprep.subr.mxu0 0.0
        %2158 = vmatpush1.msra.mxu0 0.0
        %2159 = vmatprep.subr.mxu0 0.0
        %2160 = vmatpush1.msra.mxu0 0.0
        %2161 = vmatprep.subr.mxu0 0.0
        %2162 = vmatpush1.msra.mxu0 0.0
        %2163 = vmatprep.subr.mxu0 0.0
        %2164 = vmatpush1.msra.mxu0 0.0
        %2165 = vmatprep.subr.mxu0 0.0
        %2166 = vmatpush1.msra.mxu0 0.0
        %2167 = vmatprep.subr.mxu0 0.0
        %2168 = vmatpush1.msra.mxu0 0.0
        %2169 = vmatprep.subr.mxu0 0.0
        %2170 = vmatpush1.msra.mxu0 0.0
        %2171 = vmatprep.subr.mxu0 0.0
        %2172 = vmatpush1.msra.mxu0 0.0
        %2173 = vmatprep.subr.mxu0 0.0
        %2174 = vmatpush1.msra.mxu0 0.0
        %2175 = vmatprep.subr.mxu0 0.0
        %2176 = vmatpush1.msra.mxu0 0.0
        %2177 = vmatprep.subr.mxu0 0.0
        %2178 = vmatpush1.msra.mxu0 0.0
        %2179 = vmatprep.subr.mxu0 0.0
        %2180 = vmatpush1.msra.mxu0 0.0
        %2181 = vmatprep.subr.mxu0 0.0
        %2182 = vmatpush1.msra.mxu0 0.0
        %2183 = vmatprep.subr.mxu0 0.0
        %2184 = vmatpush1.msra.mxu0 0.0
        %2185 = vmatprep.subr.mxu0 0.0
        %2186 = vmatpush1.msra.mxu0 0.0
        %2187 = vmatprep.mubr.f32.mxu0 0.0
        %v2188 = vand.u32 %v273, 4294901760
        %v2189 = vsub.f32 %v273, %v2188
        %2190 = vmatmul.mubr.f32.gmra.mrb[0].mxu0 %v2189
        %v2191 = vpop.f32.mrb[0].mxu0
        %v2192 = vadd.f32 %v2104, %v2191
        %v2193 = vpop.f32.mrb[0].mxu0
        %2194 = vmatprep.mubr.f32.mxu0 0.0
        %v2195 = vand.u32 %v276, 4294901760
        %v2196 = vsub.f32 %v276, %v2195
        %2197 = vmatmul.mubr.f32.gmra.mrb[0].mxu0 %v2196
        %v2198 = vpop.f32.mrb[0].mxu0
        %v2199 = vadd.f32 %v2110, %v2198
        %v2200 = vpop.f32.mrb[0].mxu0
        %2201 = vmatprep.mubr.f32.mxu0 0.0
        %v2202 = vand.u32 %v279, 4294901760
        %v2203 = vsub.f32 %v279, %v2202
        %2204 = vmatmul.mubr.f32.gmra.mrb[0].mxu0 %v2203
        %v2205 = vpop.f32.mrb[0].mxu0
        %v2206 = vadd.f32 %v2116, %v2205
        %v2207 = vpop.f32.mrb[0].mxu0
        %2208 = vdwg.mxu0
        %2209 = vmatprep.subr.mxu0 0.0
        %v2210 = vand.u32 %v266, 4294901760
        %2211 = vmatpush1.msra.mxu0 %v2210
        %2212 = vmatprep.subr.mxu0 0.0
        %v2213 = vand.u32 %v1927, 4294901760
        %2214 = vmatpush1.msra.mxu0 %v2213
        %2215 = vmatprep.subr.mxu0 0.0
        %2216 = vmatpush1.msra.mxu0 0.0
        %2217 = vmatprep.subr.mxu0 0.0
        %2218 = vmatpush1.msra.mxu0 0.0
        %2219 = vmatprep.subr.mxu0 0.0
        %2220 = vmatpush1.msra.mxu0 0.0
        %2221 = vmatprep.subr.mxu0 0.0
        %2222 = vmatpush1.msra.mxu0 0.0
        %2223 = vmatprep.subr.mxu0 0.0
        %2224 = vmatpush1.msra.mxu0 0.0
        %2225 = vmatprep.subr.mxu0 0.0
        %2226 = vmatpush1.msra.mxu0 0.0
        %2227 = vmatprep.subr.mxu0 0.0
        %2228 = vmatpush1.msra.mxu0 0.0
        %2229 = vmatprep.subr.mxu0 0.0
        %2230 = vmatpush1.msra.mxu0 0.0
        %2231 = vmatprep.subr.mxu0 0.0
        %2232 = vmatpush1.msra.mxu0 0.0
        %2233 = vmatprep.subr.mxu0 0.0
        %2234 = vmatpush1.msra.mxu0 0.0
        %2235 = vmatprep.subr.mxu0 0.0
        %2236 = vmatpush1.msra.mxu0 0.0
        %2237 = vmatprep.subr.mxu0 0.0
        %2238 = vmatpush1.msra.mxu0 0.0
        %2239 = vmatprep.subr.mxu0 0.0
        %2240 = vmatpush1.msra.mxu0 0.0
        %2241 = vmatprep.subr.mxu0 0.0
        %2242 = vmatpush1.msra.mxu0 0.0
        %2243 = vmatprep.subr.mxu0 0.0
        %2244 = vmatpush1.msra.mxu0 0.0
        %2245 = vmatprep.subr.mxu0 0.0
        %2246 = vmatpush1.msra.mxu0 0.0
        %2247 = vmatprep.subr.mxu0 0.0
        %2248 = vmatpush1.msra.mxu0 0.0
        %2249 = vmatprep.subr.mxu0 0.0
        %2250 = vmatpush1.msra.mxu0 0.0
        %2251 = vmatprep.subr.mxu0 0.0
        %2252 = vmatpush1.msra.mxu0 0.0
        %2253 = vmatprep.subr.mxu0 0.0
        %2254 = vmatpush1.msra.mxu0 0.0
        %2255 = vmatprep.subr.mxu0 0.0
        %2256 = vmatpush1.msra.mxu0 0.0
        %2257 = vmatprep.subr.mxu0 0.0
        %2258 = vmatpush1.msra.mxu0 0.0
        %2259 = vmatprep.subr.mxu0 0.0
        %2260 = vmatpush1.msra.mxu0 0.0
        %2261 = vmatprep.subr.mxu0 0.0
        %2262 = vmatpush1.msra.mxu0 0.0
        %2263 = vmatprep.subr.mxu0 0.0
        %2264 = vmatpush1.msra.mxu0 0.0
        %2265 = vmatprep.subr.mxu0 0.0
        %2266 = vmatpush1.msra.mxu0 0.0
        %2267 = vmatprep.subr.mxu0 0.0
        %2268 = vmatpush1.msra.mxu0 0.0
        %2269 = vmatprep.subr.mxu0 0.0
        %2270 = vmatpush1.msra.mxu0 0.0
        %2271 = vmatprep.subr.mxu0 0.0
        %2272 = vmatpush1.msra.mxu0 0.0
        %2273 = vmatprep.subr.mxu0 0.0
        %2274 = vmatpush1.msra.mxu0 0.0
        %2275 = vmatprep.mubr.f32.mxu0 0.0
        %v2276 = vand.u32 %v273, 4294901760
        %v2277 = vsub.f32 %v273, %v2276
        %v2278 = vand.u32 %v2277, 4294901760
        %2279 = vmatmul.mubr.f32.gmra.mrb[0].mxu0 %v2278
        %v2280 = vpop.f32.mrb[0].mxu0
        %v2281 = vadd.f32 %v2192, %v2280
        %v2282 = vpop.f32.mrb[0].mxu0
        %2283 = vmatprep.mubr.f32.mxu0 0.0
        %v2284 = vand.u32 %v276, 4294901760
        %v2285 = vsub.f32 %v276, %v2284
        %v2286 = vand.u32 %v2285, 4294901760
        %2287 = vmatmul.mubr.f32.gmra.mrb[0].mxu0 %v2286
        %v2288 = vpop.f32.mrb[0].mxu0
        %v2289 = vadd.f32 %v2199, %v2288
        %v2290 = vpop.f32.mrb[0].mxu0
        %2291 = vmatprep.mubr.f32.mxu0 0.0
        %v2292 = vand.u32 %v279, 4294901760
        %v2293 = vsub.f32 %v279, %v2292
        %v2294 = vand.u32 %v2293, 4294901760
        %2295 = vmatmul.mubr.f32.gmra.mrb[0].mxu0 %v2294
        %v2296 = vpop.f32.mrb[0].mxu0
        %v2297 = vadd.f32 %v2206, %v2296
        %v2298 = vpop.f32.mrb[0].mxu0
        %2299 = vdwg.mxu0
        %2300 = vmatprep.subr.mxu0 0.0
        %v2301 = vand.u32 %v266, 4294901760
        %v2302 = vsub.f32 %v266, %v2301
        %v2303 = vand.u32 %v2302, 4294901760
        %2304 = vmatpush1.msra.mxu0 %v2303
        %2305 = vmatprep.subr.mxu0 0.0
        %v2306 = vand.u32 %v1927, 4294901760
        %v2307 = vsub.f32 %v1927, %v2306
        %v2308 = vand.u32 %v2307, 4294901760
        %2309 = vmatpush1.msra.mxu0 %v2308
        %2310 = vmatprep.subr.mxu0 0.0
        %2311 = vmatpush1.msra.mxu0 0.0
        %2312 = vmatprep.subr.mxu0 0.0
        %2313 = vmatpush1.msra.mxu0 0.0
        %2314 = vmatprep.subr.mxu0 0.0
        %2315 = vmatpush1.msra.mxu0 0.0
        %2316 = vmatprep.subr.mxu0 0.0
        %2317 = vmatpush1.msra.mxu0 0.0
        %2318 = vmatprep.subr.mxu0 0.0
        %2319 = vmatpush1.msra.mxu0 0.0
        %2320 = vmatprep.subr.mxu0 0.0
        %2321 = vmatpush1.msra.mxu0 0.0
        %2322 = vmatprep.subr.mxu0 0.0
        %2323 = vmatpush1.msra.mxu0 0.0
        %2324 = vmatprep.subr.mxu0 0.0
        %2325 = vmatpush1.msra.mxu0 0.0
        %2326 = vmatprep.subr.mxu0 0.0
        %2327 = vmatpush1.msra.mxu0 0.0
        %2328 = vmatprep.subr.mxu0 0.0
        %2329 = vmatpush1.msra.mxu0 0.0
        %2330 = vmatprep.subr.mxu0 0.0
        %2331 = vmatpush1.msra.mxu0 0.0
        %2332 = vmatprep.subr.mxu0 0.0
        %2333 = vmatpush1.msra.mxu0 0.0
        %2334 = vmatprep.subr.mxu0 0.0
        %2335 = vmatpush1.msra.mxu0 0.0
        %2336 = vmatprep.subr.mxu0 0.0
        %2337 = vmatpush1.msra.mxu0 0.0
        %2338 = vmatprep.subr.mxu0 0.0
        %2339 = vmatpush1.msra.mxu0 0.0
        %2340 = vmatprep.subr.mxu0 0.0
        %2341 = vmatpush1.msra.mxu0 0.0
        %2342 = vmatprep.subr.mxu0 0.0
        %2343 = vmatpush1.msra.mxu0 0.0
        %2344 = vmatprep.subr.mxu0 0.0
        %2345 = vmatpush1.msra.mxu0 0.0
        %2346 = vmatprep.subr.mxu0 0.0
        %2347 = vmatpush1.msra.mxu0 0.0
        %2348 = vmatprep.subr.mxu0 0.0
        %2349 = vmatpush1.msra.mxu0 0.0
        %2350 = vmatprep.subr.mxu0 0.0
        %2351 = vmatpush1.msra.mxu0 0.0
        %2352 = vmatprep.subr.mxu0 0.0
        %2353 = vmatpush1.msra.mxu0 0.0
        %2354 = vmatprep.subr.mxu0 0.0
        %2355 = vmatpush1.msra.mxu0 0.0
        %2356 = vmatprep.subr.mxu0 0.0
        %2357 = vmatpush1.msra.mxu0 0.0
        %2358 = vmatprep.subr.mxu0 0.0
        %2359 = vmatpush1.msra.mxu0 0.0
        %2360 = vmatprep.subr.mxu0 0.0
        %2361 = vmatpush1.msra.mxu0 0.0
        %2362 = vmatprep.subr.mxu0 0.0
        %2363 = vmatpush1.msra.mxu0 0.0
        %2364 = vmatprep.subr.mxu0 0.0
        %2365 = vmatpush1.msra.mxu0 0.0
        %2366 = vmatprep.subr.mxu0 0.0
        %2367 = vmatpush1.msra.mxu0 0.0
        %2368 = vmatprep.subr.mxu0 0.0
        %2369 = vmatpush1.msra.mxu0 0.0
        %2370 = vmatprep.mubr.f32.mxu0 0.0
        %v2371 = vand.u32 %v273, 4294901760
        %2372 = vmatmul.mubr.f32.gmra.mrb[0].mxu0 %v2371
        %v2373 = vpop.f32.mrb[0].mxu0
        %v2374 = vadd.f32 %v2281, %v2373
        %v2375 = vpop.f32.mrb[0].mxu0
        %2376 = vmatprep.mubr.f32.mxu0 0.0
        %v2377 = vand.u32 %v276, 4294901760
        %2378 = vmatmul.mubr.f32.gmra.mrb[0].mxu0 %v2377
        %v2379 = vpop.f32.mrb[0].mxu0
        %v2380 = vadd.f32 %v2289, %v2379
        %v2381 = vpop.f32.mrb[0].mxu0
        %2382 = vmatprep.mubr.f32.mxu0 0.0
        %v2383 = vand.u32 %v279, 4294901760
        %2384 = vmatmul.mubr.f32.gmra.mrb[0].mxu0 %v2383
        %v2385 = vpop.f32.mrb[0].mxu0
        %v2386 = vadd.f32 %v2297, %v2385
        %v2387 = vpop.f32.mrb[0].mxu0
        %2388 = vdwg.mxu0
        %2389 = vmatprep.subr.mxu0 0.0
        %v2390 = vand.u32 %v266, 4294901760
        %2391 = vmatpush1.msra.mxu0 %v2390
        %2392 = vmatprep.subr.mxu0 0.0
        %v2393 = vand.u32 %v1927, 4294901760
        %2394 = vmatpush1.msra.mxu0 %v2393
        %2395 = vmatprep.subr.mxu0 0.0
        %2396 = vmatpush1.msra.mxu0 0.0
        %2397 = vmatprep.subr.mxu0 0.0
        %2398 = vmatpush1.msra.mxu0 0.0
        %2399 = vmatprep.subr.mxu0 0.0
        %2400 = vmatpush1.msra.mxu0 0.0
        %2401 = vmatprep.subr.mxu0 0.0
        %2402 = vmatpush1.msra.mxu0 0.0
        %2403 = vmatprep.subr.mxu0 0.0
        %2404 = vmatpush1.msra.mxu0 0.0
        %2405 = vmatprep.subr.mxu0 0.0
        %2406 = vmatpush1.msra.mxu0 0.0
        %2407 = vmatprep.subr.mxu0 0.0
        %2408 = vmatpush1.msra.mxu0 0.0
        %2409 = vmatprep.subr.mxu0 0.0
        %2410 = vmatpush1.msra.mxu0 0.0
        %2411 = vmatprep.subr.mxu0 0.0
        %2412 = vmatpush1.msra.mxu0 0.0
        %2413 = vmatprep.subr.mxu0 0.0
        %2414 = vmatpush1.msra.mxu0 0.0
        %2415 = vmatprep.subr.mxu0 0.0
        %2416 = vmatpush1.msra.mxu0 0.0
        %2417 = vmatprep.subr.mxu0 0.0
        %2418 = vmatpush1.msra.mxu0 0.0
        %2419 = vmatprep.subr.mxu0 0.0
        %2420 = vmatpush1.msra.mxu0 0.0
        %2421 = vmatprep.subr.mxu0 0.0
        %2422 = vmatpush1.msra.mxu0 0.0
        %2423 = vmatprep.subr.mxu0 0.0
        %2424 = vmatpush1.msra.mxu0 0.0
        %2425 = vmatprep.subr.mxu0 0.0
        %2426 = vmatpush1.msra.mxu0 0.0
        %2427 = vmatprep.subr.mxu0 0.0
        %2428 = vmatpush1.msra.mxu0 0.0
        %2429 = vmatprep.subr.mxu0 0.0
        %2430 = vmatpush1.msra.mxu0 0.0
        %2431 = vmatprep.subr.mxu0 0.0
        %2432 = vmatpush1.msra.mxu0 0.0
        %2433 = vmatprep.subr.mxu0 0.0
        %2434 = vmatpush1.msra.mxu0 0.0
        %2435 = vmatprep.subr.mxu0 0.0
        %2436 = vmatpush1.msra.mxu0 0.0
        %2437 = vmatprep.subr.mxu0 0.0
        %2438 = vmatpush1.msra.mxu0 0.0
        %2439 = vmatprep.subr.mxu0 0.0
        %2440 = vmatpush1.msra.mxu0 0.0
        %2441 = vmatprep.subr.mxu0 0.0
        %2442 = vmatpush1.msra.mxu0 0.0
        %2443 = vmatprep.subr.mxu0 0.0
        %2444 = vmatpush1.msra.mxu0 0.0
        %2445 = vmatprep.subr.mxu0 0.0
        %2446 = vmatpush1.msra.mxu0 0.0
        %2447 = vmatprep.subr.mxu0 0.0
        %2448 = vmatpush1.msra.mxu0 0.0
        %2449 = vmatprep.subr.mxu0 0.0
        %2450 = vmatpush1.msra.mxu0 0.0
        %2451 = vmatprep.subr.mxu0 0.0
        %2452 = vmatpush1.msra.mxu0 0.0
        %2453 = vmatprep.subr.mxu0 0.0
        %2454 = vmatpush1.msra.mxu0 0.0
        %2455 = vmatprep.mubr.f32.mxu0 0.0
        %v2456 = vand.u32 %v273, 4294901760
        %2457 = vmatmul.mubr.f32.gmra.mrb[0].mxu0 %v2456
        %v2458 = vpop.f32.mrb[0].mxu0
        %v2459 = vadd.f32 %v2374, %v2458
        %v2460 = vpop.f32.mrb[0].mxu0
        %2461 = vmatprep.mubr.f32.mxu0 0.0
        %v2462 = vand.u32 %v276, 4294901760
        %2463 = vmatmul.mubr.f32.gmra.mrb[0].mxu0 %v2462
        %v2464 = vpop.f32.mrb[0].mxu0
        %v2465 = vadd.f32 %v2380, %v2464
        %v2466 = vpop.f32.mrb[0].mxu0
        %2467 = vmatprep.mubr.f32.mxu0 0.0
        %v2468 = vand.u32 %v279, 4294901760
        %2469 = vmatmul.mubr.f32.gmra.mrb[0].mxu0 %v2468
        %v2470 = vpop.f32.mrb[0].mxu0
        %v2471 = vadd.f32 %v2386, %v2470
        %v2472 = vpop.f32.mrb[0].mxu0
        %2473 = vdwg.mxu0
        %2482 = vrot.lane.b32.xlu0 %v815, 127
        %v2483 = vpop.permute.xlu0 %2482
        %2484 = vrot.lane.b32.xlu0 %v821, 127
        %v2485 = vpop.permute.xlu0 %2484
        %2486 = vrot.lane.b32.xlu0 %v1363, 127
        %v2487 = vpop.permute.xlu0 %2486
        %2488 = vrot.lane.b32.xlu0 %v1369, 127
        %v2489 = vpop.permute.xlu0 %2488
        %2490 = vrot.lane.b32.xlu0 %v1911, 127
        %v2491 = vpop.permute.xlu0 %2490
        %2492 = vrot.lane.b32.xlu0 %v1917, 127
        %v2493 = vpop.permute.xlu0 %2492
        %2494 = vrot.lane.b32.xlu0 %v2459, 127
        %v2495 = vpop.permute.xlu0 %2494
        %2496 = vrot.lane.b32.xlu0 %v2465, 127
        %v2497 = vpop.permute.xlu0 %2496
        %2506 = vrot.lane.b32.xlu0 %v815, 126
        %v2507 = vpop.permute.xlu0 %2506
        %2508 = vrot.lane.b32.xlu0 %v821, 126
        %v2509 = vpop.permute.xlu0 %2508
        %2510 = vrot.lane.b32.xlu0 %v1363, 126
        %v2511 = vpop.permute.xlu0 %2510
        %2512 = vrot.lane.b32.xlu0 %v1369, 126
        %v2513 = vpop.permute.xlu0 %2512
        %2514 = vrot.lane.b32.xlu0 %v1911, 126
        %v2515 = vpop.permute.xlu0 %2514
        %2516 = vrot.lane.b32.xlu0 %v1917, 126
        %v2517 = vpop.permute.xlu0 %2516
        %2518 = vrot.lane.b32.xlu0 %v2459, 126
        %v2519 = vpop.permute.xlu0 %2518
        %2520 = vrot.lane.b32.xlu0 %v2465, 126
        %v2521 = vpop.permute.xlu0 %2520
        %vm2534 = vcmask 1046528
        %v2535 = vrot.slane %v815, 1
        %v2536 = vrot.slane %v821, 1
        %v2537 = vsel %vm2534, %v2535, %v2536
        %v2538 = vrot.slane %v827, 1
        %v2539 = vsel %vm2534, %v2536, %v2538
        %v2540 = vrot.slane %v1363, 1
        %v2541 = vrot.slane %v1369, 1
        %v2542 = vsel %vm2534, %v2540, %v2541
        %v2543 = vrot.slane %v1375, 1
        %v2544 = vsel %vm2534, %v2541, %v2543
        %v2545 = vrot.slane %v1911, 1
        %v2546 = vrot.slane %v1917, 1
        %v2547 = vsel %vm2534, %v2545, %v2546
        %v2548 = vrot.slane %v1923, 1
        %v2549 = vsel %vm2534, %v2546, %v2548
        %v2550 = vrot.slane %v2459, 1
        %v2551 = vrot.slane %v2465, 1
        %v2552 = vsel %vm2534, %v2550, %v2551
        %v2553 = vrot.slane %v2471, 1
        %v2554 = vsel %vm2534, %v2551, %v2553
        %2563 = vrot.lane.b32.xlu0 %v2537, 127
        %v2564 = vpop.permute.xlu0 %2563
        %2565 = vrot.lane.b32.xlu0 %v2539, 127
        %v2566 = vpop.permute.xlu0 %2565
        %2567 = vrot.lane.b32.xlu0 %v2542, 127
        %v2568 = vpop.permute.xlu0 %2567
        %2569 = vrot.lane.b32.xlu0 %v2544, 127
        %v2570 = vpop.permute.xlu0 %2569
        %2571 = vrot.lane.b32.xlu0 %v2547, 127
        %v2572 = vpop.permute.xlu0 %2571
        %2573 = vrot.lane.b32.xlu0 %v2549, 127
        %v2574 = vpop.permute.xlu0 %2573
        %2575 = vrot.lane.b32.xlu0 %v2552, 127
        %v2576 = vpop.permute.xlu0 %2575
        %2577 = vrot.lane.b32.xlu0 %v2554, 127
        %v2578 = vpop.permute.xlu0 %2577
        %2587 = vrot.lane.b32.xlu0 %v2537, 126
        %v2588 = vpop.permute.xlu0 %2587
        %2589 = vrot.lane.b32.xlu0 %v2539, 126
        %v2590 = vpop.permute.xlu0 %2589
        %2591 = vrot.lane.b32.xlu0 %v2542, 126
        %v2592 = vpop.permute.xlu0 %2591
        %2593 = vrot.lane.b32.xlu0 %v2544, 126
        %v2594 = vpop.permute.xlu0 %2593
        %2595 = vrot.lane.b32.xlu0 %v2547, 126
        %v2596 = vpop.permute.xlu0 %2595
        %2597 = vrot.lane.b32.xlu0 %v2549, 126
        %v2598 = vpop.permute.xlu0 %2597
        %2599 = vrot.lane.b32.xlu0 %v2552, 126
        %v2600 = vpop.permute.xlu0 %2599
        %2601 = vrot.lane.b32.xlu0 %v2554, 126
        %v2602 = vpop.permute.xlu0 %2601
        %vm2611 = vcmask 1045504
        %v2612 = vrot.slane %v815, 2
        %v2613 = vrot.slane %v821, 2
        %v2614 = vsel %vm2611, %v2612, %v2613
        %v2615 = vrot.slane %v827, 2
        %v2616 = vsel %vm2611, %v2613, %v2615
        %v2617 = vrot.slane %v1363, 2
        %v2618 = vrot.slane %v1369, 2
        %v2619 = vsel %vm2611, %v2617, %v2618
        %v2620 = vrot.slane %v1375, 2
        %v2621 = vsel %vm2611, %v2618, %v2620
        %v2622 = vrot.slane %v1911, 2
        %v2623 = vrot.slane %v1917, 2
        %v2624 = vsel %vm2611, %v2622, %v2623
        %v2625 = vrot.slane %v1923, 2
        %v2626 = vsel %vm2611, %v2623, %v2625
        %v2627 = vrot.slane %v2459, 2
        %v2628 = vrot.slane %v2465, 2
        %v2629 = vsel %vm2611, %v2627, %v2628
        %v2630 = vrot.slane %v2471, 2
        %v2631 = vsel %vm2611, %v2628, %v2630
        %2640 = vrot.lane.b32.xlu0 %v2614, 127
        %v2641 = vpop.permute.xlu0 %2640
        %2642 = vrot.lane.b32.xlu0 %v2616, 127
        %v2643 = vpop.permute.xlu0 %2642
        %2644 = vrot.lane.b32.xlu0 %v2619, 127
        %v2645 = vpop.permute.xlu0 %2644
        %2646 = vrot.lane.b32.xlu0 %v2621, 127
        %v2647 = vpop.permute.xlu0 %2646
        %2648 = vrot.lane.b32.xlu0 %v2624, 127
        %v2649 = vpop.permute.xlu0 %2648
        %2650 = vrot.lane.b32.xlu0 %v2626, 127
        %v2651 = vpop.permute.xlu0 %2650
        %2652 = vrot.lane.b32.xlu0 %v2629, 127
        %v2653 = vpop.permute.xlu0 %2652
        %2654 = vrot.lane.b32.xlu0 %v2631, 127
        %v2655 = vpop.permute.xlu0 %2654
        %2664 = vrot.lane.b32.xlu0 %v2614, 126
        %v2665 = vpop.permute.xlu0 %2664
        %2666 = vrot.lane.b32.xlu0 %v2616, 126
        %v2667 = vpop.permute.xlu0 %2666
        %2668 = vrot.lane.b32.xlu0 %v2619, 126
        %v2669 = vpop.permute.xlu0 %2668
        %2670 = vrot.lane.b32.xlu0 %v2621, 126
        %v2671 = vpop.permute.xlu0 %2670
        %2672 = vrot.lane.b32.xlu0 %v2624, 126
        %v2673 = vpop.permute.xlu0 %2672
        %2674 = vrot.lane.b32.xlu0 %v2626, 126
        %v2675 = vpop.permute.xlu0 %2674
        %2676 = vrot.lane.b32.xlu0 %v2629, 126
        %v2677 = vpop.permute.xlu0 %2676
        %2678 = vrot.lane.b32.xlu0 %v2631, 126
        %v2679 = vpop.permute.xlu0 %2678
        %v2688 = vld [vmem:[%s3] sm:$0xff]
        %v2689 = vld [vmem:[%s4] sm:$0xff]
        %v2691 = vcombine.high %v2689, %v2689
        %v2693 = vunpack.c.l.s4 1966171168
        %v2694 = vunpack.c.0.s8 %v2693
        %v2695 = vlaneseq
        %v2696 = vshrl.u32 %v2695, 7
        %v2697 = vsub.s32 %v2694, %v2696
        %v2698 = vrot.slane %v2689, %v2697
        %v2700 = vunpack.c.l.s4 1966171168
        %v2701 = vunpack.c.0.s8 %v2700
        %v2702 = vlaneseq
        %v2703 = vshrl.u32 %v2702, 7
        %v2704 = vsub.s32 %v2701, %v2703
        %v2705 = vrot.slane %v2691, %v2704
        %v2706 = vcombine.high %v2698, %v2698
        %v2707 = vcombine.high %v2705, %v2705
        %v2709 = vunpack.c.l.s4 1966171168
        %v2710 = vunpack.c.0.s8 %v2709
        %v2711 = vlaneseq
        %v2712 = vshrl.u32 %v2711, 7
        %v2713 = vsub.s32 %v2710, %v2712
        %v2714 = vrot.slane %v2698, %v2713
        %v2716 = vunpack.c.l.s4 1966171168
        %v2717 = vunpack.c.0.s8 %v2716
        %v2718 = vlaneseq
        %v2719 = vshrl.u32 %v2718, 7
        %v2720 = vsub.s32 %v2717, %v2719
        %v2721 = vrot.slane %v2705, %v2720
        %v2723 = vunpack.c.l.s4 1966171168
        %v2724 = vunpack.c.0.s8 %v2723
        %v2725 = vlaneseq
        %v2726 = vshrl.u32 %v2725, 7
        %v2727 = vsub.s32 %v2724, %v2726
        %v2728 = vrot.slane %v2706, %v2727
        %v2730 = vunpack.c.l.s4 1966171168
        %v2731 = vunpack.c.0.s8 %v2730
        %v2732 = vlaneseq
        %v2733 = vshrl.u32 %v2732, 7
        %v2734 = vsub.s32 %v2731, %v2733
        %v2735 = vrot.slane %v2707, %v2734
        %v2736 = vcombine.high %v2714, %v2714
        %v2737 = vcombine.high %v2721, %v2721
        %v2738 = vcombine.high %v2728, %v2728
        %v2739 = vcombine.high %v2735, %v2735
        %v2740 = vlaneseq
        %v2741 = vshrl.u32 %v2740, 7
        %v2742 = vsub.s32 0, %v2741
        %v2743 = vrot.slane %v2714, %v2742
        %v2744 = vlaneseq
        %v2745 = vshrl.u32 %v2744, 7
        %v2746 = vsub.s32 0, %v2745
        %v2747 = vrot.slane %v2728, %v2746
        %v2748 = vlaneseq
        %v2749 = vshrl.u32 %v2748, 7
        %v2750 = vsub.s32 0, %v2749
        %v2751 = vrot.slane %v2736, %v2750
        %v2752 = vlaneseq
        %v2753 = vshrl.u32 %v2752, 7
        %v2754 = vsub.s32 0, %v2753
        %v2755 = vrot.slane %v2738, %v2754
        %v2756 = vlaneseq
        %v2757 = vshrl.u32 %v2756, 7
        %v2758 = vsub.s32 0, %v2757
        %v2759 = vrot.slane %v2721, %v2758
        %v2760 = vlaneseq
        %v2761 = vshrl.u32 %v2760, 7
        %v2762 = vsub.s32 0, %v2761
        %v2763 = vrot.slane %v2735, %v2762
        %v2764 = vlaneseq
        %v2765 = vshrl.u32 %v2764, 7
        %v2766 = vsub.s32 0, %v2765
        %v2767 = vrot.slane %v2737, %v2766
        %v2768 = vlaneseq
        %v2769 = vshrl.u32 %v2768, 7
        %v2770 = vsub.s32 0, %v2769
        %v2771 = vrot.slane %v2739, %v2770
        %2772 = vset.pattern.permute.xlu0 0
        %2773 = vperm.xlu0 %2772, %v2743
        %v2774 = vpop.permute.xlu0 %2773
        %2776 = vset.pattern.permute.xlu0 0
        %2777 = vperm.xlu0 %2776, %v2747
        %v2778 = vpop.permute.xlu0 %2777
        %2780 = vset.pattern.permute.xlu0 0
        %2781 = vperm.xlu0 %2780, %v2751
        %v2782 = vpop.permute.xlu0 %2781
        %2784 = vset.pattern.permute.xlu0 0
        %2785 = vperm.xlu0 %2784, %v2755
        %v2786 = vpop.permute.xlu0 %2785
        %2788 = vset.pattern.permute.xlu0 0
        %2789 = vperm.xlu0 %2788, %v2759
        %v2790 = vpop.permute.xlu0 %2789
        %2792 = vset.pattern.permute.xlu0 0
        %2793 = vperm.xlu0 %2792, %v2763
        %v2794 = vpop.permute.xlu0 %2793
        %2796 = vset.pattern.permute.xlu0 0
        %2797 = vperm.xlu0 %2796, %v2767
        %v2798 = vpop.permute.xlu0 %2797
        %2800 = vset.pattern.permute.xlu0 0
        %2801 = vperm.xlu0 %2800, %v2771
        %v2802 = vpop.permute.xlu0 %2801
        %v2804 = vcombine.low %v815, %v1911
        %v2805 = vcombine.high %v815, %v1911
        %v2807 = vunpack.c.l.s4 1983009808
        %v2808 = vunpack.c.0.s8 %v2807
        %v2809 = vlaneseq
        %v2810 = vshrl.u32 %v2809, 7
        %v2811 = vsub.s32 %v2808, %v2810
        %v2812 = vrot.slane %v2804, %v2811
        %v2814 = vunpack.c.l.s4 1983009808
        %v2815 = vunpack.c.0.s8 %v2814
        %v2816 = vlaneseq
        %v2817 = vshrl.u32 %v2816, 7
        %v2818 = vsub.s32 %v2815, %v2817
        %v2819 = vrot.slane %v2805, %v2818
        %v2820 = vcombine.low %v1363, %v2459
        %v2821 = vcombine.high %v1363, %v2459
        %v2823 = vunpack.c.l.s4 1983009808
        %v2824 = vunpack.c.0.s8 %v2823
        %v2825 = vlaneseq
        %v2826 = vshrl.u32 %v2825, 7
        %v2827 = vsub.s32 %v2824, %v2826
        %v2828 = vrot.slane %v2820, %v2827
        %v2830 = vunpack.c.l.s4 1983009808
        %v2831 = vunpack.c.0.s8 %v2830
        %v2832 = vlaneseq
        %v2833 = vshrl.u32 %v2832, 7
        %v2834 = vsub.s32 %v2831, %v2833
        %v2835 = vrot.slane %v2821, %v2834
        %v2836 = vcombine.low %v2483, %v2491
        %v2837 = vcombine.high %v2483, %v2491
        %v2839 = vunpack.c.l.s4 1983009808
        %v2840 = vunpack.c.0.s8 %v2839
        %v2841 = vlaneseq
        %v2842 = vshrl.u32 %v2841, 7
        %v2843 = vsub.s32 %v2840, %v2842
        %v2844 = vrot.slane %v2836, %v2843
        %v2846 = vunpack.c.l.s4 1983009808
        %v2847 = vunpack.c.0.s8 %v2846
        %v2848 = vlaneseq
        %v2849 = vshrl.u32 %v2848, 7
        %v2850 = vsub.s32 %v2847, %v2849
        %v2851 = vrot.slane %v2837, %v2850
        %v2852 = vcombine.low %v2487, %v2495
        %v2853 = vcombine.high %v2487, %v2495
        %v2855 = vunpack.c.l.s4 1983009808
        %v2856 = vunpack.c.0.s8 %v2855
        %v2857 = vlaneseq
        %v2858 = vshrl.u32 %v2857, 7
        %v2859 = vsub.s32 %v2856, %v2858
        %v2860 = vrot.slane %v2852, %v2859
        %v2862 = vunpack.c.l.s4 1983009808
        %v2863 = vunpack.c.0.s8 %v2862
        %v2864 = vlaneseq
        %v2865 = vshrl.u32 %v2864, 7
        %v2866 = vsub.s32 %v2863, %v2865
        %v2867 = vrot.slane %v2853, %v2866
        %v2868 = vcombine.low %v2812, %v2828
        %v2869 = vcombine.high %v2812, %v2828
        %v2871 = vunpack.c.l.s4 1934713408
        %v2872 = vunpack.c.0.s8 %v2871
        %v2873 = vlaneseq
        %v2874 = vshrl.u32 %v2873, 7
        %v2875 = vsub.s32 %v2872, %v2874
        %v2876 = vrot.slane %v2868, %v2875
        %v2878 = vunpack.c.l.s4 1934713408
        %v2879 = vunpack.c.0.s8 %v2878
        %v2880 = vlaneseq
        %v2881 = vshrl.u32 %v2880, 7
        %v2882 = vsub.s32 %v2879, %v2881
        %v2883 = vrot.slane %v2869, %v2882
        %v2884 = vcombine.low %v2819, %v2835
        %v2885 = vcombine.high %v2819, %v2835
        %v2887 = vunpack.c.l.s4 1934713408
        %v2888 = vunpack.c.0.s8 %v2887
        %v2889 = vlaneseq
        %v2890 = vshrl.u32 %v2889, 7
        %v2891 = vsub.s32 %v2888, %v2890
        %v2892 = vrot.slane %v2884, %v2891
        %v2894 = vunpack.c.l.s4 1934713408
        %v2895 = vunpack.c.0.s8 %v2894
        %v2896 = vlaneseq
        %v2897 = vshrl.u32 %v2896, 7
        %v2898 = vsub.s32 %v2895, %v2897
        %v2899 = vrot.slane %v2885, %v2898
        %v2900 = vcombine.low %v2844, %v2860
        %v2901 = vcombine.high %v2844, %v2860
        %v2903 = vunpack.c.l.s4 1934713408
        %v2904 = vunpack.c.0.s8 %v2903
        %v2905 = vlaneseq
        %v2906 = vshrl.u32 %v2905, 7
        %v2907 = vsub.s32 %v2904, %v2906
        %v2908 = vrot.slane %v2900, %v2907
        %v2910 = vunpack.c.l.s4 1934713408
        %v2911 = vunpack.c.0.s8 %v2910
        %v2912 = vlaneseq
        %v2913 = vshrl.u32 %v2912, 7
        %v2914 = vsub.s32 %v2911, %v2913
        %v2915 = vrot.slane %v2901, %v2914
        %v2916 = vcombine.low %v2851, %v2867
        %v2917 = vcombine.high %v2851, %v2867
        %v2919 = vunpack.c.l.s4 1934713408
        %v2920 = vunpack.c.0.s8 %v2919
        %v2921 = vlaneseq
        %v2922 = vshrl.u32 %v2921, 7
        %v2923 = vsub.s32 %v2920, %v2922
        %v2924 = vrot.slane %v2916, %v2923
        %v2926 = vunpack.c.l.s4 1934713408
        %v2927 = vunpack.c.0.s8 %v2926
        %v2928 = vlaneseq
        %v2929 = vshrl.u32 %v2928, 7
        %v2930 = vsub.s32 %v2927, %v2929
        %v2931 = vrot.slane %v2917, %v2930
        %v2932 = vcombine.low %v2876, %v2908
        %v2933 = vcombine.high %v2876, %v2908
        %v2934 = vcombine.low %v2883, %v2915
        %v2935 = vcombine.high %v2883, %v2915
        %v2936 = vcombine.low %v2892, %v2924
        %v2937 = vcombine.high %v2892, %v2924
        %v2938 = vcombine.low %v2899, %v2931
        %v2939 = vcombine.high %v2899, %v2931
        %v2940 = vcombine.low %v2507, %v2515
        %v2941 = vcombine.high %v2507, %v2515
        %v2943 = vunpack.c.l.s4 1983009808
        %v2944 = vunpack.c.0.s8 %v2943
        %v2945 = vlaneseq
        %v2946 = vshrl.u32 %v2945, 7
        %v2947 = vsub.s32 %v2944, %v2946
        %v2948 = vrot.slane %v2940, %v2947
        %v2950 = vunpack.c.l.s4 1983009808
        %v2951 = vunpack.c.0.s8 %v2950
        %v2952 = vlaneseq
        %v2953 = vshrl.u32 %v2952, 7
        %v2954 = vsub.s32 %v2951, %v2953
        %v2955 = vrot.slane %v2941, %v2954
        %v2956 = vcombine.low %v2511, %v2519
        %v2957 = vcombine.high %v2511, %v2519
        %v2959 = vunpack.c.l.s4 1983009808
        %v2960 = vunpack.c.0.s8 %v2959
        %v2961 = vlaneseq
        %v2962 = vshrl.u32 %v2961, 7
        %v2963 = vsub.s32 %v2960, %v2962
        %v2964 = vrot.slane %v2956, %v2963
        %v2966 = vunpack.c.l.s4 1983009808
        %v2967 = vunpack.c.0.s8 %v2966
        %v2968 = vlaneseq
        %v2969 = vshrl.u32 %v2968, 7
        %v2970 = vsub.s32 %v2967, %v2969
        %v2971 = vrot.slane %v2957, %v2970
        %v2972 = vcombine.low %v2537, %v2547
        %v2973 = vcombine.high %v2537, %v2547
        %v2975 = vunpack.c.l.s4 1983009808
        %v2976 = vunpack.c.0.s8 %v2975
        %v2977 = vlaneseq
        %v2978 = vshrl.u32 %v2977, 7
        %v2979 = vsub.s32 %v2976, %v2978
        %v2980 = vrot.slane %v2972, %v2979
        %v2982 = vunpack.c.l.s4 1983009808
        %v2983 = vunpack.c.0.s8 %v2982
        %v2984 = vlaneseq
        %v2985 = vshrl.u32 %v2984, 7
        %v2986 = vsub.s32 %v2983, %v2985
        %v2987 = vrot.slane %v2973, %v2986
        %v2988 = vcombine.low %v2542, %v2552
        %v2989 = vcombine.high %v2542, %v2552
        %v2991 = vunpack.c.l.s4 1983009808
        %v2992 = vunpack.c.0.s8 %v2991
        %v2993 = vlaneseq
        %v2994 = vshrl.u32 %v2993, 7
        %v2995 = vsub.s32 %v2992, %v2994
        %v2996 = vrot.slane %v2988, %v2995
        %v2998 = vunpack.c.l.s4 1983009808
        %v2999 = vunpack.c.0.s8 %v2998
        %v3000 = vlaneseq
        %v3001 = vshrl.u32 %v3000, 7
        %v3002 = vsub.s32 %v2999, %v3001
        %v3003 = vrot.slane %v2989, %v3002
        %v3004 = vcombine.low %v2948, %v2964
        %v3005 = vcombine.high %v2948, %v2964
        %v3007 = vunpack.c.l.s4 1934713408
        %v3008 = vunpack.c.0.s8 %v3007
        %v3009 = vlaneseq
        %v3010 = vshrl.u32 %v3009, 7
        %v3011 = vsub.s32 %v3008, %v3010
        %v3012 = vrot.slane %v3004, %v3011
        %v3014 = vunpack.c.l.s4 1934713408
        %v3015 = vunpack.c.0.s8 %v3014
        %v3016 = vlaneseq
        %v3017 = vshrl.u32 %v3016, 7
        %v3018 = vsub.s32 %v3015, %v3017
        %v3019 = vrot.slane %v3005, %v3018
        %v3020 = vcombine.low %v2955, %v2971
        %v3021 = vcombine.high %v2955, %v2971
        %v3023 = vunpack.c.l.s4 1934713408
        %v3024 = vunpack.c.0.s8 %v3023
        %v3025 = vlaneseq
        %v3026 = vshrl.u32 %v3025, 7
        %v3027 = vsub.s32 %v3024, %v3026
        %v3028 = vrot.slane %v3020, %v3027
        %v3030 = vunpack.c.l.s4 1934713408
        %v3031 = vunpack.c.0.s8 %v3030
        %v3032 = vlaneseq
        %v3033 = vshrl.u32 %v3032, 7
        %v3034 = vsub.s32 %v3031, %v3033
        %v3035 = vrot.slane %v3021, %v3034
        %v3036 = vcombine.low %v2980, %v2996
        %v3037 = vcombine.high %v2980, %v2996
        %v3039 = vunpack.c.l.s4 1934713408
        %v3040 = vunpack.c.0.s8 %v3039
        %v3041 = vlaneseq
        %v3042 = vshrl.u32 %v3041, 7
        %v3043 = vsub.s32 %v3040, %v3042
        %v3044 = vrot.slane %v3036, %v3043
        %v3046 = vunpack.c.l.s4 1934713408
        %v3047 = vunpack.c.0.s8 %v3046
        %v3048 = vlaneseq
        %v3049 = vshrl.u32 %v3048, 7
        %v3050 = vsub.s32 %v3047, %v3049
        %v3051 = vrot.slane %v3037, %v3050
        %v3052 = vcombine.low %v2987, %v3003
        %v3053 = vcombine.high %v2987, %v3003
        %v3055 = vunpack.c.l.s4 1934713408
        %v3056 = vunpack.c.0.s8 %v3055
        %v3057 = vlaneseq
        %v3058 = vshrl.u32 %v3057, 7
        %v3059 = vsub.s32 %v3056, %v3058
        %v3060 = vrot.slane %v3052, %v3059
        %v3062 = vunpack.c.l.s4 1934713408
        %v3063 = vunpack.c.0.s8 %v3062
        %v3064 = vlaneseq
        %v3065 = vshrl.u32 %v3064, 7
        %v3066 = vsub.s32 %v3063, %v3065
        %v3067 = vrot.slane %v3053, %v3066
        %v3068 = vcombine.low %v3012, %v3044
        %v3069 = vcombine.high %v3012, %v3044
        %v3070 = vcombine.low %v3019, %v3051
        %v3071 = vcombine.high %v3019, %v3051
        %v3072 = vcombine.low %v3028, %v3060
        %v3073 = vcombine.high %v3028, %v3060
        %v3074 = vcombine.low %v3035, %v3067
        %v3075 = vcombine.high %v3035, %v3067
        %v3076 = vcombine.low %v2564, %v2572
        %v3077 = vcombine.high %v2564, %v2572
        %v3079 = vunpack.c.l.s4 1983009808
        %v3080 = vunpack.c.0.s8 %v3079
        %v3081 = vlaneseq
        %v3082 = vshrl.u32 %v3081, 7
        %v3083 = vsub.s32 %v3080, %v3082
        %v3084 = vrot.slane %v3076, %v3083
        %v3086 = vunpack.c.l.s4 1983009808
        %v3087 = vunpack.c.0.s8 %v3086
        %v3088 = vlaneseq
        %v3089 = vshrl.u32 %v3088, 7
        %v3090 = vsub.s32 %v3087, %v3089
        %v3091 = vrot.slane %v3077, %v3090
        %v3092 = vcombine.low %v2568, %v2576
        %v3093 = vcombine.high %v2568, %v2576
        %v3095 = vunpack.c.l.s4 1983009808
        %v3096 = vunpack.c.0.s8 %v3095
        %v3097 = vlaneseq
        %v3098 = vshrl.u32 %v3097, 7
        %v3099 = vsub.s32 %v3096, %v3098
        %v3100 = vrot.slane %v3092, %v3099
        %v3102 = vunpack.c.l.s4 1983009808
        %v3103 = vunpack.c.0.s8 %v3102
        %v3104 = vlaneseq
        %v3105 = vshrl.u32 %v3104, 7
        %v3106 = vsub.s32 %v3103, %v3105
        %v3107 = vrot.slane %v3093, %v3106
        %v3108 = vcombine.low %v2588, %v2596
        %v3109 = vcombine.high %v2588, %v2596
        %v3111 = vunpack.c.l.s4 1983009808
        %v3112 = vunpack.c.0.s8 %v3111
        %v3113 = vlaneseq
        %v3114 = vshrl.u32 %v3113, 7
        %v3115 = vsub.s32 %v3112, %v3114
        %v3116 = vrot.slane %v3108, %v3115
        %v3118 = vunpack.c.l.s4 1983009808
        %v3119 = vunpack.c.0.s8 %v3118
        %v3120 = vlaneseq
        %v3121 = vshrl.u32 %v3120, 7
        %v3122 = vsub.s32 %v3119, %v3121
        %v3123 = vrot.slane %v3109, %v3122
        %v3124 = vcombine.low %v2592, %v2600
        %v3125 = vcombine.high %v2592, %v2600
        %v3127 = vunpack.c.l.s4 1983009808
        %v3128 = vunpack.c.0.s8 %v3127
        %v3129 = vlaneseq
        %v3130 = vshrl.u32 %v3129, 7
        %v3131 = vsub.s32 %v3128, %v3130
        %v3132 = vrot.slane %v3124, %v3131
        %v3134 = vunpack.c.l.s4 1983009808
        %v3135 = vunpack.c.0.s8 %v3134
        %v3136 = vlaneseq
        %v3137 = vshrl.u32 %v3136, 7
        %v3138 = vsub.s32 %v3135, %v3137
        %v3139 = vrot.slane %v3125, %v3138
        %v3140 = vcombine.low %v3084, %v3100
        %v3141 = vcombine.high %v3084, %v3100
        %v3143 = vunpack.c.l.s4 1934713408
        %v3144 = vunpack.c.0.s8 %v3143
        %v3145 = vlaneseq
        %v3146 = vshrl.u32 %v3145, 7
        %v3147 = vsub.s32 %v3144, %v3146
        %v3148 = vrot.slane %v3140, %v3147
        %v3150 = vunpack.c.l.s4 1934713408
        %v3151 = vunpack.c.0.s8 %v3150
        %v3152 = vlaneseq
        %v3153 = vshrl.u32 %v3152, 7
        %v3154 = vsub.s32 %v3151, %v3153
        %v3155 = vrot.slane %v3141, %v3154
        %v3156 = vcombine.low %v3091, %v3107
        %v3157 = vcombine.high %v3091, %v3107
        %v3159 = vunpack.c.l.s4 1934713408
        %v3160 = vunpack.c.0.s8 %v3159
        %v3161 = vlaneseq
        %v3162 = vshrl.u32 %v3161, 7
        %v3163 = vsub.s32 %v3160, %v3162
        %v3164 = vrot.slane %v3156, %v3163
        %v3166 = vunpack.c.l.s4 1934713408
        %v3167 = vunpack.c.0.s8 %v3166
        %v3168 = vlaneseq
        %v3169 = vshrl.u32 %v3168, 7
        %v3170 = vsub.s32 %v3167, %v3169
        %v3171 = vrot.slane %v3157, %v3170
        %v3172 = vcombine.low %v3116, %v3132
        %v3173 = vcombine.high %v3116, %v3132
        %v3175 = vunpack.c.l.s4 1934713408
        %v3176 = vunpack.c.0.s8 %v3175
        %v3177 = vlaneseq
        %v3178 = vshrl.u32 %v3177, 7
        %v3179 = vsub.s32 %v3176, %v3178
        %v3180 = vrot.slane %v3172, %v3179
        %v3182 = vunpack.c.l.s4 1934713408
        %v3183 = vunpack.c.0.s8 %v3182
        %v3184 = vlaneseq
        %v3185 = vshrl.u32 %v3184, 7
        %v3186 = vsub.s32 %v3183, %v3185
        %v3187 = vrot.slane %v3173, %v3186
        %v3188 = vcombine.low %v3123, %v3139
        %v3189 = vcombine.high %v3123, %v3139
        %v3191 = vunpack.c.l.s4 1934713408
        %v3192 = vunpack.c.0.s8 %v3191
        %v3193 = vlaneseq
        %v3194 = vshrl.u32 %v3193, 7
        %v3195 = vsub.s32 %v3192, %v3194
        %v3196 = vrot.slane %v3188, %v3195
        %v3198 = vunpack.c.l.s4 1934713408
        %v3199 = vunpack.c.0.s8 %v3198
        %v3200 = vlaneseq
        %v3201 = vshrl.u32 %v3200, 7
        %v3202 = vsub.s32 %v3199, %v3201
        %v3203 = vrot.slane %v3189, %v3202
        %v3204 = vcombine.low %v3148, %v3180
        %v3205 = vcombine.high %v3148, %v3180
        %v3206 = vcombine.low %v3155, %v3187
        %v3207 = vcombine.high %v3155, %v3187
        %v3208 = vcombine.low %v3164, %v3196
        %v3209 = vcombine.high %v3164, %v3196
        %v3210 = vcombine.low %v3171, %v3203
        %v3211 = vcombine.high %v3171, %v3203
        %v3212 = vcombine.low %v2614, %v2624
        %v3213 = vcombine.high %v2614, %v2624
        %v3215 = vunpack.c.l.s4 1983009808
        %v3216 = vunpack.c.0.s8 %v3215
        %v3217 = vlaneseq
        %v3218 = vshrl.u32 %v3217, 7
        %v3219 = vsub.s32 %v3216, %v3218
        %v3220 = vrot.slane %v3212, %v3219
        %v3222 = vunpack.c.l.s4 1983009808
        %v3223 = vunpack.c.0.s8 %v3222
        %v3224 = vlaneseq
        %v3225 = vshrl.u32 %v3224, 7
        %v3226 = vsub.s32 %v3223, %v3225
        %v3227 = vrot.slane %v3213, %v3226
        %v3228 = vcombine.low %v2619, %v2629
        %v3229 = vcombine.high %v2619, %v2629
        %v3231 = vunpack.c.l.s4 1983009808
        %v3232 = vunpack.c.0.s8 %v3231
        %v3233 = vlaneseq
        %v3234 = vshrl.u32 %v3233, 7
        %v3235 = vsub.s32 %v3232, %v3234
        %v3236 = vrot.slane %v3228, %v3235
        %v3238 = vunpack.c.l.s4 1983009808
        %v3239 = vunpack.c.0.s8 %v3238
        %v3240 = vlaneseq
        %v3241 = vshrl.u32 %v3240, 7
        %v3242 = vsub.s32 %v3239, %v3241
        %v3243 = vrot.slane %v3229, %v3242
        %v3244 = vcombine.low %v2641, %v2649
        %v3245 = vcombine.high %v2641, %v2649
        %v3247 = vunpack.c.l.s4 1983009808
        %v3248 = vunpack.c.0.s8 %v3247
        %v3249 = vlaneseq
        %v3250 = vshrl.u32 %v3249, 7
        %v3251 = vsub.s32 %v3248, %v3250
        %v3252 = vrot.slane %v3244, %v3251
        %v3254 = vunpack.c.l.s4 1983009808
        %v3255 = vunpack.c.0.s8 %v3254
        %v3256 = vlaneseq
        %v3257 = vshrl.u32 %v3256, 7
        %v3258 = vsub.s32 %v3255, %v3257
        %v3259 = vrot.slane %v3245, %v3258
        %v3260 = vcombine.low %v2645, %v2653
        %v3261 = vcombine.high %v2645, %v2653
        %v3263 = vunpack.c.l.s4 1983009808
        %v3264 = vunpack.c.0.s8 %v3263
        %v3265 = vlaneseq
        %v3266 = vshrl.u32 %v3265, 7
        %v3267 = vsub.s32 %v3264, %v3266
        %v3268 = vrot.slane %v3260, %v3267
        %v3270 = vunpack.c.l.s4 1983009808
        %v3271 = vunpack.c.0.s8 %v3270
        %v3272 = vlaneseq
        %v3273 = vshrl.u32 %v3272, 7
        %v3274 = vsub.s32 %v3271, %v3273
        %v3275 = vrot.slane %v3261, %v3274
        %v3276 = vcombine.low %v3220, %v3236
        %v3277 = vcombine.high %v3220, %v3236
        %v3279 = vunpack.c.l.s4 1934713408
        %v3280 = vunpack.c.0.s8 %v3279
        %v3281 = vlaneseq
        %v3282 = vshrl.u32 %v3281, 7
        %v3283 = vsub.s32 %v3280, %v3282
        %v3284 = vrot.slane %v3276, %v3283
        %v3286 = vunpack.c.l.s4 1934713408
        %v3287 = vunpack.c.0.s8 %v3286
        %v3288 = vlaneseq
        %v3289 = vshrl.u32 %v3288, 7
        %v3290 = vsub.s32 %v3287, %v3289
        %v3291 = vrot.slane %v3277, %v3290
        %v3292 = vcombine.low %v3227, %v3243
        %v3293 = vcombine.high %v3227, %v3243
        %v3295 = vunpack.c.l.s4 1934713408
        %v3296 = vunpack.c.0.s8 %v3295
        %v3297 = vlaneseq
        %v3298 = vshrl.u32 %v3297, 7
        %v3299 = vsub.s32 %v3296, %v3298
        %v3300 = vrot.slane %v3292, %v3299
        %v3302 = vunpack.c.l.s4 1934713408
        %v3303 = vunpack.c.0.s8 %v3302
        %v3304 = vlaneseq
        %v3305 = vshrl.u32 %v3304, 7
        %v3306 = vsub.s32 %v3303, %v3305
        %v3307 = vrot.slane %v3293, %v3306
        %v3308 = vcombine.low %v3252, %v3268
        %v3309 = vcombine.high %v3252, %v3268
        %v3311 = vunpack.c.l.s4 1934713408
        %v3312 = vunpack.c.0.s8 %v3311
        %v3313 = vlaneseq
        %v3314 = vshrl.u32 %v3313, 7
        %v3315 = vsub.s32 %v3312, %v3314
        %v3316 = vrot.slane %v3308, %v3315
        %v3318 = vunpack.c.l.s4 1934713408
        %v3319 = vunpack.c.0.s8 %v3318
        %v3320 = vlaneseq
        %v3321 = vshrl.u32 %v3320, 7
        %v3322 = vsub.s32 %v3319, %v3321
        %v3323 = vrot.slane %v3309, %v3322
        %v3324 = vcombine.low %v3259, %v3275
        %v3325 = vcombine.high %v3259, %v3275
        %v3327 = vunpack.c.l.s4 1934713408
        %v3328 = vunpack.c.0.s8 %v3327
        %v3329 = vlaneseq
        %v3330 = vshrl.u32 %v3329, 7
        %v3331 = vsub.s32 %v3328, %v3330
        %v3332 = vrot.slane %v3324, %v3331
        %v3334 = vunpack.c.l.s4 1934713408
        %v3335 = vunpack.c.0.s8 %v3334
        %v3336 = vlaneseq
        %v3337 = vshrl.u32 %v3336, 7
        %v3338 = vsub.s32 %v3335, %v3337
        %v3339 = vrot.slane %v3325, %v3338
        %v3340 = vcombine.low %v3284, %v3316
        %v3341 = vcombine.high %v3284, %v3316
        %v3342 = vcombine.low %v3291, %v3323
        %v3343 = vcombine.high %v3291, %v3323
        %v3344 = vcombine.low %v3300, %v3332
        %v3345 = vcombine.high %v3300, %v3332
        %v3346 = vcombine.low %v3307, %v3339
        %v3347 = vcombine.high %v3307, %v3339
        %v3348 = vcombine.low %v2665, %v2673
        %v3349 = vcombine.high %v2665, %v2673
        %v3351 = vunpack.c.l.s4 1983009808
        %v3352 = vunpack.c.0.s8 %v3351
        %v3353 = vlaneseq
        %v3354 = vshrl.u32 %v3353, 7
        %v3355 = vsub.s32 %v3352, %v3354
        %v3356 = vrot.slane %v3348, %v3355
        %v3358 = vunpack.c.l.s4 1983009808
        %v3359 = vunpack.c.0.s8 %v3358
        %v3360 = vlaneseq
        %v3361 = vshrl.u32 %v3360, 7
        %v3362 = vsub.s32 %v3359, %v3361
        %v3363 = vrot.slane %v3349, %v3362
        %v3364 = vcombine.low %v2669, %v2677
        %v3365 = vcombine.high %v2669, %v2677
        %v3367 = vunpack.c.l.s4 1983009808
        %v3368 = vunpack.c.0.s8 %v3367
        %v3369 = vlaneseq
        %v3370 = vshrl.u32 %v3369, 7
        %v3371 = vsub.s32 %v3368, %v3370
        %v3372 = vrot.slane %v3364, %v3371
        %v3374 = vunpack.c.l.s4 1983009808
        %v3375 = vunpack.c.0.s8 %v3374
        %v3376 = vlaneseq
        %v3377 = vshrl.u32 %v3376, 7
        %v3378 = vsub.s32 %v3375, %v3377
        %v3379 = vrot.slane %v3365, %v3378
        %v3380 = vcombine.low %v3356, %v3372
        %v3381 = vcombine.high %v3356, %v3372
        %v3383 = vunpack.c.l.s4 1934713408
        %v3384 = vunpack.c.0.s8 %v3383
        %v3385 = vlaneseq
        %v3386 = vshrl.u32 %v3385, 7
        %v3387 = vsub.s32 %v3384, %v3386
        %v3388 = vrot.slane %v3380, %v3387
        %v3390 = vunpack.c.l.s4 1934713408
        %v3391 = vunpack.c.0.s8 %v3390
        %v3392 = vlaneseq
        %v3393 = vshrl.u32 %v3392, 7
        %v3394 = vsub.s32 %v3391, %v3393
        %v3395 = vrot.slane %v3381, %v3394
        %v3396 = vcombine.low %v3363, %v3379
        %v3397 = vcombine.high %v3363, %v3379
        %v3399 = vunpack.c.l.s4 1934713408
        %v3400 = vunpack.c.0.s8 %v3399
        %v3401 = vlaneseq
        %v3402 = vshrl.u32 %v3401, 7
        %v3403 = vsub.s32 %v3400, %v3402
        %v3404 = vrot.slane %v3396, %v3403
        %v3406 = vunpack.c.l.s4 1934713408
        %v3407 = vunpack.c.0.s8 %v3406
        %v3408 = vlaneseq
        %v3409 = vshrl.u32 %v3408, 7
        %v3410 = vsub.s32 %v3407, %v3409
        %v3411 = vrot.slane %v3397, %v3410
        %v3412 = vcombine.high %v3388, 0.0
        %v3413 = vcombine.high %v3395, 0.0
        %v3414 = vcombine.high %v3404, 0.0
        %v3415 = vcombine.high %v3411, 0.0
        %v3416 = vcombine.low %v821, %v1917
        %v3417 = vcombine.high %v821, %v1917
        %v3419 = vunpack.c.l.s4 1983009808
        %v3420 = vunpack.c.0.s8 %v3419
        %v3421 = vlaneseq
        %v3422 = vshrl.u32 %v3421, 7
        %v3423 = vsub.s32 %v3420, %v3422
        %v3424 = vrot.slane %v3416, %v3423
        %v3426 = vunpack.c.l.s4 1983009808
        %v3427 = vunpack.c.0.s8 %v3426
        %v3428 = vlaneseq
        %v3429 = vshrl.u32 %v3428, 7
        %v3430 = vsub.s32 %v3427, %v3429
        %v3431 = vrot.slane %v3417, %v3430
        %v3432 = vcombine.low %v1369, %v2465
        %v3433 = vcombine.high %v1369, %v2465
        %v3435 = vunpack.c.l.s4 1983009808
        %v3436 = vunpack.c.0.s8 %v3435
        %v3437 = vlaneseq
        %v3438 = vshrl.u32 %v3437, 7
        %v3439 = vsub.s32 %v3436, %v3438
        %v3440 = vrot.slane %v3432, %v3439
        %v3442 = vunpack.c.l.s4 1983009808
        %v3443 = vunpack.c.0.s8 %v3442
        %v3444 = vlaneseq
        %v3445 = vshrl.u32 %v3444, 7
        %v3446 = vsub.s32 %v3443, %v3445
        %v3447 = vrot.slane %v3433, %v3446
        %v3448 = vcombine.low %v2485, %v2493
        %v3449 = vcombine.high %v2485, %v2493
        %v3451 = vunpack.c.l.s4 1983009808
        %v3452 = vunpack.c.0.s8 %v3451
        %v3453 = vlaneseq
        %v3454 = vshrl.u32 %v3453, 7
        %v3455 = vsub.s32 %v3452, %v3454
        %v3456 = vrot.slane %v3448, %v3455
        %v3458 = vunpack.c.l.s4 1983009808
        %v3459 = vunpack.c.0.s8 %v3458
        %v3460 = vlaneseq
        %v3461 = vshrl.u32 %v3460, 7
        %v3462 = vsub.s32 %v3459, %v3461
        %v3463 = vrot.slane %v3449, %v3462
        %v3464 = vcombine.low %v2489, %v2497
        %v3465 = vcombine.high %v2489, %v2497
        %v3467 = vunpack.c.l.s4 1983009808
        %v3468 = vunpack.c.0.s8 %v3467
        %v3469 = vlaneseq
        %v3470 = vshrl.u32 %v3469, 7
        %v3471 = vsub.s32 %v3468, %v3470
        %v3472 = vrot.slane %v3464, %v3471
        %v3474 = vunpack.c.l.s4 1983009808
        %v3475 = vunpack.c.0.s8 %v3474
        %v3476 = vlaneseq
        %v3477 = vshrl.u32 %v3476, 7
        %v3478 = vsub.s32 %v3475, %v3477
        %v3479 = vrot.slane %v3465, %v3478
        %v3480 = vcombine.low %v3424, %v3440
        %v3481 = vcombine.high %v3424, %v3440
        %v3483 = vunpack.c.l.s4 1934713408
        %v3484 = vunpack.c.0.s8 %v3483
        %v3485 = vlaneseq
        %v3486 = vshrl.u32 %v3485, 7
        %v3487 = vsub.s32 %v3484, %v3486
        %v3488 = vrot.slane %v3480, %v3487
        %v3490 = vunpack.c.l.s4 1934713408
        %v3491 = vunpack.c.0.s8 %v3490
        %v3492 = vlaneseq
        %v3493 = vshrl.u32 %v3492, 7
        %v3494 = vsub.s32 %v3491, %v3493
        %v3495 = vrot.slane %v3481, %v3494
        %v3496 = vcombine.low %v3431, %v3447
        %v3497 = vcombine.high %v3431, %v3447
        %v3499 = vunpack.c.l.s4 1934713408
        %v3500 = vunpack.c.0.s8 %v3499
        %v3501 = vlaneseq
        %v3502 = vshrl.u32 %v3501, 7
        %v3503 = vsub.s32 %v3500, %v3502
        %v3504 = vrot.slane %v3496, %v3503
        %v3506 = vunpack.c.l.s4 1934713408
        %v3507 = vunpack.c.0.s8 %v3506
        %v3508 = vlaneseq
        %v3509 = vshrl.u32 %v3508, 7
        %v3510 = vsub.s32 %v3507, %v3509
        %v3511 = vrot.slane %v3497, %v3510
        %v3512 = vcombine.low %v3456, %v3472
        %v3513 = vcombine.high %v3456, %v3472
        %v3515 = vunpack.c.l.s4 1934713408
        %v3516 = vunpack.c.0.s8 %v3515
        %v3517 = vlaneseq
        %v3518 = vshrl.u32 %v3517, 7
        %v3519 = vsub.s32 %v3516, %v3518
        %v3520 = vrot.slane %v3512, %v3519
        %v3522 = vunpack.c.l.s4 1934713408
        %v3523 = vunpack.c.0.s8 %v3522
        %v3524 = vlaneseq
        %v3525 = vshrl.u32 %v3524, 7
        %v3526 = vsub.s32 %v3523, %v3525
        %v3527 = vrot.slane %v3513, %v3526
        %v3528 = vcombine.low %v3463, %v3479
        %v3529 = vcombine.high %v3463, %v3479
        %v3531 = vunpack.c.l.s4 1934713408
        %v3532 = vunpack.c.0.s8 %v3531
        %v3533 = vlaneseq
        %v3534 = vshrl.u32 %v3533, 7
        %v3535 = vsub.s32 %v3532, %v3534
        %v3536 = vrot.slane %v3528, %v3535
        %v3538 = vunpack.c.l.s4 1934713408
        %v3539 = vunpack.c.0.s8 %v3538
        %v3540 = vlaneseq
        %v3541 = vshrl.u32 %v3540, 7
        %v3542 = vsub.s32 %v3539, %v3541
        %v3543 = vrot.slane %v3529, %v3542
        %v3544 = vcombine.low %v3488, %v3520
        %v3545 = vcombine.high %v3488, %v3520
        %v3546 = vcombine.low %v3495, %v3527
        %v3547 = vcombine.high %v3495, %v3527
        %v3548 = vcombine.low %v3504, %v3536
        %v3549 = vcombine.high %v3504, %v3536
        %v3550 = vcombine.low %v3511, %v3543
        %v3551 = vcombine.high %v3511, %v3543
        %v3552 = vcombine.low %v2509, %v2517
        %v3553 = vcombine.high %v2509, %v2517
        %v3555 = vunpack.c.l.s4 1983009808
        %v3556 = vunpack.c.0.s8 %v3555
        %v3557 = vlaneseq
        %v3558 = vshrl.u32 %v3557, 7
        %v3559 = vsub.s32 %v3556, %v3558
        %v3560 = vrot.slane %v3552, %v3559
        %v3562 = vunpack.c.l.s4 1983009808
        %v3563 = vunpack.c.0.s8 %v3562
        %v3564 = vlaneseq
        %v3565 = vshrl.u32 %v3564, 7
        %v3566 = vsub.s32 %v3563, %v3565
        %v3567 = vrot.slane %v3553, %v3566
        %v3568 = vcombine.low %v2513, %v2521
        %v3569 = vcombine.high %v2513, %v2521
        %v3571 = vunpack.c.l.s4 1983009808
        %v3572 = vunpack.c.0.s8 %v3571
        %v3573 = vlaneseq
        %v3574 = vshrl.u32 %v3573, 7
        %v3575 = vsub.s32 %v3572, %v3574
        %v3576 = vrot.slane %v3568, %v3575
        %v3578 = vunpack.c.l.s4 1983009808
        %v3579 = vunpack.c.0.s8 %v3578
        %v3580 = vlaneseq
        %v3581 = vshrl.u32 %v3580, 7
        %v3582 = vsub.s32 %v3579, %v3581
        %v3583 = vrot.slane %v3569, %v3582
        %v3584 = vcombine.low %v2539, %v2549
        %v3585 = vcombine.high %v2539, %v2549
        %v3587 = vunpack.c.l.s4 1983009808
        %v3588 = vunpack.c.0.s8 %v3587
        %v3589 = vlaneseq
        %v3590 = vshrl.u32 %v3589, 7
        %v3591 = vsub.s32 %v3588, %v3590
        %v3592 = vrot.slane %v3584, %v3591
        %v3594 = vunpack.c.l.s4 1983009808
        %v3595 = vunpack.c.0.s8 %v3594
        %v3596 = vlaneseq
        %v3597 = vshrl.u32 %v3596, 7
        %v3598 = vsub.s32 %v3595, %v3597
        %v3599 = vrot.slane %v3585, %v3598
        %v3600 = vcombine.low %v2544, %v2554
        %v3601 = vcombine.high %v2544, %v2554
        %v3603 = vunpack.c.l.s4 1983009808
        %v3604 = vunpack.c.0.s8 %v3603
        %v3605 = vlaneseq
        %v3606 = vshrl.u32 %v3605, 7
        %v3607 = vsub.s32 %v3604, %v3606
        %v3608 = vrot.slane %v3600, %v3607
        %v3610 = vunpack.c.l.s4 1983009808
        %v3611 = vunpack.c.0.s8 %v3610
        %v3612 = vlaneseq
        %v3613 = vshrl.u32 %v3612, 7
        %v3614 = vsub.s32 %v3611, %v3613
        %v3615 = vrot.slane %v3601, %v3614
        %v3616 = vcombine.low %v3560, %v3576
        %v3617 = vcombine.high %v3560, %v3576
        %v3619 = vunpack.c.l.s4 1934713408
        %v3620 = vunpack.c.0.s8 %v3619
        %v3621 = vlaneseq
        %v3622 = vshrl.u32 %v3621, 7
        %v3623 = vsub.s32 %v3620, %v3622
        %v3624 = vrot.slane %v3616, %v3623
        %v3626 = vunpack.c.l.s4 1934713408
        %v3627 = vunpack.c.0.s8 %v3626
        %v3628 = vlaneseq
        %v3629 = vshrl.u32 %v3628, 7
        %v3630 = vsub.s32 %v3627, %v3629
        %v3631 = vrot.slane %v3617, %v3630
        %v3632 = vcombine.low %v3567, %v3583
        %v3633 = vcombine.high %v3567, %v3583
        %v3635 = vunpack.c.l.s4 1934713408
        %v3636 = vunpack.c.0.s8 %v3635
        %v3637 = vlaneseq
        %v3638 = vshrl.u32 %v3637, 7
        %v3639 = vsub.s32 %v3636, %v3638
        %v3640 = vrot.slane %v3632, %v3639
        %v3642 = vunpack.c.l.s4 1934713408
        %v3643 = vunpack.c.0.s8 %v3642
        %v3644 = vlaneseq
        %v3645 = vshrl.u32 %v3644, 7
        %v3646 = vsub.s32 %v3643, %v3645
        %v3647 = vrot.slane %v3633, %v3646
        %v3648 = vcombine.low %v3592, %v3608
        %v3649 = vcombine.high %v3592, %v3608
        %v3651 = vunpack.c.l.s4 1934713408
        %v3652 = vunpack.c.0.s8 %v3651
        %v3653 = vlaneseq
        %v3654 = vshrl.u32 %v3653, 7
        %v3655 = vsub.s32 %v3652, %v3654
        %v3656 = vrot.slane %v3648, %v3655
        %v3658 = vunpack.c.l.s4 1934713408
        %v3659 = vunpack.c.0.s8 %v3658
        %v3660 = vlaneseq
        %v3661 = vshrl.u32 %v3660, 7
        %v3662 = vsub.s32 %v3659, %v3661
        %v3663 = vrot.slane %v3649, %v3662
        %v3664 = vcombine.low %v3599, %v3615
        %v3665 = vcombine.high %v3599, %v3615
        %v3667 = vunpack.c.l.s4 1934713408
        %v3668 = vunpack.c.0.s8 %v3667
        %v3669 = vlaneseq
        %v3670 = vshrl.u32 %v3669, 7
        %v3671 = vsub.s32 %v3668, %v3670
        %v3672 = vrot.slane %v3664, %v3671
        %v3674 = vunpack.c.l.s4 1934713408
        %v3675 = vunpack.c.0.s8 %v3674
        %v3676 = vlaneseq
        %v3677 = vshrl.u32 %v3676, 7
        %v3678 = vsub.s32 %v3675, %v3677
        %v3679 = vrot.slane %v3665, %v3678
        %v3680 = vcombine.low %v3624, %v3656
        %v3681 = vcombine.high %v3624, %v3656
        %v3682 = vcombine.low %v3631, %v3663
        %v3683 = vcombine.high %v3631, %v3663
        %v3684 = vcombine.low %v3640, %v3672
        %v3685 = vcombine.high %v3640, %v3672
        %v3686 = vcombine.low %v3647, %v3679
        %v3687 = vcombine.high %v3647, %v3679
        %v3688 = vcombine.low %v2566, %v2574
        %v3689 = vcombine.high %v2566, %v2574
        %v3691 = vunpack.c.l.s4 1983009808
        %v3692 = vunpack.c.0.s8 %v3691
        %v3693 = vlaneseq
        %v3694 = vshrl.u32 %v3693, 7
        %v3695 = vsub.s32 %v3692, %v3694
        %v3696 = vrot.slane %v3688, %v3695
        %v3698 = vunpack.c.l.s4 1983009808
        %v3699 = vunpack.c.0.s8 %v3698
        %v3700 = vlaneseq
        %v3701 = vshrl.u32 %v3700, 7
        %v3702 = vsub.s32 %v3699, %v3701
        %v3703 = vrot.slane %v3689, %v3702
        %v3704 = vcombine.low %v2570, %v2578
        %v3705 = vcombine.high %v2570, %v2578
        %v3707 = vunpack.c.l.s4 1983009808
        %v3708 = vunpack.c.0.s8 %v3707
        %v3709 = vlaneseq
        %v3710 = vshrl.u32 %v3709, 7
        %v3711 = vsub.s32 %v3708, %v3710
        %v3712 = vrot.slane %v3704, %v3711
        %v3714 = vunpack.c.l.s4 1983009808
        %v3715 = vunpack.c.0.s8 %v3714
        %v3716 = vlaneseq
        %v3717 = vshrl.u32 %v3716, 7
        %v3718 = vsub.s32 %v3715, %v3717
        %v3719 = vrot.slane %v3705, %v3718
        %v3720 = vcombine.low %v2590, %v2598
        %v3721 = vcombine.high %v2590, %v2598
        %v3723 = vunpack.c.l.s4 1983009808
        %v3724 = vunpack.c.0.s8 %v3723
        %v3725 = vlaneseq
        %v3726 = vshrl.u32 %v3725, 7
        %v3727 = vsub.s32 %v3724, %v3726
        %v3728 = vrot.slane %v3720, %v3727
        %v3730 = vunpack.c.l.s4 1983009808
        %v3731 = vunpack.c.0.s8 %v3730
        %v3732 = vlaneseq
        %v3733 = vshrl.u32 %v3732, 7
        %v3734 = vsub.s32 %v3731, %v3733
        %v3735 = vrot.slane %v3721, %v3734
        %v3736 = vcombine.low %v2594, %v2602
        %v3737 = vcombine.high %v2594, %v2602
        %v3739 = vunpack.c.l.s4 1983009808
        %v3740 = vunpack.c.0.s8 %v3739
        %v3741 = vlaneseq
        %v3742 = vshrl.u32 %v3741, 7
        %v3743 = vsub.s32 %v3740, %v3742
        %v3744 = vrot.slane %v3736, %v3743
        %v3746 = vunpack.c.l.s4 1983009808
        %v3747 = vunpack.c.0.s8 %v3746
        %v3748 = vlaneseq
        %v3749 = vshrl.u32 %v3748, 7
        %v3750 = vsub.s32 %v3747, %v3749
        %v3751 = vrot.slane %v3737, %v3750
        %v3752 = vcombine.low %v3696, %v3712
        %v3753 = vcombine.high %v3696, %v3712
        %v3755 = vunpack.c.l.s4 1934713408
        %v3756 = vunpack.c.0.s8 %v3755
        %v3757 = vlaneseq
        %v3758 = vshrl.u32 %v3757, 7
        %v3759 = vsub.s32 %v3756, %v3758
        %v3760 = vrot.slane %v3752, %v3759
        %v3762 = vunpack.c.l.s4 1934713408
        %v3763 = vunpack.c.0.s8 %v3762
        %v3764 = vlaneseq
        %v3765 = vshrl.u32 %v3764, 7
        %v3766 = vsub.s32 %v3763, %v3765
        %v3767 = vrot.slane %v3753, %v3766
        %v3768 = vcombine.low %v3703, %v3719
        %v3769 = vcombine.high %v3703, %v3719
        %v3771 = vunpack.c.l.s4 1934713408
        %v3772 = vunpack.c.0.s8 %v3771
        %v3773 = vlaneseq
        %v3774 = vshrl.u32 %v3773, 7
        %v3775 = vsub.s32 %v3772, %v3774
        %v3776 = vrot.slane %v3768, %v3775
        %v3778 = vunpack.c.l.s4 1934713408
        %v3779 = vunpack.c.0.s8 %v3778
        %v3780 = vlaneseq
        %v3781 = vshrl.u32 %v3780, 7
        %v3782 = vsub.s32 %v3779, %v3781
        %v3783 = vrot.slane %v3769, %v3782
        %v3784 = vcombine.low %v3728, %v3744
        %v3785 = vcombine.high %v3728, %v3744
        %v3787 = vunpack.c.l.s4 1934713408
        %v3788 = vunpack.c.0.s8 %v3787
        %v3789 = vlaneseq
        %v3790 = vshrl.u32 %v3789, 7
        %v3791 = vsub.s32 %v3788, %v3790
        %v3792 = vrot.slane %v3784, %v3791
        %v3794 = vunpack.c.l.s4 1934713408
        %v3795 = vunpack.c.0.s8 %v3794
        %v3796 = vlaneseq
        %v3797 = vshrl.u32 %v3796, 7
        %v3798 = vsub.s32 %v3795, %v3797
        %v3799 = vrot.slane %v3785, %v3798
        %v3800 = vcombine.low %v3735, %v3751
        %v3801 = vcombine.high %v3735, %v3751
        %v3803 = vunpack.c.l.s4 1934713408
        %v3804 = vunpack.c.0.s8 %v3803
        %v3805 = vlaneseq
        %v3806 = vshrl.u32 %v3805, 7
        %v3807 = vsub.s32 %v3804, %v3806
        %v3808 = vrot.slane %v3800, %v3807
        %v3810 = vunpack.c.l.s4 1934713408
        %v3811 = vunpack.c.0.s8 %v3810
        %v3812 = vlaneseq
        %v3813 = vshrl.u32 %v3812, 7
        %v3814 = vsub.s32 %v3811, %v3813
        %v3815 = vrot.slane %v3801, %v3814
        %v3816 = vcombine.low %v3760, %v3792
        %v3817 = vcombine.high %v3760, %v3792
        %v3818 = vcombine.low %v3767, %v3799
        %v3819 = vcombine.high %v3767, %v3799
        %v3820 = vcombine.low %v3776, %v3808
        %v3821 = vcombine.high %v3776, %v3808
        %v3822 = vcombine.low %v3783, %v3815
        %v3823 = vcombine.high %v3783, %v3815
        %v3824 = vcombine.low %v2616, %v2626
        %v3825 = vcombine.high %v2616, %v2626
        %v3827 = vunpack.c.l.s4 1983009808
        %v3828 = vunpack.c.0.s8 %v3827
        %v3829 = vlaneseq
        %v3830 = vshrl.u32 %v3829, 7
        %v3831 = vsub.s32 %v3828, %v3830
        %v3832 = vrot.slane %v3824, %v3831
        %v3834 = vunpack.c.l.s4 1983009808
        %v3835 = vunpack.c.0.s8 %v3834
        %v3836 = vlaneseq
        %v3837 = vshrl.u32 %v3836, 7
        %v3838 = vsub.s32 %v3835, %v3837
        %v3839 = vrot.slane %v3825, %v3838
        %v3840 = vcombine.low %v2621, %v2631
        %v3841 = vcombine.high %v2621, %v2631
        %v3843 = vunpack.c.l.s4 1983009808
        %v3844 = vunpack.c.0.s8 %v3843
        %v3845 = vlaneseq
        %v3846 = vshrl.u32 %v3845, 7
        %v3847 = vsub.s32 %v3844, %v3846
        %v3848 = vrot.slane %v3840, %v3847
        %v3850 = vunpack.c.l.s4 1983009808
        %v3851 = vunpack.c.0.s8 %v3850
        %v3852 = vlaneseq
        %v3853 = vshrl.u32 %v3852, 7
        %v3854 = vsub.s32 %v3851, %v3853
        %v3855 = vrot.slane %v3841, %v3854
        %v3856 = vcombine.low %v2643, %v2651
        %v3857 = vcombine.high %v2643, %v2651
        %v3859 = vunpack.c.l.s4 1983009808
        %v3860 = vunpack.c.0.s8 %v3859
        %v3861 = vlaneseq
        %v3862 = vshrl.u32 %v3861, 7
        %v3863 = vsub.s32 %v3860, %v3862
        %v3864 = vrot.slane %v3856, %v3863
        %v3866 = vunpack.c.l.s4 1983009808
        %v3867 = vunpack.c.0.s8 %v3866
        %v3868 = vlaneseq
        %v3869 = vshrl.u32 %v3868, 7
        %v3870 = vsub.s32 %v3867, %v3869
        %v3871 = vrot.slane %v3857, %v3870
        %v3872 = vcombine.low %v2647, %v2655
        %v3873 = vcombine.high %v2647, %v2655
        %v3875 = vunpack.c.l.s4 1983009808
        %v3876 = vunpack.c.0.s8 %v3875
        %v3877 = vlaneseq
        %v3878 = vshrl.u32 %v3877, 7
        %v3879 = vsub.s32 %v3876, %v3878
        %v3880 = vrot.slane %v3872, %v3879
        %v3882 = vunpack.c.l.s4 1983009808
        %v3883 = vunpack.c.0.s8 %v3882
        %v3884 = vlaneseq
        %v3885 = vshrl.u32 %v3884, 7
        %v3886 = vsub.s32 %v3883, %v3885
        %v3887 = vrot.slane %v3873, %v3886
        %v3888 = vcombine.low %v3832, %v3848
        %v3889 = vcombine.high %v3832, %v3848
        %v3891 = vunpack.c.l.s4 1934713408
        %v3892 = vunpack.c.0.s8 %v3891
        %v3893 = vlaneseq
        %v3894 = vshrl.u32 %v3893, 7
        %v3895 = vsub.s32 %v3892, %v3894
        %v3896 = vrot.slane %v3888, %v3895
        %v3898 = vunpack.c.l.s4 1934713408
        %v3899 = vunpack.c.0.s8 %v3898
        %v3900 = vlaneseq
        %v3901 = vshrl.u32 %v3900, 7
        %v3902 = vsub.s32 %v3899, %v3901
        %v3903 = vrot.slane %v3889, %v3902
        %v3904 = vcombine.low %v3839, %v3855
        %v3905 = vcombine.high %v3839, %v3855
        %v3907 = vunpack.c.l.s4 1934713408
        %v3908 = vunpack.c.0.s8 %v3907
        %v3909 = vlaneseq
        %v3910 = vshrl.u32 %v3909, 7
        %v3911 = vsub.s32 %v3908, %v3910
        %v3912 = vrot.slane %v3904, %v3911
        %v3914 = vunpack.c.l.s4 1934713408
        %v3915 = vunpack.c.0.s8 %v3914
        %v3916 = vlaneseq
        %v3917 = vshrl.u32 %v3916, 7
        %v3918 = vsub.s32 %v3915, %v3917
        %v3919 = vrot.slane %v3905, %v3918
        %v3920 = vcombine.low %v3864, %v3880
        %v3921 = vcombine.high %v3864, %v3880
        %v3923 = vunpack.c.l.s4 1934713408
        %v3924 = vunpack.c.0.s8 %v3923
        %v3925 = vlaneseq
        %v3926 = vshrl.u32 %v3925, 7
        %v3927 = vsub.s32 %v3924, %v3926
        %v3928 = vrot.slane %v3920, %v3927
        %v3930 = vunpack.c.l.s4 1934713408
        %v3931 = vunpack.c.0.s8 %v3930
        %v3932 = vlaneseq
        %v3933 = vshrl.u32 %v3932, 7
        %v3934 = vsub.s32 %v3931, %v3933
        %v3935 = vrot.slane %v3921, %v3934
        %v3936 = vcombine.low %v3871, %v3887
        %v3937 = vcombine.high %v3871, %v3887
        %v3939 = vunpack.c.l.s4 1934713408
        %v3940 = vunpack.c.0.s8 %v3939
        %v3941 = vlaneseq
        %v3942 = vshrl.u32 %v3941, 7
        %v3943 = vsub.s32 %v3940, %v3942
        %v3944 = vrot.slane %v3936, %v3943
        %v3946 = vunpack.c.l.s4 1934713408
        %v3947 = vunpack.c.0.s8 %v3946
        %v3948 = vlaneseq
        %v3949 = vshrl.u32 %v3948, 7
        %v3950 = vsub.s32 %v3947, %v3949
        %v3951 = vrot.slane %v3937, %v3950
        %v3952 = vcombine.low %v3896, %v3928
        %v3953 = vcombine.high %v3896, %v3928
        %v3954 = vcombine.low %v3903, %v3935
        %v3955 = vcombine.high %v3903, %v3935
        %v3956 = vcombine.low %v3912, %v3944
        %v3957 = vcombine.high %v3912, %v3944
        %v3958 = vcombine.low %v3919, %v3951
        %v3959 = vcombine.high %v3919, %v3951
        %v3960 = vcombine.low %v2667, %v2675
        %v3961 = vcombine.high %v2667, %v2675
        %v3963 = vunpack.c.l.s4 1983009808
        %v3964 = vunpack.c.0.s8 %v3963
        %v3965 = vlaneseq
        %v3966 = vshrl.u32 %v3965, 7
        %v3967 = vsub.s32 %v3964, %v3966
        %v3968 = vrot.slane %v3960, %v3967
        %v3970 = vunpack.c.l.s4 1983009808
        %v3971 = vunpack.c.0.s8 %v3970
        %v3972 = vlaneseq
        %v3973 = vshrl.u32 %v3972, 7
        %v3974 = vsub.s32 %v3971, %v3973
        %v3975 = vrot.slane %v3961, %v3974
        %v3976 = vcombine.low %v2671, %v2679
        %v3977 = vcombine.high %v2671, %v2679
        %v3979 = vunpack.c.l.s4 1983009808
        %v3980 = vunpack.c.0.s8 %v3979
        %v3981 = vlaneseq
        %v3982 = vshrl.u32 %v3981, 7
        %v3983 = vsub.s32 %v3980, %v3982
        %v3984 = vrot.slane %v3976, %v3983
        %v3986 = vunpack.c.l.s4 1983009808
        %v3987 = vunpack.c.0.s8 %v3986
        %v3988 = vlaneseq
        %v3989 = vshrl.u32 %v3988, 7
        %v3990 = vsub.s32 %v3987, %v3989
        %v3991 = vrot.slane %v3977, %v3990
        %v3992 = vcombine.low %v3968, %v3984
        %v3993 = vcombine.high %v3968, %v3984
        %v3995 = vunpack.c.l.s4 1934713408
        %v3996 = vunpack.c.0.s8 %v3995
        %v3997 = vlaneseq
        %v3998 = vshrl.u32 %v3997, 7
        %v3999 = vsub.s32 %v3996, %v3998
        %v4000 = vrot.slane %v3992, %v3999
        %v4002 = vunpack.c.l.s4 1934713408
        %v4003 = vunpack.c.0.s8 %v4002
        %v4004 = vlaneseq
        %v4005 = vshrl.u32 %v4004, 7
        %v4006 = vsub.s32 %v4003, %v4005
        %v4007 = vrot.slane %v3993, %v4006
        %v4008 = vcombine.low %v3975, %v3991
        %v4009 = vcombine.high %v3975, %v3991
        %v4011 = vunpack.c.l.s4 1934713408
        %v4012 = vunpack.c.0.s8 %v4011
        %v4013 = vlaneseq
        %v4014 = vshrl.u32 %v4013, 7
        %v4015 = vsub.s32 %v4012, %v4014
        %v4016 = vrot.slane %v4008, %v4015
        %v4018 = vunpack.c.l.s4 1934713408
        %v4019 = vunpack.c.0.s8 %v4018
        %v4020 = vlaneseq
        %v4021 = vshrl.u32 %v4020, 7
        %v4022 = vsub.s32 %v4019, %v4021
        %v4023 = vrot.slane %v4009, %v4022
        %v4024 = vcombine.high %v4000, 0.0
        %v4025 = vcombine.high %v4007, 0.0
        %v4026 = vcombine.high %v4016, 0.0
        %v4027 = vcombine.high %v4023, 0.0
        %4033 = vrot.lane.b32.xlu0 %v2933, 32
        %v4034 = vpop.permute.xlu0 %4033
        %4035 = vrot.lane.b32.xlu0 %v3069, 32
        %v4036 = vpop.permute.xlu0 %4035
        %4037 = vrot.lane.b32.xlu0 %v3205, 32
        %v4038 = vpop.permute.xlu0 %4037
        %4039 = vrot.lane.b32.xlu0 %v3341, 32
        %v4040 = vpop.permute.xlu0 %4039
        %4041 = vrot.lane.b32.xlu0 %v3412, 32
        %v4042 = vpop.permute.xlu0 %4041
        %4053 = vrot.lane.b32.xlu0 %v2934, 64
        %v4054 = vpop.permute.xlu0 %4053
        %4055 = vrot.lane.b32.xlu0 %v3070, 64
        %v4056 = vpop.permute.xlu0 %4055
        %4057 = vrot.lane.b32.xlu0 %v3206, 64
        %v4058 = vpop.permute.xlu0 %4057
        %4059 = vrot.lane.b32.xlu0 %v3342, 64
        %v4060 = vpop.permute.xlu0 %4059
        %4061 = vrot.lane.b32.xlu0 %v3395, 64
        %v4062 = vpop.permute.xlu0 %4061
        %4073 = vrot.lane.b32.xlu0 %v2935, 96
        %v4074 = vpop.permute.xlu0 %4073
        %4075 = vrot.lane.b32.xlu0 %v3071, 96
        %v4076 = vpop.permute.xlu0 %4075
        %4077 = vrot.lane.b32.xlu0 %v3207, 96
        %v4078 = vpop.permute.xlu0 %4077
        %4079 = vrot.lane.b32.xlu0 %v3343, 96
        %v4080 = vpop.permute.xlu0 %4079
        %4081 = vrot.lane.b32.xlu0 %v3413, 96
        %v4082 = vpop.permute.xlu0 %4081
        %4093 = vrot.lane.b32.xlu0 %v2937, 32
        %v4094 = vpop.permute.xlu0 %4093
        %4095 = vrot.lane.b32.xlu0 %v3073, 32
        %v4096 = vpop.permute.xlu0 %4095
        %4097 = vrot.lane.b32.xlu0 %v3209, 32
        %v4098 = vpop.permute.xlu0 %4097
        %4099 = vrot.lane.b32.xlu0 %v3345, 32
        %v4100 = vpop.permute.xlu0 %4099
        %4101 = vrot.lane.b32.xlu0 %v3414, 32
        %v4102 = vpop.permute.xlu0 %4101
        %4113 = vrot.lane.b32.xlu0 %v2938, 64
        %v4114 = vpop.permute.xlu0 %4113
        %4115 = vrot.lane.b32.xlu0 %v3074, 64
        %v4116 = vpop.permute.xlu0 %4115
        %4117 = vrot.lane.b32.xlu0 %v3210, 64
        %v4118 = vpop.permute.xlu0 %4117
        %4119 = vrot.lane.b32.xlu0 %v3346, 64
        %v4120 = vpop.permute.xlu0 %4119
        %4121 = vrot.lane.b32.xlu0 %v3411, 64
        %v4122 = vpop.permute.xlu0 %4121
        %4133 = vrot.lane.b32.xlu0 %v2939, 96
        %v4134 = vpop.permute.xlu0 %4133
        %4135 = vrot.lane.b32.xlu0 %v3075, 96
        %v4136 = vpop.permute.xlu0 %4135
        %4137 = vrot.lane.b32.xlu0 %v3211, 96
        %v4138 = vpop.permute.xlu0 %4137
        %4139 = vrot.lane.b32.xlu0 %v3347, 96
        %v4140 = vpop.permute.xlu0 %4139
        %4141 = vrot.lane.b32.xlu0 %v3415, 96
        %v4142 = vpop.permute.xlu0 %4141
        %4153 = vrot.lane.b32.xlu0 %v3545, 32
        %v4154 = vpop.permute.xlu0 %4153
        %4155 = vrot.lane.b32.xlu0 %v3681, 32
        %v4156 = vpop.permute.xlu0 %4155
        %4157 = vrot.lane.b32.xlu0 %v3817, 32
        %v4158 = vpop.permute.xlu0 %4157
        %4159 = vrot.lane.b32.xlu0 %v3953, 32
        %v4160 = vpop.permute.xlu0 %4159
        %4161 = vrot.lane.b32.xlu0 %v4024, 32
        %v4162 = vpop.permute.xlu0 %4161
        %4173 = vrot.lane.b32.xlu0 %v3546, 64
        %v4174 = vpop.permute.xlu0 %4173
        %4175 = vrot.lane.b32.xlu0 %v3682, 64
        %v4176 = vpop.permute.xlu0 %4175
        %4177 = vrot.lane.b32.xlu0 %v3818, 64
        %v4178 = vpop.permute.xlu0 %4177
        %4179 = vrot.lane.b32.xlu0 %v3954, 64
        %v4180 = vpop.permute.xlu0 %4179
        %4181 = vrot.lane.b32.xlu0 %v4007, 64
        %v4182 = vpop.permute.xlu0 %4181
        %4193 = vrot.lane.b32.xlu0 %v3547, 96
        %v4194 = vpop.permute.xlu0 %4193
        %4195 = vrot.lane.b32.xlu0 %v3683, 96
        %v4196 = vpop.permute.xlu0 %4195
        %4197 = vrot.lane.b32.xlu0 %v3819, 96
        %v4198 = vpop.permute.xlu0 %4197
        %4199 = vrot.lane.b32.xlu0 %v3955, 96
        %v4200 = vpop.permute.xlu0 %4199
        %4201 = vrot.lane.b32.xlu0 %v4025, 96
        %v4202 = vpop.permute.xlu0 %4201
        %4213 = vrot.lane.b32.xlu0 %v3549, 32
        %v4214 = vpop.permute.xlu0 %4213
        %4215 = vrot.lane.b32.xlu0 %v3685, 32
        %v4216 = vpop.permute.xlu0 %4215
        %4217 = vrot.lane.b32.xlu0 %v3821, 32
        %v4218 = vpop.permute.xlu0 %4217
        %4219 = vrot.lane.b32.xlu0 %v3957, 32
        %v4220 = vpop.permute.xlu0 %4219
        %4221 = vrot.lane.b32.xlu0 %v4026, 32
        %v4222 = vpop.permute.xlu0 %4221
        %4233 = vrot.lane.b32.xlu0 %v3550, 64
        %v4234 = vpop.permute.xlu0 %4233
        %4235 = vrot.lane.b32.xlu0 %v3686, 64
        %v4236 = vpop.permute.xlu0 %4235
        %4237 = vrot.lane.b32.xlu0 %v3822, 64
        %v4238 = vpop.permute.xlu0 %4237
        %4239 = vrot.lane.b32.xlu0 %v3958, 64
        %v4240 = vpop.permute.xlu0 %4239
        %4241 = vrot.lane.b32.xlu0 %v4023, 64
        %v4242 = vpop.permute.xlu0 %4241
        %4253 = vrot.lane.b32.xlu0 %v3551, 96
        %v4254 = vpop.permute.xlu0 %4253
        %4255 = vrot.lane.b32.xlu0 %v3687, 96
        %v4256 = vpop.permute.xlu0 %4255
        %4257 = vrot.lane.b32.xlu0 %v3823, 96
        %v4258 = vpop.permute.xlu0 %4257
        %4259 = vrot.lane.b32.xlu0 %v3959, 96
        %v4260 = vpop.permute.xlu0 %4259
        %4261 = vrot.lane.b32.xlu0 %v4027, 96
        %v4262 = vpop.permute.xlu0 %4261
        %vm4268 = vcmask 261120
        %v4269 = vsel %vm4268, %v2932, %v4034
        %v4270 = vsel %vm4268, %v3068, %v4036
        %v4271 = vsel %vm4268, %v3204, %v4038
        %v4272 = vsel %vm4268, %v3340, %v4040
        %v4273 = vsel %vm4268, %v3388, %v4042
        %vm4274 = vcmask 523264
        %v4275 = vsel %vm4274, %v4269, %v4054
        %v4276 = vsel %vm4274, %v4270, %v4056
        %v4277 = vsel %vm4274, %v4271, %v4058
        %v4278 = vsel %vm4274, %v4272, %v4060
        %v4279 = vsel %vm4274, %v4273, %v4062
        %vm4280 = vcmask 785408
        %v4281 = vsel %vm4280, %v4275, %v4074
        %v4282 = vsel %vm4280, %v4276, %v4076
        %v4283 = vsel %vm4280, %v4277, %v4078
        %v4284 = vsel %vm4280, %v4278, %v4080
        %v4285 = vsel %vm4280, %v4279, %v4082
        %v4286 = vsel %vm4268, %v2936, %v4094
        %v4287 = vsel %vm4268, %v3072, %v4096
        %v4288 = vsel %vm4268, %v3208, %v4098
        %v4289 = vsel %vm4268, %v3344, %v4100
        %v4290 = vsel %vm4268, %v3404, %v4102
        %v4291 = vsel %vm4274, %v4286, %v4114
        %v4292 = vsel %vm4274, %v4287, %v4116
        %v4293 = vsel %vm4274, %v4288, %v4118
        %v4294 = vsel %vm4274, %v4289, %v4120
        %v4295 = vsel %vm4274, %v4290, %v4122
        %v4296 = vsel %vm4280, %v4291, %v4134
        %v4297 = vsel %vm4280, %v4292, %v4136
        %v4298 = vsel %vm4280, %v4293, %v4138
        %v4299 = vsel %vm4280, %v4294, %v4140
        %v4300 = vsel %vm4280, %v4295, %v4142
        %v4301 = vsel %vm4268, %v3544, %v4154
        %v4302 = vsel %vm4268, %v3680, %v4156
        %v4303 = vsel %vm4268, %v3816, %v4158
        %v4304 = vsel %vm4268, %v3952, %v4160
        %v4305 = vsel %vm4268, %v4000, %v4162
        %v4306 = vsel %vm4274, %v4301, %v4174
        %v4307 = vsel %vm4274, %v4302, %v4176
        %v4308 = vsel %vm4274, %v4303, %v4178
        %v4309 = vsel %vm4274, %v4304, %v4180
        %v4310 = vsel %vm4274, %v4305, %v4182
        %v4311 = vsel %vm4280, %v4306, %v4194
        %v4312 = vsel %vm4280, %v4307, %v4196
        %v4313 = vsel %vm4280, %v4308, %v4198
        %v4314 = vsel %vm4280, %v4309, %v4200
        %v4315 = vsel %vm4280, %v4310, %v4202
        %v4316 = vsel %vm4268, %v3548, %v4214
        %v4317 = vsel %vm4268, %v3684, %v4216
        %v4318 = vsel %vm4268, %v3820, %v4218
        %v4319 = vsel %vm4268, %v3956, %v4220
        %v4320 = vsel %vm4268, %v4016, %v4222
        %v4321 = vsel %vm4274, %v4316, %v4234
        %v4322 = vsel %vm4274, %v4317, %v4236
        %v4323 = vsel %vm4274, %v4318, %v4238
        %v4324 = vsel %vm4274, %v4319, %v4240
        %v4325 = vsel %vm4274, %v4320, %v4242
        %v4326 = vsel %vm4280, %v4321, %v4254
        %v4327 = vsel %vm4280, %v4322, %v4256
        %v4328 = vsel %vm4280, %v4323, %v4258
        %v4329 = vsel %vm4280, %v4324, %v4260
        %v4330 = vsel %vm4280, %v4325, %v4262
        %v4331 = vcombine.low %v2774, %v2782
        %v4332 = vcombine.high %v2774, %v2782
        %v4334 = vunpack.c.l.s4 1983009808
        %v4335 = vunpack.c.0.s8 %v4334
        %v4336 = vlaneseq
        %v4337 = vshrl.u32 %v4336, 7
        %v4338 = vsub.s32 %v4335, %v4337
        %v4339 = vrot.slane %v4331, %v4338
        %v4341 = vunpack.c.l.s4 1983009808
        %v4342 = vunpack.c.0.s8 %v4341
        %v4343 = vlaneseq
        %v4344 = vshrl.u32 %v4343, 7
        %v4345 = vsub.s32 %v4342, %v4344
        %v4346 = vrot.slane %v4332, %v4345
        %v4347 = vcombine.low %v2778, %v2786
        %v4348 = vcombine.high %v2778, %v2786
        %v4350 = vunpack.c.l.s4 1983009808
        %v4351 = vunpack.c.0.s8 %v4350
        %v4352 = vlaneseq
        %v4353 = vshrl.u32 %v4352, 7
        %v4354 = vsub.s32 %v4351, %v4353
        %v4355 = vrot.slane %v4347, %v4354
        %v4357 = vunpack.c.l.s4 1983009808
        %v4358 = vunpack.c.0.s8 %v4357
        %v4359 = vlaneseq
        %v4360 = vshrl.u32 %v4359, 7
        %v4361 = vsub.s32 %v4358, %v4360
        %v4362 = vrot.slane %v4348, %v4361
        %v4363 = vcombine.low %v2790, %v2798
        %v4364 = vcombine.high %v2790, %v2798
        %v4366 = vunpack.c.l.s4 1983009808
        %v4367 = vunpack.c.0.s8 %v4366
        %v4368 = vlaneseq
        %v4369 = vshrl.u32 %v4368, 7
        %v4370 = vsub.s32 %v4367, %v4369
        %v4371 = vrot.slane %v4363, %v4370
        %v4373 = vunpack.c.l.s4 1983009808
        %v4374 = vunpack.c.0.s8 %v4373
        %v4375 = vlaneseq
        %v4376 = vshrl.u32 %v4375, 7
        %v4377 = vsub.s32 %v4374, %v4376
        %v4378 = vrot.slane %v4364, %v4377
        %v4379 = vcombine.low %v2794, %v2802
        %v4380 = vcombine.high %v2794, %v2802
        %v4382 = vunpack.c.l.s4 1983009808
        %v4383 = vunpack.c.0.s8 %v4382
        %v4384 = vlaneseq
        %v4385 = vshrl.u32 %v4384, 7
        %v4386 = vsub.s32 %v4383, %v4385
        %v4387 = vrot.slane %v4379, %v4386
        %v4389 = vunpack.c.l.s4 1983009808
        %v4390 = vunpack.c.0.s8 %v4389
        %v4391 = vlaneseq
        %v4392 = vshrl.u32 %v4391, 7
        %v4393 = vsub.s32 %v4390, %v4392
        %v4394 = vrot.slane %v4380, %v4393
        %v4395 = vcombine.low %v4339, %v4355
        %v4396 = vcombine.high %v4339, %v4355
        %v4398 = vunpack.c.l.s4 1934713408
        %v4399 = vunpack.c.0.s8 %v4398
        %v4400 = vlaneseq
        %v4401 = vshrl.u32 %v4400, 7
        %v4402 = vsub.s32 %v4399, %v4401
        %v4403 = vrot.slane %v4395, %v4402
        %v4405 = vunpack.c.l.s4 1934713408
        %v4406 = vunpack.c.0.s8 %v4405
        %v4407 = vlaneseq
        %v4408 = vshrl.u32 %v4407, 7
        %v4409 = vsub.s32 %v4406, %v4408
        %v4410 = vrot.slane %v4396, %v4409
        %v4411 = vcombine.low %v4346, %v4362
        %v4412 = vcombine.high %v4346, %v4362
        %v4414 = vunpack.c.l.s4 1934713408
        %v4415 = vunpack.c.0.s8 %v4414
        %v4416 = vlaneseq
        %v4417 = vshrl.u32 %v4416, 7
        %v4418 = vsub.s32 %v4415, %v4417
        %v4419 = vrot.slane %v4411, %v4418
        %v4421 = vunpack.c.l.s4 1934713408
        %v4422 = vunpack.c.0.s8 %v4421
        %v4423 = vlaneseq
        %v4424 = vshrl.u32 %v4423, 7
        %v4425 = vsub.s32 %v4422, %v4424
        %v4426 = vrot.slane %v4412, %v4425
        %v4427 = vcombine.low %v4371, %v4387
        %v4428 = vcombine.high %v4371, %v4387
        %v4430 = vunpack.c.l.s4 1934713408
        %v4431 = vunpack.c.0.s8 %v4430
        %v4432 = vlaneseq
        %v4433 = vshrl.u32 %v4432, 7
        %v4434 = vsub.s32 %v4431, %v4433
        %v4435 = vrot.slane %v4427, %v4434
        %v4437 = vunpack.c.l.s4 1934713408
        %v4438 = vunpack.c.0.s8 %v4437
        %v4439 = vlaneseq
        %v4440 = vshrl.u32 %v4439, 7
        %v4441 = vsub.s32 %v4438, %v4440
        %v4442 = vrot.slane %v4428, %v4441
        %v4443 = vcombine.low %v4378, %v4394
        %v4444 = vcombine.high %v4378, %v4394
        %v4446 = vunpack.c.l.s4 1934713408
        %v4447 = vunpack.c.0.s8 %v4446
        %v4448 = vlaneseq
        %v4449 = vshrl.u32 %v4448, 7
        %v4450 = vsub.s32 %v4447, %v4449
        %v4451 = vrot.slane %v4443, %v4450
        %v4453 = vunpack.c.l.s4 1934713408
        %v4454 = vunpack.c.0.s8 %v4453
        %v4455 = vlaneseq
        %v4456 = vshrl.u32 %v4455, 7
        %v4457 = vsub.s32 %v4454, %v4456
        %v4458 = vrot.slane %v4444, %v4457
        %v4459 = vcombine.low %v4403, %v4435
        %v4460 = vcombine.high %v4403, %v4435
        %v4461 = vcombine.low %v4410, %v4442
        %v4462 = vcombine.high %v4410, %v4442
        %v4463 = vcombine.low %v4419, %v4451
        %v4464 = vcombine.high %v4419, %v4451
        %v4465 = vcombine.low %v4426, %v4458
        %v4466 = vcombine.high %v4426, %v4458
        %4468 = vrot.lane.b32.xlu0 %v4460, 32
        %v4469 = vpop.permute.xlu0 %4468
        %4472 = vrot.lane.b32.xlu0 %v4461, 64
        %v4473 = vpop.permute.xlu0 %4472
        %4476 = vrot.lane.b32.xlu0 %v4462, 96
        %v4477 = vpop.permute.xlu0 %4476
        %4480 = vrot.lane.b32.xlu0 %v4464, 32
        %v4481 = vpop.permute.xlu0 %4480
        %4484 = vrot.lane.b32.xlu0 %v4465, 64
        %v4485 = vpop.permute.xlu0 %4484
        %4488 = vrot.lane.b32.xlu0 %v4466, 96
        %v4489 = vpop.permute.xlu0 %4488
        %v4491 = vsel %vm4268, %v4459, %v4469
        %v4492 = vsel %vm4274, %v4491, %v4473
        %v4493 = vsel %vm4280, %v4492, %v4477
        %v4494 = vsel %vm4268, %v4463, %v4481
        %v4495 = vsel %vm4274, %v4494, %v4485
        %v4496 = vsel %vm4280, %v4495, %v4489
        %vm4497 = vcmask 293888
        %v4499 = vsel %vm4497, %v2688, 0
        %vm4501 = vcmask 1043456
        %v4503 = vsel %vm4501, %v4285, 0
        %v4506 = vsel %vm4501, %v4300, 0
        %v4509 = vsel %vm4501, %v4315, 0
        %v4512 = vsel %vm4501, %v4330, 0
        %v4514 = vand.u32 %v4296, 4294901760
        %4515 = vmatprep.subr.mxu0 %v4514
        %v4516 = vand.u32 %v4281, 4294901760
        %4517 = vmatpush1.msra.mxu0 %v4516
        %v4518 = vand.u32 %v4297, 4294901760
        %4519 = vmatprep.subr.mxu0 %v4518
        %v4520 = vand.u32 %v4282, 4294901760
        %4521 = vmatpush1.msra.mxu0 %v4520
        %v4522 = vand.u32 %v4298, 4294901760
        %4523 = vmatprep.subr.mxu0 %v4522
        %v4524 = vand.u32 %v4283, 4294901760
        %4525 = vmatpush1.msra.mxu0 %v4524
        %v4526 = vand.u32 %v4299, 4294901760
        %4527 = vmatprep.subr.mxu0 %v4526
        %v4528 = vand.u32 %v4284, 4294901760
        %4529 = vmatpush1.msra.mxu0 %v4528
        %v4530 = vand.u32 %v4506, 4294901760
        %4531 = vmatprep.subr.mxu0 %v4530
        %v4532 = vand.u32 %v4503, 4294901760
        %4533 = vmatpush1.msra.mxu0 %v4532
        %4534 = vmatprep.subr.mxu0 0.0
        %4535 = vmatpush1.msra.mxu0 0.0
        %4536 = vmatprep.subr.mxu0 0.0
        %4537 = vmatpush1.msra.mxu0 0.0
        %4538 = vmatprep.subr.mxu0 0.0
        %4539 = vmatpush1.msra.mxu0 0.0
        %4540 = vmatprep.subr.mxu0 0.0
        %4541 = vmatpush1.msra.mxu0 0.0
        %4542 = vmatprep.subr.mxu0 0.0
        %4543 = vmatpush1.msra.mxu0 0.0
        %4544 = vmatprep.subr.mxu0 0.0
        %4545 = vmatpush1.msra.mxu0 0.0
        %4546 = vmatprep.subr.mxu0 0.0
        %4547 = vmatpush1.msra.mxu0 0.0
        %4548 = vmatprep.subr.mxu0 0.0
        %4549 = vmatpush1.msra.mxu0 0.0
        %4550 = vmatprep.subr.mxu0 0.0
        %4551 = vmatpush1.msra.mxu0 0.0
        %4552 = vmatprep.subr.mxu0 0.0
        %4553 = vmatpush1.msra.mxu0 0.0
        %4554 = vmatprep.subr.mxu0 0.0
        %4555 = vmatpush1.msra.mxu0 0.0
        %4556 = vmatprep.subr.mxu0 0.0
        %4557 = vmatpush1.msra.mxu0 0.0
        %4558 = vmatprep.subr.mxu0 0.0
        %4559 = vmatpush1.msra.mxu0 0.0
        %4560 = vmatprep.subr.mxu0 0.0
        %4561 = vmatpush1.msra.mxu0 0.0
        %4562 = vmatprep.subr.mxu0 0.0
        %4563 = vmatpush1.msra.mxu0 0.0
        %4564 = vmatprep.subr.mxu0 0.0
        %4565 = vmatpush1.msra.mxu0 0.0
        %4566 = vmatprep.subr.mxu0 0.0
        %4567 = vmatpush1.msra.mxu0 0.0
        %4568 = vmatprep.subr.mxu0 0.0
        %4569 = vmatpush1.msra.mxu0 0.0
        %4570 = vmatprep.subr.mxu0 0.0
        %4571 = vmatpush1.msra.mxu0 0.0
        %4572 = vmatprep.subr.mxu0 0.0
        %4573 = vmatpush1.msra.mxu0 0.0
        %4574 = vmatprep.subr.mxu0 0.0
        %4575 = vmatpush1.msra.mxu0 0.0
        %4576 = vmatprep.subr.mxu0 0.0
        %4577 = vmatpush1.msra.mxu0 0.0
        %4578 = vmatprep.subr.mxu0 0.0
        %4579 = vmatpush1.msra.mxu0 0.0
        %4580 = vmatprep.subr.mxu0 0.0
        %4581 = vmatpush1.msra.mxu0 0.0
        %4582 = vmatprep.subr.mxu0 0.0
        %4583 = vmatpush1.msra.mxu0 0.0
        %4584 = vmatprep.subr.mxu0 0.0
        %4585 = vmatpush1.msra.mxu0 0.0
        %4586 = vmatprep.subr.mxu0 0.0
        %4587 = vmatpush1.msra.mxu0 0.0
        %4588 = vmatprep.mubr.f32.mxu0 0.0
        %v4589 = vand.u32 %v4499, 4294901760
        %v4590 = vsub.f32 %v4499, %v4589
        %v4591 = vand.u32 %v4590, 4294901760
        %v4592 = vsub.f32 %v4590, %v4591
        %v4593 = vand.u32 %v4592, 4294901760
        %4594 = vmatmul.mubr.f32.gmra.mrb[0].mxu0 %v4593
        %v4595 = vpop.f32.mrb[0].mxu0
        %v4596 = vadd.f32 %v4493, %v4595
        %v4597 = vpop.f32.mrb[0].mxu0
        %v4598 = vadd.f32 %v4496, %v4597
        %4599 = vdwg.mxu0
        %v4600 = vand.u32 %v4296, 4294901760
        %v4601 = vsub.f32 %v4296, %v4600
        %v4602 = vand.u32 %v4601, 4294901760
        %v4603 = vsub.f32 %v4601, %v4602
        %v4604 = vand.u32 %v4603, 4294901760
        %4605 = vmatprep.subr.mxu0 %v4604
        %v4606 = vand.u32 %v4281, 4294901760
        %v4607 = vsub.f32 %v4281, %v4606
        %v4608 = vand.u32 %v4607, 4294901760
        %v4609 = vsub.f32 %v4607, %v4608
        %v4610 = vand.u32 %v4609, 4294901760
        %4611 = vmatpush1.msra.mxu0 %v4610
        %v4612 = vand.u32 %v4297, 4294901760
        %v4613 = vsub.f32 %v4297, %v4612
        %v4614 = vand.u32 %v4613, 4294901760
        %v4615 = vsub.f32 %v4613, %v4614
        %v4616 = vand.u32 %v4615, 4294901760
        %4617 = vmatprep.subr.mxu0 %v4616
        %v4618 = vand.u32 %v4282, 4294901760
        %v4619 = vsub.f32 %v4282, %v4618
        %v4620 = vand.u32 %v4619, 4294901760
        %v4621 = vsub.f32 %v4619, %v4620
        %v4622 = vand.u32 %v4621, 4294901760
        %4623 = vmatpush1.msra.mxu0 %v4622
        %v4624 = vand.u32 %v4298, 4294901760
        %v4625 = vsub.f32 %v4298, %v4624
        %v4626 = vand.u32 %v4625, 4294901760
        %v4627 = vsub.f32 %v4625, %v4626
        %v4628 = vand.u32 %v4627, 4294901760
        %4629 = vmatprep.subr.mxu0 %v4628
        %v4630 = vand.u32 %v4283, 4294901760
        %v4631 = vsub.f32 %v4283, %v4630
        %v4632 = vand.u32 %v4631, 4294901760
        %v4633 = vsub.f32 %v4631, %v4632
        %v4634 = vand.u32 %v4633, 4294901760
        %4635 = vmatpush1.msra.mxu0 %v4634
        %v4636 = vand.u32 %v4299, 4294901760
        %v4637 = vsub.f32 %v4299, %v4636
        %v4638 = vand.u32 %v4637, 4294901760
        %v4639 = vsub.f32 %v4637, %v4638
        %v4640 = vand.u32 %v4639, 4294901760
        %4641 = vmatprep.subr.mxu0 %v4640
        %v4642 = vand.u32 %v4284, 4294901760
        %v4643 = vsub.f32 %v4284, %v4642
        %v4644 = vand.u32 %v4643, 4294901760
        %v4645 = vsub.f32 %v4643, %v4644
        %v4646 = vand.u32 %v4645, 4294901760
        %4647 = vmatpush1.msra.mxu0 %v4646
        %v4648 = vand.u32 %v4506, 4294901760
        %v4649 = vsub.f32 %v4506, %v4648
        %v4650 = vand.u32 %v4649, 4294901760
        %v4651 = vsub.f32 %v4649, %v4650
        %v4652 = vand.u32 %v4651, 4294901760
        %4653 = vmatprep.subr.mxu0 %v4652
        %v4654 = vand.u32 %v4503, 4294901760
        %v4655 = vsub.f32 %v4503, %v4654
        %v4656 = vand.u32 %v4655, 4294901760
        %v4657 = vsub.f32 %v4655, %v4656
        %v4658 = vand.u32 %v4657, 4294901760
        %4659 = vmatpush1.msra.mxu0 %v4658
        %4660 = vmatprep.subr.mxu0 0.0
        %4661 = vmatpush1.msra.mxu0 0.0
        %4662 = vmatprep.subr.mxu0 0.0
        %4663 = vmatpush1.msra.mxu0 0.0
        %4664 = vmatprep.subr.mxu0 0.0
        %4665 = vmatpush1.msra.mxu0 0.0
        %4666 = vmatprep.subr.mxu0 0.0
        %4667 = vmatpush1.msra.mxu0 0.0
        %4668 = vmatprep.subr.mxu0 0.0
        %4669 = vmatpush1.msra.mxu0 0.0
        %4670 = vmatprep.subr.mxu0 0.0
        %4671 = vmatpush1.msra.mxu0 0.0
        %4672 = vmatprep.subr.mxu0 0.0
        %4673 = vmatpush1.msra.mxu0 0.0
        %4674 = vmatprep.subr.mxu0 0.0
        %4675 = vmatpush1.msra.mxu0 0.0
        %4676 = vmatprep.subr.mxu0 0.0
        %4677 = vmatpush1.msra.mxu0 0.0
        %4678 = vmatprep.subr.mxu0 0.0
        %4679 = vmatpush1.msra.mxu0 0.0
        %4680 = vmatprep.subr.mxu0 0.0
        %4681 = vmatpush1.msra.mxu0 0.0
        %4682 = vmatprep.subr.mxu0 0.0
        %4683 = vmatpush1.msra.mxu0 0.0
        %4684 = vmatprep.subr.mxu0 0.0
        %4685 = vmatpush1.msra.mxu0 0.0
        %4686 = vmatprep.subr.mxu0 0.0
        %4687 = vmatpush1.msra.mxu0 0.0
        %4688 = vmatprep.subr.mxu0 0.0
        %4689 = vmatpush1.msra.mxu0 0.0
        %4690 = vmatprep.subr.mxu0 0.0
        %4691 = vmatpush1.msra.mxu0 0.0
        %4692 = vmatprep.subr.mxu0 0.0
        %4693 = vmatpush1.msra.mxu0 0.0
        %4694 = vmatprep.subr.mxu0 0.0
        %4695 = vmatpush1.msra.mxu0 0.0
        %4696 = vmatprep.subr.mxu0 0.0
        %4697 = vmatpush1.msra.mxu0 0.0
        %4698 = vmatprep.subr.mxu0 0.0
        %4699 = vmatpush1.msra.mxu0 0.0
        %4700 = vmatprep.subr.mxu0 0.0
        %4701 = vmatpush1.msra.mxu0 0.0
        %4702 = vmatprep.subr.mxu0 0.0
        %4703 = vmatpush1.msra.mxu0 0.0
        %4704 = vmatprep.subr.mxu0 0.0
        %4705 = vmatpush1.msra.mxu0 0.0
        %4706 = vmatprep.subr.mxu0 0.0
        %4707 = vmatpush1.msra.mxu0 0.0
        %4708 = vmatprep.subr.mxu0 0.0
        %4709 = vmatpush1.msra.mxu0 0.0
        %4710 = vmatprep.subr.mxu0 0.0
        %4711 = vmatpush1.msra.mxu0 0.0
        %4712 = vmatprep.subr.mxu0 0.0
        %4713 = vmatpush1.msra.mxu0 0.0
        %4714 = vmatprep.mubr.f32.mxu0 0.0
        %v4715 = vand.u32 %v4499, 4294901760
        %4716 = vmatmul.mubr.f32.gmra.mrb[0].mxu0 %v4715
        %v4717 = vpop.f32.mrb[0].mxu0
        %v4718 = vadd.f32 %v4596, %v4717
        %v4719 = vpop.f32.mrb[0].mxu0
        %v4720 = vadd.f32 %v4598, %v4719
        %4721 = vdwg.mxu0
        %v4722 = vand.u32 %v4296, 4294901760
        %v4723 = vsub.f32 %v4296, %v4722
        %4724 = vmatprep.subr.mxu0 %v4723
        %v4725 = vand.u32 %v4281, 4294901760
        %v4726 = vsub.f32 %v4281, %v4725
        %4727 = vmatpush1.msra.mxu0 %v4726
        %v4728 = vand.u32 %v4297, 4294901760
        %v4729 = vsub.f32 %v4297, %v4728
        %4730 = vmatprep.subr.mxu0 %v4729
        %v4731 = vand.u32 %v4282, 4294901760
        %v4732 = vsub.f32 %v4282, %v4731
        %4733 = vmatpush1.msra.mxu0 %v4732
        %v4734 = vand.u32 %v4298, 4294901760
        %v4735 = vsub.f32 %v4298, %v4734
        %4736 = vmatprep.subr.mxu0 %v4735
        %v4737 = vand.u32 %v4283, 4294901760
        %v4738 = vsub.f32 %v4283, %v4737
        %4739 = vmatpush1.msra.mxu0 %v4738
        %v4740 = vand.u32 %v4299, 4294901760
        %v4741 = vsub.f32 %v4299, %v4740
        %4742 = vmatprep.subr.mxu0 %v4741
        %v4743 = vand.u32 %v4284, 4294901760
        %v4744 = vsub.f32 %v4284, %v4743
        %4745 = vmatpush1.msra.mxu0 %v4744
        %v4746 = vand.u32 %v4506, 4294901760
        %v4747 = vsub.f32 %v4506, %v4746
        %4748 = vmatprep.subr.mxu0 %v4747
        %v4749 = vand.u32 %v4503, 4294901760
        %v4750 = vsub.f32 %v4503, %v4749
        %4751 = vmatpush1.msra.mxu0 %v4750
        %4752 = vmatprep.subr.mxu0 0.0
        %4753 = vmatpush1.msra.mxu0 0.0
        %4754 = vmatprep.subr.mxu0 0.0
        %4755 = vmatpush1.msra.mxu0 0.0
        %4756 = vmatprep.subr.mxu0 0.0
        %4757 = vmatpush1.msra.mxu0 0.0
        %4758 = vmatprep.subr.mxu0 0.0
        %4759 = vmatpush1.msra.mxu0 0.0
        %4760 = vmatprep.subr.mxu0 0.0
        %4761 = vmatpush1.msra.mxu0 0.0
        %4762 = vmatprep.subr.mxu0 0.0
        %4763 = vmatpush1.msra.mxu0 0.0
        %4764 = vmatprep.subr.mxu0 0.0
        %4765 = vmatpush1.msra.mxu0 0.0
        %4766 = vmatprep.subr.mxu0 0.0
        %4767 = vmatpush1.msra.mxu0 0.0
        %4768 = vmatprep.subr.mxu0 0.0
        %4769 = vmatpush1.msra.mxu0 0.0
        %4770 = vmatprep.subr.mxu0 0.0
        %4771 = vmatpush1.msra.mxu0 0.0
        %4772 = vmatprep.subr.mxu0 0.0
        %4773 = vmatpush1.msra.mxu0 0.0
        %4774 = vmatprep.subr.mxu0 0.0
        %4775 = vmatpush1.msra.mxu0 0.0
        %4776 = vmatprep.subr.mxu0 0.0
        %4777 = vmatpush1.msra.mxu0 0.0
        %4778 = vmatprep.subr.mxu0 0.0
        %4779 = vmatpush1.msra.mxu0 0.0
        %4780 = vmatprep.subr.mxu0 0.0
        %4781 = vmatpush1.msra.mxu0 0.0
        %4782 = vmatprep.subr.mxu0 0.0
        %4783 = vmatpush1.msra.mxu0 0.0
        %4784 = vmatprep.subr.mxu0 0.0
        %4785 = vmatpush1.msra.mxu0 0.0
        %4786 = vmatprep.subr.mxu0 0.0
        %4787 = vmatpush1.msra.mxu0 0.0
        %4788 = vmatprep.subr.mxu0 0.0
        %4789 = vmatpush1.msra.mxu0 0.0
        %4790 = vmatprep.subr.mxu0 0.0
        %4791 = vmatpush1.msra.mxu0 0.0
        %4792 = vmatprep.subr.mxu0 0.0
        %4793 = vmatpush1.msra.mxu0 0.0
        %4794 = vmatprep.subr.mxu0 0.0
        %4795 = vmatpush1.msra.mxu0 0.0
        %4796 = vmatprep.subr.mxu0 0.0
        %4797 = vmatpush1.msra.mxu0 0.0
        %4798 = vmatprep.subr.mxu0 0.0
        %4799 = vmatpush1.msra.mxu0 0.0
        %4800 = vmatprep.subr.mxu0 0.0
        %4801 = vmatpush1.msra.mxu0 0.0
        %4802 = vmatprep.subr.mxu0 0.0
        %4803 = vmatpush1.msra.mxu0 0.0
        %4804 = vmatprep.subr.mxu0 0.0
        %4805 = vmatpush1.msra.mxu0 0.0
        %4806 = vmatprep.mubr.f32.mxu0 0.0
        %v4807 = vand.u32 %v4499, 4294901760
        %v4808 = vsub.f32 %v4499, %v4807
        %4809 = vmatmul.mubr.f32.gmra.mrb[0].mxu0 %v4808
        %v4810 = vpop.f32.mrb[0].mxu0
        %v4811 = vadd.f32 %v4718, %v4810
        %v4812 = vpop.f32.mrb[0].mxu0
        %v4813 = vadd.f32 %v4720, %v4812
        %4814 = vdwg.mxu0
        %v4815 = vand.u32 %v4296, 4294901760
        %4816 = vmatprep.subr.mxu0 %v4815
        %v4817 = vand.u32 %v4281, 4294901760
        %4818 = vmatpush1.msra.mxu0 %v4817
        %v4819 = vand.u32 %v4297, 4294901760
        %4820 = vmatprep.subr.mxu0 %v4819
        %v4821 = vand.u32 %v4282, 4294901760
        %4822 = vmatpush1.msra.mxu0 %v4821
        %v4823 = vand.u32 %v4298, 4294901760
        %4824 = vmatprep.subr.mxu0 %v4823
        %v4825 = vand.u32 %v4283, 4294901760
        %4826 = vmatpush1.msra.mxu0 %v4825
        %v4827 = vand.u32 %v4299, 4294901760
        %4828 = vmatprep.subr.mxu0 %v4827
        %v4829 = vand.u32 %v4284, 4294901760
        %4830 = vmatpush1.msra.mxu0 %v4829
        %v4831 = vand.u32 %v4506, 4294901760
        %4832 = vmatprep.subr.mxu0 %v4831
        %v4833 = vand.u32 %v4503, 4294901760
        %4834 = vmatpush1.msra.mxu0 %v4833
        %4835 = vmatprep.subr.mxu0 0.0
        %4836 = vmatpush1.msra.mxu0 0.0
        %4837 = vmatprep.subr.mxu0 0.0
        %4838 = vmatpush1.msra.mxu0 0.0
        %4839 = vmatprep.subr.mxu0 0.0
        %4840 = vmatpush1.msra.mxu0 0.0
        %4841 = vmatprep.subr.mxu0 0.0
        %4842 = vmatpush1.msra.mxu0 0.0
        %4843 = vmatprep.subr.mxu0 0.0
        %4844 = vmatpush1.msra.mxu0 0.0
        %4845 = vmatprep.subr.mxu0 0.0
        %4846 = vmatpush1.msra.mxu0 0.0
        %4847 = vmatprep.subr.mxu0 0.0
        %4848 = vmatpush1.msra.mxu0 0.0
        %4849 = vmatprep.subr.mxu0 0.0
        %4850 = vmatpush1.msra.mxu0 0.0
        %4851 = vmatprep.subr.mxu0 0.0
        %4852 = vmatpush1.msra.mxu0 0.0
        %4853 = vmatprep.subr.mxu0 0.0
        %4854 = vmatpush1.msra.mxu0 0.0
        %4855 = vmatprep.subr.mxu0 0.0
        %4856 = vmatpush1.msra.mxu0 0.0
        %4857 = vmatprep.subr.mxu0 0.0
        %4858 = vmatpush1.msra.mxu0 0.0
        %4859 = vmatprep.subr.mxu0 0.0
        %4860 = vmatpush1.msra.mxu0 0.0
        %4861 = vmatprep.subr.mxu0 0.0
        %4862 = vmatpush1.msra.mxu0 0.0
        %4863 = vmatprep.subr.mxu0 0.0
        %4864 = vmatpush1.msra.mxu0 0.0
        %4865 = vmatprep.subr.mxu0 0.0
        %4866 = vmatpush1.msra.mxu0 0.0
        %4867 = vmatprep.subr.mxu0 0.0
        %4868 = vmatpush1.msra.mxu0 0.0
        %4869 = vmatprep.subr.mxu0 0.0
        %4870 = vmatpush1.msra.mxu0 0.0
        %4871 = vmatprep.subr.mxu0 0.0
        %4872 = vmatpush1.msra.mxu0 0.0
        %4873 = vmatprep.subr.mxu0 0.0
        %4874 = vmatpush1.msra.mxu0 0.0
        %4875 = vmatprep.subr.mxu0 0.0
        %4876 = vmatpush1.msra.mxu0 0.0
        %4877 = vmatprep.subr.mxu0 0.0
        %4878 = vmatpush1.msra.mxu0 0.0
        %4879 = vmatprep.subr.mxu0 0.0
        %4880 = vmatpush1.msra.mxu0 0.0
        %4881 = vmatprep.subr.mxu0 0.0
        %4882 = vmatpush1.msra.mxu0 0.0
        %4883 = vmatprep.subr.mxu0 0.0
        %4884 = vmatpush1.msra.mxu0 0.0
        %4885 = vmatprep.subr.mxu0 0.0
        %4886 = vmatpush1.msra.mxu0 0.0
        %4887 = vmatprep.subr.mxu0 0.0
        %4888 = vmatpush1.msra.mxu0 0.0
        %4889 = vmatprep.mubr.f32.mxu0 0.0
        %v4890 = vand.u32 %v4499, 4294901760
        %v4891 = vsub.f32 %v4499, %v4890
        %v4892 = vand.u32 %v4891, 4294901760
        %4893 = vmatmul.mubr.f32.gmra.mrb[0].mxu0 %v4892
        %v4894 = vpop.f32.mrb[0].mxu0
        %v4895 = vadd.f32 %v4811, %v4894
        %v4896 = vpop.f32.mrb[0].mxu0
        %v4897 = vadd.f32 %v4813, %v4896
        %4898 = vdwg.mxu0
        %v4899 = vand.u32 %v4296, 4294901760
        %v4900 = vsub.f32 %v4296, %v4899
        %v4901 = vand.u32 %v4900, 4294901760
        %4902 = vmatprep.subr.mxu0 %v4901
        %v4903 = vand.u32 %v4281, 4294901760
        %v4904 = vsub.f32 %v4281, %v4903
        %v4905 = vand.u32 %v4904, 4294901760
        %4906 = vmatpush1.msra.mxu0 %v4905
        %v4907 = vand.u32 %v4297, 4294901760
        %v4908 = vsub.f32 %v4297, %v4907
        %v4909 = vand.u32 %v4908, 4294901760
        %4910 = vmatprep.subr.mxu0 %v4909
        %v4911 = vand.u32 %v4282, 4294901760
        %v4912 = vsub.f32 %v4282, %v4911
        %v4913 = vand.u32 %v4912, 4294901760
        %4914 = vmatpush1.msra.mxu0 %v4913
        %v4915 = vand.u32 %v4298, 4294901760
        %v4916 = vsub.f32 %v4298, %v4915
        %v4917 = vand.u32 %v4916, 4294901760
        %4918 = vmatprep.subr.mxu0 %v4917
        %v4919 = vand.u32 %v4283, 4294901760
        %v4920 = vsub.f32 %v4283, %v4919
        %v4921 = vand.u32 %v4920, 4294901760
        %4922 = vmatpush1.msra.mxu0 %v4921
        %v4923 = vand.u32 %v4299, 4294901760
        %v4924 = vsub.f32 %v4299, %v4923
        %v4925 = vand.u32 %v4924, 4294901760
        %4926 = vmatprep.subr.mxu0 %v4925
        %v4927 = vand.u32 %v4284, 4294901760
        %v4928 = vsub.f32 %v4284, %v4927
        %v4929 = vand.u32 %v4928, 4294901760
        %4930 = vmatpush1.msra.mxu0 %v4929
        %v4931 = vand.u32 %v4506, 4294901760
        %v4932 = vsub.f32 %v4506, %v4931
        %v4933 = vand.u32 %v4932, 4294901760
        %4934 = vmatprep.subr.mxu0 %v4933
        %v4935 = vand.u32 %v4503, 4294901760
        %v4936 = vsub.f32 %v4503, %v4935
        %v4937 = vand.u32 %v4936, 4294901760
        %4938 = vmatpush1.msra.mxu0 %v4937
        %4939 = vmatprep.subr.mxu0 0.0
        %4940 = vmatpush1.msra.mxu0 0.0
        %4941 = vmatprep.subr.mxu0 0.0
        %4942 = vmatpush1.msra.mxu0 0.0
        %4943 = vmatprep.subr.mxu0 0.0
        %4944 = vmatpush1.msra.mxu0 0.0
        %4945 = vmatprep.subr.mxu0 0.0
        %4946 = vmatpush1.msra.mxu0 0.0
        %4947 = vmatprep.subr.mxu0 0.0
        %4948 = vmatpush1.msra.mxu0 0.0
        %4949 = vmatprep.subr.mxu0 0.0
        %4950 = vmatpush1.msra.mxu0 0.0
        %4951 = vmatprep.subr.mxu0 0.0
        %4952 = vmatpush1.msra.mxu0 0.0
        %4953 = vmatprep.subr.mxu0 0.0
        %4954 = vmatpush1.msra.mxu0 0.0
        %4955 = vmatprep.subr.mxu0 0.0
        %4956 = vmatpush1.msra.mxu0 0.0
        %4957 = vmatprep.subr.mxu0 0.0
        %4958 = vmatpush1.msra.mxu0 0.0
        %4959 = vmatprep.subr.mxu0 0.0
        %4960 = vmatpush1.msra.mxu0 0.0
        %4961 = vmatprep.subr.mxu0 0.0
        %4962 = vmatpush1.msra.mxu0 0.0
        %4963 = vmatprep.subr.mxu0 0.0
        %4964 = vmatpush1.msra.mxu0 0.0
        %4965 = vmatprep.subr.mxu0 0.0
        %4966 = vmatpush1.msra.mxu0 0.0
        %4967 = vmatprep.subr.mxu0 0.0
        %4968 = vmatpush1.msra.mxu0 0.0
        %4969 = vmatprep.subr.mxu0 0.0
        %4970 = vmatpush1.msra.mxu0 0.0
        %4971 = vmatprep.subr.mxu0 0.0
        %4972 = vmatpush1.msra.mxu0 0.0
        %4973 = vmatprep.subr.mxu0 0.0
        %4974 = vmatpush1.msra.mxu0 0.0
        %4975 = vmatprep.subr.mxu0 0.0
        %4976 = vmatpush1.msra.mxu0 0.0
        %4977 = vmatprep.subr.mxu0 0.0
        %4978 = vmatpush1.msra.mxu0 0.0
        %4979 = vmatprep.subr.mxu0 0.0
        %4980 = vmatpush1.msra.mxu0 0.0
        %4981 = vmatprep.subr.mxu0 0.0
        %4982 = vmatpush1.msra.mxu0 0.0
        %4983 = vmatprep.subr.mxu0 0.0
        %4984 = vmatpush1.msra.mxu0 0.0
        %4985 = vmatprep.subr.mxu0 0.0
        %4986 = vmatpush1.msra.mxu0 0.0
        %4987 = vmatprep.subr.mxu0 0.0
        %4988 = vmatpush1.msra.mxu0 0.0
        %4989 = vmatprep.subr.mxu0 0.0
        %4990 = vmatpush1.msra.mxu0 0.0
        %4991 = vmatprep.subr.mxu0 0.0
        %4992 = vmatpush1.msra.mxu0 0.0
        %4993 = vmatprep.mubr.f32.mxu0 0.0
        %v4994 = vand.u32 %v4499, 4294901760
        %4995 = vmatmul.mubr.f32.gmra.mrb[0].mxu0 %v4994
        %v4996 = vpop.f32.mrb[0].mxu0
        %v4997 = vadd.f32 %v4895, %v4996
        %v4998 = vpop.f32.mrb[0].mxu0
        %v4999 = vadd.f32 %v4897, %v4998
        %5000 = vdwg.mxu0
        %v5001 = vand.u32 %v4296, 4294901760
        %5002 = vmatprep.subr.mxu0 %v5001
        %v5003 = vand.u32 %v4281, 4294901760
        %5004 = vmatpush1.msra.mxu0 %v5003
        %v5005 = vand.u32 %v4297, 4294901760
        %5006 = vmatprep.subr.mxu0 %v5005
        %v5007 = vand.u32 %v4282, 4294901760
        %5008 = vmatpush1.msra.mxu0 %v5007
        %v5009 = vand.u32 %v4298, 4294901760
        %5010 = vmatprep.subr.mxu0 %v5009
        %v5011 = vand.u32 %v4283, 4294901760
        %5012 = vmatpush1.msra.mxu0 %v5011
        %v5013 = vand.u32 %v4299, 4294901760
        %5014 = vmatprep.subr.mxu0 %v5013
        %v5015 = vand.u32 %v4284, 4294901760
        %5016 = vmatpush1.msra.mxu0 %v5015
        %v5017 = vand.u32 %v4506, 4294901760
        %5018 = vmatprep.subr.mxu0 %v5017
        %v5019 = vand.u32 %v4503, 4294901760
        %5020 = vmatpush1.msra.mxu0 %v5019
        %5021 = vmatprep.subr.mxu0 0.0
        %5022 = vmatpush1.msra.mxu0 0.0
        %5023 = vmatprep.subr.mxu0 0.0
        %5024 = vmatpush1.msra.mxu0 0.0
        %5025 = vmatprep.subr.mxu0 0.0
        %5026 = vmatpush1.msra.mxu0 0.0
        %5027 = vmatprep.subr.mxu0 0.0
        %5028 = vmatpush1.msra.mxu0 0.0
        %5029 = vmatprep.subr.mxu0 0.0
        %5030 = vmatpush1.msra.mxu0 0.0
        %5031 = vmatprep.subr.mxu0 0.0
        %5032 = vmatpush1.msra.mxu0 0.0
        %5033 = vmatprep.subr.mxu0 0.0
        %5034 = vmatpush1.msra.mxu0 0.0
        %5035 = vmatprep.subr.mxu0 0.0
        %5036 = vmatpush1.msra.mxu0 0.0
        %5037 = vmatprep.subr.mxu0 0.0
        %5038 = vmatpush1.msra.mxu0 0.0
        %5039 = vmatprep.subr.mxu0 0.0
        %5040 = vmatpush1.msra.mxu0 0.0
        %5041 = vmatprep.subr.mxu0 0.0
        %5042 = vmatpush1.msra.mxu0 0.0
        %5043 = vmatprep.subr.mxu0 0.0
        %5044 = vmatpush1.msra.mxu0 0.0
        %5045 = vmatprep.subr.mxu0 0.0
        %5046 = vmatpush1.msra.mxu0 0.0
        %5047 = vmatprep.subr.mxu0 0.0
        %5048 = vmatpush1.msra.mxu0 0.0
        %5049 = vmatprep.subr.mxu0 0.0
        %5050 = vmatpush1.msra.mxu0 0.0
        %5051 = vmatprep.subr.mxu0 0.0
        %5052 = vmatpush1.msra.mxu0 0.0
        %5053 = vmatprep.subr.mxu0 0.0
        %5054 = vmatpush1.msra.mxu0 0.0
        %5055 = vmatprep.subr.mxu0 0.0
        %5056 = vmatpush1.msra.mxu0 0.0
        %5057 = vmatprep.subr.mxu0 0.0
        %5058 = vmatpush1.msra.mxu0 0.0
        %5059 = vmatprep.subr.mxu0 0.0
        %5060 = vmatpush1.msra.mxu0 0.0
        %5061 = vmatprep.subr.mxu0 0.0
        %5062 = vmatpush1.msra.mxu0 0.0
        %5063 = vmatprep.subr.mxu0 0.0
        %5064 = vmatpush1.msra.mxu0 0.0
        %5065 = vmatprep.subr.mxu0 0.0
        %5066 = vmatpush1.msra.mxu0 0.0
        %5067 = vmatprep.subr.mxu0 0.0
        %5068 = vmatpush1.msra.mxu0 0.0
        %5069 = vmatprep.subr.mxu0 0.0
        %5070 = vmatpush1.msra.mxu0 0.0
        %5071 = vmatprep.subr.mxu0 0.0
        %5072 = vmatpush1.msra.mxu0 0.0
        %5073 = vmatprep.subr.mxu0 0.0
        %5074 = vmatpush1.msra.mxu0 0.0
        %5075 = vmatprep.mubr.f32.mxu0 0.0
        %v5076 = vand.u32 %v4499, 4294901760
        %5077 = vmatmul.mubr.f32.gmra.mrb[0].mxu0 %v5076
        %v5078 = vpop.f32.mrb[0].mxu0
        %v5079 = vadd.f32 %v4997, %v5078
        %v5080 = vpop.f32.mrb[0].mxu0
        %v5081 = vadd.f32 %v4999, %v5080
        %5082 = vdwg.mxu0
        %v5083 = vand.u32 %v4326, 4294901760
        %5084 = vmatprep.subr.mxu0 %v5083
        %v5085 = vand.u32 %v4311, 4294901760
        %5086 = vmatpush1.msra.mxu0 %v5085
        %v5087 = vand.u32 %v4327, 4294901760
        %5088 = vmatprep.subr.mxu0 %v5087
        %v5089 = vand.u32 %v4312, 4294901760
        %5090 = vmatpush1.msra.mxu0 %v5089
        %v5091 = vand.u32 %v4328, 4294901760
        %5092 = vmatprep.subr.mxu0 %v5091
        %v5093 = vand.u32 %v4313, 4294901760
        %5094 = vmatpush1.msra.mxu0 %v5093
        %v5095 = vand.u32 %v4329, 4294901760
        %5096 = vmatprep.subr.mxu0 %v5095
        %v5097 = vand.u32 %v4314, 4294901760
        %5098 = vmatpush1.msra.mxu0 %v5097
        %v5099 = vand.u32 %v4512, 4294901760
        %5100 = vmatprep.subr.mxu0 %v5099
        %v5101 = vand.u32 %v4509, 4294901760
        %5102 = vmatpush1.msra.mxu0 %v5101
        %5103 = vmatprep.subr.mxu0 0.0
        %5104 = vmatpush1.msra.mxu0 0.0
        %5105 = vmatprep.subr.mxu0 0.0
        %5106 = vmatpush1.msra.mxu0 0.0
        %5107 = vmatprep.subr.mxu0 0.0
        %5108 = vmatpush1.msra.mxu0 0.0
        %5109 = vmatprep.subr.mxu0 0.0
        %5110 = vmatpush1.msra.mxu0 0.0
        %5111 = vmatprep.subr.mxu0 0.0
        %5112 = vmatpush1.msra.mxu0 0.0
        %5113 = vmatprep.subr.mxu0 0.0
        %5114 = vmatpush1.msra.mxu0 0.0
        %5115 = vmatprep.subr.mxu0 0.0
        %5116 = vmatpush1.msra.mxu0 0.0
        %5117 = vmatprep.subr.mxu0 0.0
        %5118 = vmatpush1.msra.mxu0 0.0
        %5119 = vmatprep.subr.mxu0 0.0
        %5120 = vmatpush1.msra.mxu0 0.0
        %5121 = vmatprep.subr.mxu0 0.0
        %5122 = vmatpush1.msra.mxu0 0.0
        %5123 = vmatprep.subr.mxu0 0.0
        %5124 = vmatpush1.msra.mxu0 0.0
        %5125 = vmatprep.subr.mxu0 0.0
        %5126 = vmatpush1.msra.mxu0 0.0
        %5127 = vmatprep.subr.mxu0 0.0
        %5128 = vmatpush1.msra.mxu0 0.0
        %5129 = vmatprep.subr.mxu0 0.0
        %5130 = vmatpush1.msra.mxu0 0.0
        %5131 = vmatprep.subr.mxu0 0.0
        %5132 = vmatpush1.msra.mxu0 0.0
        %5133 = vmatprep.subr.mxu0 0.0
        %5134 = vmatpush1.msra.mxu0 0.0
        %5135 = vmatprep.subr.mxu0 0.0
        %5136 = vmatpush1.msra.mxu0 0.0
        %5137 = vmatprep.subr.mxu0 0.0
        %5138 = vmatpush1.msra.mxu0 0.0
        %5139 = vmatprep.subr.mxu0 0.0
        %5140 = vmatpush1.msra.mxu0 0.0
        %5141 = vmatprep.subr.mxu0 0.0
        %5142 = vmatpush1.msra.mxu0 0.0
        %5143 = vmatprep.subr.mxu0 0.0
        %5144 = vmatpush1.msra.mxu0 0.0
        %5145 = vmatprep.subr.mxu0 0.0
        %5146 = vmatpush1.msra.mxu0 0.0
        %5147 = vmatprep.subr.mxu0 0.0
        %5148 = vmatpush1.msra.mxu0 0.0
        %5149 = vmatprep.subr.mxu0 0.0
        %5150 = vmatpush1.msra.mxu0 0.0
        %5151 = vmatprep.subr.mxu0 0.0
        %5152 = vmatpush1.msra.mxu0 0.0
        %5153 = vmatprep.subr.mxu0 0.0
        %5154 = vmatpush1.msra.mxu0 0.0
        %5155 = vmatprep.subr.mxu0 0.0
        %5156 = vmatpush1.msra.mxu0 0.0
        %5157 = vmatprep.mubr.f32.mxu0 0.0
        %v5158 = vand.u32 %v4499, 4294901760
        %v5159 = vsub.f32 %v4499, %v5158
        %v5160 = vand.u32 %v5159, 4294901760
        %v5161 = vsub.f32 %v5159, %v5160
        %v5162 = vand.u32 %v5161, 4294901760
        %5163 = vmatmul.mubr.f32.gmra.mrb[0].mxu0 %v5162
        %v5164 = vpop.f32.mrb[0].mxu0
        %v5165 = vadd.f32 %v4493, %v5164
        %v5166 = vpop.f32.mrb[0].mxu0
        %v5167 = vadd.f32 %v4496, %v5166
        %5168 = vdwg.mxu0
        %v5169 = vand.u32 %v4326, 4294901760
        %v5170 = vsub.f32 %v4326, %v5169
        %v5171 = vand.u32 %v5170, 4294901760
        %v5172 = vsub.f32 %v5170, %v5171
        %v5173 = vand.u32 %v5172, 4294901760
        %5174 = vmatprep.subr.mxu0 %v5173
        %v5175 = vand.u32 %v4311, 4294901760
        %v5176 = vsub.f32 %v4311, %v5175
        %v5177 = vand.u32 %v5176, 4294901760
        %v5178 = vsub.f32 %v5176, %v5177
        %v5179 = vand.u32 %v5178, 4294901760
        %5180 = vmatpush1.msra.mxu0 %v5179
        %v5181 = vand.u32 %v4327, 4294901760
        %v5182 = vsub.f32 %v4327, %v5181
        %v5183 = vand.u32 %v5182, 4294901760
        %v5184 = vsub.f32 %v5182, %v5183
        %v5185 = vand.u32 %v5184, 4294901760
        %5186 = vmatprep.subr.mxu0 %v5185
        %v5187 = vand.u32 %v4312, 4294901760
        %v5188 = vsub.f32 %v4312, %v5187
        %v5189 = vand.u32 %v5188, 4294901760
        %v5190 = vsub.f32 %v5188, %v5189
        %v5191 = vand.u32 %v5190, 4294901760
        %5192 = vmatpush1.msra.mxu0 %v5191
        %v5193 = vand.u32 %v4328, 4294901760
        %v5194 = vsub.f32 %v4328, %v5193
        %v5195 = vand.u32 %v5194, 4294901760
        %v5196 = vsub.f32 %v5194, %v5195
        %v5197 = vand.u32 %v5196, 4294901760
        %5198 = vmatprep.subr.mxu0 %v5197
        %v5199 = vand.u32 %v4313, 4294901760
        %v5200 = vsub.f32 %v4313, %v5199
        %v5201 = vand.u32 %v5200, 4294901760
        %v5202 = vsub.f32 %v5200, %v5201
        %v5203 = vand.u32 %v5202, 4294901760
        %5204 = vmatpush1.msra.mxu0 %v5203
        %v5205 = vand.u32 %v4329, 4294901760
        %v5206 = vsub.f32 %v4329, %v5205
        %v5207 = vand.u32 %v5206, 4294901760
        %v5208 = vsub.f32 %v5206, %v5207
        %v5209 = vand.u32 %v5208, 4294901760
        %5210 = vmatprep.subr.mxu0 %v5209
        %v5211 = vand.u32 %v4314, 4294901760
        %v5212 = vsub.f32 %v4314, %v5211
        %v5213 = vand.u32 %v5212, 4294901760
        %v5214 = vsub.f32 %v5212, %v5213
        %v5215 = vand.u32 %v5214, 4294901760
        %5216 = vmatpush1.msra.mxu0 %v5215
        %v5217 = vand.u32 %v4512, 4294901760
        %v5218 = vsub.f32 %v4512, %v5217
        %v5219 = vand.u32 %v5218, 4294901760
        %v5220 = vsub.f32 %v5218, %v5219
        %v5221 = vand.u32 %v5220, 4294901760
        %5222 = vmatprep.subr.mxu0 %v5221
        %v5223 = vand.u32 %v4509, 4294901760
        %v5224 = vsub.f32 %v4509, %v5223
        %v5225 = vand.u32 %v5224, 4294901760
        %v5226 = vsub.f32 %v5224, %v5225
        %v5227 = vand.u32 %v5226, 4294901760
        %5228 = vmatpush1.msra.mxu0 %v5227
        %5229 = vmatprep.subr.mxu0 0.0
        %5230 = vmatpush1.msra.mxu0 0.0
        %5231 = vmatprep.subr.mxu0 0.0
        %5232 = vmatpush1.msra.mxu0 0.0
        %5233 = vmatprep.subr.mxu0 0.0
        %5234 = vmatpush1.msra.mxu0 0.0
        %5235 = vmatprep.subr.mxu0 0.0
        %5236 = vmatpush1.msra.mxu0 0.0
        %5237 = vmatprep.subr.mxu0 0.0
        %5238 = vmatpush1.msra.mxu0 0.0
        %5239 = vmatprep.subr.mxu0 0.0
        %5240 = vmatpush1.msra.mxu0 0.0
        %5241 = vmatprep.subr.mxu0 0.0
        %5242 = vmatpush1.msra.mxu0 0.0
        %5243 = vmatprep.subr.mxu0 0.0
        %5244 = vmatpush1.msra.mxu0 0.0
        %5245 = vmatprep.subr.mxu0 0.0
        %5246 = vmatpush1.msra.mxu0 0.0
        %5247 = vmatprep.subr.mxu0 0.0
        %5248 = vmatpush1.msra.mxu0 0.0
        %5249 = vmatprep.subr.mxu0 0.0
        %5250 = vmatpush1.msra.mxu0 0.0
        %5251 = vmatprep.subr.mxu0 0.0
        %5252 = vmatpush1.msra.mxu0 0.0
        %5253 = vmatprep.subr.mxu0 0.0
        %5254 = vmatpush1.msra.mxu0 0.0
        %5255 = vmatprep.subr.mxu0 0.0
        %5256 = vmatpush1.msra.mxu0 0.0
        %5257 = vmatprep.subr.mxu0 0.0
        %5258 = vmatpush1.msra.mxu0 0.0
        %5259 = vmatprep.subr.mxu0 0.0
        %5260 = vmatpush1.msra.mxu0 0.0
        %5261 = vmatprep.subr.mxu0 0.0
        %5262 = vmatpush1.msra.mxu0 0.0
        %5263 = vmatprep.subr.mxu0 0.0
        %5264 = vmatpush1.msra.mxu0 0.0
        %5265 = vmatprep.subr.mxu0 0.0
        %5266 = vmatpush1.msra.mxu0 0.0
        %5267 = vmatprep.subr.mxu0 0.0
        %5268 = vmatpush1.msra.mxu0 0.0
        %5269 = vmatprep.subr.mxu0 0.0
        %5270 = vmatpush1.msra.mxu0 0.0
        %5271 = vmatprep.subr.mxu0 0.0
        %5272 = vmatpush1.msra.mxu0 0.0
        %5273 = vmatprep.subr.mxu0 0.0
        %5274 = vmatpush1.msra.mxu0 0.0
        %5275 = vmatprep.subr.mxu0 0.0
        %5276 = vmatpush1.msra.mxu0 0.0
        %5277 = vmatprep.subr.mxu0 0.0
        %5278 = vmatpush1.msra.mxu0 0.0
        %5279 = vmatprep.subr.mxu0 0.0
        %5280 = vmatpush1.msra.mxu0 0.0
        %5281 = vmatprep.subr.mxu0 0.0
        %5282 = vmatpush1.msra.mxu0 0.0
        %5283 = vmatprep.mubr.f32.mxu0 0.0
        %v5284 = vand.u32 %v4499, 4294901760
        %5285 = vmatmul.mubr.f32.gmra.mrb[0].mxu0 %v5284
        %v5286 = vpop.f32.mrb[0].mxu0
        %v5287 = vadd.f32 %v5165, %v5286
        %v5288 = vpop.f32.mrb[0].mxu0
        %v5289 = vadd.f32 %v5167, %v5288
        %5290 = vdwg.mxu0
        %v5291 = vand.u32 %v4326, 4294901760
        %v5292 = vsub.f32 %v4326, %v5291
        %5293 = vmatprep.subr.mxu0 %v5292
        %v5294 = vand.u32 %v4311, 4294901760
        %v5295 = vsub.f32 %v4311, %v5294
        %5296 = vmatpush1.msra.mxu0 %v5295
        %v5297 = vand.u32 %v4327, 4294901760
        %v5298 = vsub.f32 %v4327, %v5297
        %5299 = vmatprep.subr.mxu0 %v5298
        %v5300 = vand.u32 %v4312, 4294901760
        %v5301 = vsub.f32 %v4312, %v5300
        %5302 = vmatpush1.msra.mxu0 %v5301
        %v5303 = vand.u32 %v4328, 4294901760
        %v5304 = vsub.f32 %v4328, %v5303
        %5305 = vmatprep.subr.mxu0 %v5304
        %v5306 = vand.u32 %v4313, 4294901760
        %v5307 = vsub.f32 %v4313, %v5306
        %5308 = vmatpush1.msra.mxu0 %v5307
        %v5309 = vand.u32 %v4329, 4294901760
        %v5310 = vsub.f32 %v4329, %v5309
        %5311 = vmatprep.subr.mxu0 %v5310
        %v5312 = vand.u32 %v4314, 4294901760
        %v5313 = vsub.f32 %v4314, %v5312
        %5314 = vmatpush1.msra.mxu0 %v5313
        %v5315 = vand.u32 %v4512, 4294901760
        %v5316 = vsub.f32 %v4512, %v5315
        %5317 = vmatprep.subr.mxu0 %v5316
        %v5318 = vand.u32 %v4509, 4294901760
        %v5319 = vsub.f32 %v4509, %v5318
        %5320 = vmatpush1.msra.mxu0 %v5319
        %5321 = vmatprep.subr.mxu0 0.0
        %5322 = vmatpush1.msra.mxu0 0.0
        %5323 = vmatprep.subr.mxu0 0.0
        %5324 = vmatpush1.msra.mxu0 0.0
        %5325 = vmatprep.subr.mxu0 0.0
        %5326 = vmatpush1.msra.mxu0 0.0
        %5327 = vmatprep.subr.mxu0 0.0
        %5328 = vmatpush1.msra.mxu0 0.0
        %5329 = vmatprep.subr.mxu0 0.0
        %5330 = vmatpush1.msra.mxu0 0.0
        %5331 = vmatprep.subr.mxu0 0.0
        %5332 = vmatpush1.msra.mxu0 0.0
        %5333 = vmatprep.subr.mxu0 0.0
        %5334 = vmatpush1.msra.mxu0 0.0
        %5335 = vmatprep.subr.mxu0 0.0
        %5336 = vmatpush1.msra.mxu0 0.0
        %5337 = vmatprep.subr.mxu0 0.0
        %5338 = vmatpush1.msra.mxu0 0.0
        %5339 = vmatprep.subr.mxu0 0.0
        %5340 = vmatpush1.msra.mxu0 0.0
        %5341 = vmatprep.subr.mxu0 0.0
        %5342 = vmatpush1.msra.mxu0 0.0
        %5343 = vmatprep.subr.mxu0 0.0
        %5344 = vmatpush1.msra.mxu0 0.0
        %5345 = vmatprep.subr.mxu0 0.0
        %5346 = vmatpush1.msra.mxu0 0.0
        %5347 = vmatprep.subr.mxu0 0.0
        %5348 = vmatpush1.msra.mxu0 0.0
        %5349 = vmatprep.subr.mxu0 0.0
        %5350 = vmatpush1.msra.mxu0 0.0
        %5351 = vmatprep.subr.mxu0 0.0
        %5352 = vmatpush1.msra.mxu0 0.0
        %5353 = vmatprep.subr.mxu0 0.0
        %5354 = vmatpush1.msra.mxu0 0.0
        %5355 = vmatprep.subr.mxu0 0.0
        %5356 = vmatpush1.msra.mxu0 0.0
        %5357 = vmatprep.subr.mxu0 0.0
        %5358 = vmatpush1.msra.mxu0 0.0
        %5359 = vmatprep.subr.mxu0 0.0
        %5360 = vmatpush1.msra.mxu0 0.0
        %5361 = vmatprep.subr.mxu0 0.0
        %5362 = vmatpush1.msra.mxu0 0.0
        %5363 = vmatprep.subr.mxu0 0.0
        %5364 = vmatpush1.msra.mxu0 0.0
        %5365 = vmatprep.subr.mxu0 0.0
        %5366 = vmatpush1.msra.mxu0 0.0
        %5367 = vmatprep.subr.mxu0 0.0
        %5368 = vmatpush1.msra.mxu0 0.0
        %5369 = vmatprep.subr.mxu0 0.0
        %5370 = vmatpush1.msra.mxu0 0.0
        %5371 = vmatprep.subr.mxu0 0.0
        %5372 = vmatpush1.msra.mxu0 0.0
        %5373 = vmatprep.subr.mxu0 0.0
        %5374 = vmatpush1.msra.mxu0 0.0
        %5375 = vmatprep.mubr.f32.mxu0 0.0
        %v5376 = vand.u32 %v4499, 4294901760
        %v5377 = vsub.f32 %v4499, %v5376
        %5378 = vmatmul.mubr.f32.gmra.mrb[0].mxu0 %v5377
        %v5379 = vpop.f32.mrb[0].mxu0
        %v5380 = vadd.f32 %v5287, %v5379
        %v5381 = vpop.f32.mrb[0].mxu0
        %v5382 = vadd.f32 %v5289, %v5381
        %5383 = vdwg.mxu0
        %v5384 = vand.u32 %v4326, 4294901760
        %5385 = vmatprep.subr.mxu0 %v5384
        %v5386 = vand.u32 %v4311, 4294901760
        %5387 = vmatpush1.msra.mxu0 %v5386
        %v5388 = vand.u32 %v4327, 4294901760
        %5389 = vmatprep.subr.mxu0 %v5388
        %v5390 = vand.u32 %v4312, 4294901760
        %5391 = vmatpush1.msra.mxu0 %v5390
        %v5392 = vand.u32 %v4328, 4294901760
        %5393 = vmatprep.subr.mxu0 %v5392
        %v5394 = vand.u32 %v4313, 4294901760
        %5395 = vmatpush1.msra.mxu0 %v5394
        %v5396 = vand.u32 %v4329, 4294901760
        %5397 = vmatprep.subr.mxu0 %v5396
        %v5398 = vand.u32 %v4314, 4294901760
        %5399 = vmatpush1.msra.mxu0 %v5398
        %v5400 = vand.u32 %v4512, 4294901760
        %5401 = vmatprep.subr.mxu0 %v5400
        %v5402 = vand.u32 %v4509, 4294901760
        %5403 = vmatpush1.msra.mxu0 %v5402
        %5404 = vmatprep.subr.mxu0 0.0
        %5405 = vmatpush1.msra.mxu0 0.0
        %5406 = vmatprep.subr.mxu0 0.0
        %5407 = vmatpush1.msra.mxu0 0.0
        %5408 = vmatprep.subr.mxu0 0.0
        %5409 = vmatpush1.msra.mxu0 0.0
        %5410 = vmatprep.subr.mxu0 0.0
        %5411 = vmatpush1.msra.mxu0 0.0
        %5412 = vmatprep.subr.mxu0 0.0
        %5413 = vmatpush1.msra.mxu0 0.0
        %5414 = vmatprep.subr.mxu0 0.0
        %5415 = vmatpush1.msra.mxu0 0.0
        %5416 = vmatprep.subr.mxu0 0.0
        %5417 = vmatpush1.msra.mxu0 0.0
        %5418 = vmatprep.subr.mxu0 0.0
        %5419 = vmatpush1.msra.mxu0 0.0
        %5420 = vmatprep.subr.mxu0 0.0
        %5421 = vmatpush1.msra.mxu0 0.0
        %5422 = vmatprep.subr.mxu0 0.0
        %5423 = vmatpush1.msra.mxu0 0.0
        %5424 = vmatprep.subr.mxu0 0.0
        %5425 = vmatpush1.msra.mxu0 0.0
        %5426 = vmatprep.subr.mxu0 0.0
        %5427 = vmatpush1.msra.mxu0 0.0
        %5428 = vmatprep.subr.mxu0 0.0
        %5429 = vmatpush1.msra.mxu0 0.0
        %5430 = vmatprep.subr.mxu0 0.0
        %5431 = vmatpush1.msra.mxu0 0.0
        %5432 = vmatprep.subr.mxu0 0.0
        %5433 = vmatpush1.msra.mxu0 0.0
        %5434 = vmatprep.subr.mxu0 0.0
        %5435 = vmatpush1.msra.mxu0 0.0
        %5436 = vmatprep.subr.mxu0 0.0
        %5437 = vmatpush1.msra.mxu0 0.0
        %5438 = vmatprep.subr.mxu0 0.0
        %5439 = vmatpush1.msra.mxu0 0.0
        %5440 = vmatprep.subr.mxu0 0.0
        %5441 = vmatpush1.msra.mxu0 0.0
        %5442 = vmatprep.subr.mxu0 0.0
        %5443 = vmatpush1.msra.mxu0 0.0
        %5444 = vmatprep.subr.mxu0 0.0
        %5445 = vmatpush1.msra.mxu0 0.0
        %5446 = vmatprep.subr.mxu0 0.0
        %5447 = vmatpush1.msra.mxu0 0.0
        %5448 = vmatprep.subr.mxu0 0.0
        %5449 = vmatpush1.msra.mxu0 0.0
        %5450 = vmatprep.subr.mxu0 0.0
        %5451 = vmatpush1.msra.mxu0 0.0
        %5452 = vmatprep.subr.mxu0 0.0
        %5453 = vmatpush1.msra.mxu0 0.0
        %5454 = vmatprep.subr.mxu0 0.0
        %5455 = vmatpush1.msra.mxu0 0.0
        %5456 = vmatprep.subr.mxu0 0.0
        %5457 = vmatpush1.msra.mxu0 0.0
        %5458 = vmatprep.mubr.f32.mxu0 0.0
        %v5459 = vand.u32 %v4499, 4294901760
        %v5460 = vsub.f32 %v4499, %v5459
        %v5461 = vand.u32 %v5460, 4294901760
        %5462 = vmatmul.mubr.f32.gmra.mrb[0].mxu0 %v5461
        %v5463 = vpop.f32.mrb[0].mxu0
        %v5464 = vadd.f32 %v5380, %v5463
        %v5465 = vpop.f32.mrb[0].mxu0
        %v5466 = vadd.f32 %v5382, %v5465
        %5467 = vdwg.mxu0
        %v5468 = vand.u32 %v4326, 4294901760
        %v5469 = vsub.f32 %v4326, %v5468
        %v5470 = vand.u32 %v5469, 4294901760
        %5471 = vmatprep.subr.mxu0 %v5470
        %v5472 = vand.u32 %v4311, 4294901760
        %v5473 = vsub.f32 %v4311, %v5472
        %v5474 = vand.u32 %v5473, 4294901760
        %5475 = vmatpush1.msra.mxu0 %v5474
        %v5476 = vand.u32 %v4327, 4294901760
        %v5477 = vsub.f32 %v4327, %v5476
        %v5478 = vand.u32 %v5477, 4294901760
        %5479 = vmatprep.subr.mxu0 %v5478
        %v5480 = vand.u32 %v4312, 4294901760
        %v5481 = vsub.f32 %v4312, %v5480
        %v5482 = vand.u32 %v5481, 4294901760
        %5483 = vmatpush1.msra.mxu0 %v5482
        %v5484 = vand.u32 %v4328, 4294901760
        %v5485 = vsub.f32 %v4328, %v5484
        %v5486 = vand.u32 %v5485, 4294901760
        %5487 = vmatprep.subr.mxu0 %v5486
        %v5488 = vand.u32 %v4313, 4294901760
        %v5489 = vsub.f32 %v4313, %v5488
        %v5490 = vand.u32 %v5489, 4294901760
        %5491 = vmatpush1.msra.mxu0 %v5490
        %v5492 = vand.u32 %v4329, 4294901760
        %v5493 = vsub.f32 %v4329, %v5492
        %v5494 = vand.u32 %v5493, 4294901760
        %5495 = vmatprep.subr.mxu0 %v5494
        %v5496 = vand.u32 %v4314, 4294901760
        %v5497 = vsub.f32 %v4314, %v5496
        %v5498 = vand.u32 %v5497, 4294901760
        %5499 = vmatpush1.msra.mxu0 %v5498
        %v5500 = vand.u32 %v4512, 4294901760
        %v5501 = vsub.f32 %v4512, %v5500
        %v5502 = vand.u32 %v5501, 4294901760
        %5503 = vmatprep.subr.mxu0 %v5502
        %v5504 = vand.u32 %v4509, 4294901760
        %v5505 = vsub.f32 %v4509, %v5504
        %v5506 = vand.u32 %v5505, 4294901760
        %5507 = vmatpush1.msra.mxu0 %v5506
        %5508 = vmatprep.subr.mxu0 0.0
        %5509 = vmatpush1.msra.mxu0 0.0
        %5510 = vmatprep.subr.mxu0 0.0
        %5511 = vmatpush1.msra.mxu0 0.0
        %5512 = vmatprep.subr.mxu0 0.0
        %5513 = vmatpush1.msra.mxu0 0.0
        %5514 = vmatprep.subr.mxu0 0.0
        %5515 = vmatpush1.msra.mxu0 0.0
        %5516 = vmatprep.subr.mxu0 0.0
        %5517 = vmatpush1.msra.mxu0 0.0
        %5518 = vmatprep.subr.mxu0 0.0
        %5519 = vmatpush1.msra.mxu0 0.0
        %5520 = vmatprep.subr.mxu0 0.0
        %5521 = vmatpush1.msra.mxu0 0.0
        %5522 = vmatprep.subr.mxu0 0.0
        %5523 = vmatpush1.msra.mxu0 0.0
        %5524 = vmatprep.subr.mxu0 0.0
        %5525 = vmatpush1.msra.mxu0 0.0
        %5526 = vmatprep.subr.mxu0 0.0
        %5527 = vmatpush1.msra.mxu0 0.0
        %5528 = vmatprep.subr.mxu0 0.0
        %5529 = vmatpush1.msra.mxu0 0.0
        %5530 = vmatprep.subr.mxu0 0.0
        %5531 = vmatpush1.msra.mxu0 0.0
        %5532 = vmatprep.subr.mxu0 0.0
        %5533 = vmatpush1.msra.mxu0 0.0
        %5534 = vmatprep.subr.mxu0 0.0
        %5535 = vmatpush1.msra.mxu0 0.0
        %5536 = vmatprep.subr.mxu0 0.0
        %5537 = vmatpush1.msra.mxu0 0.0
        %5538 = vmatprep.subr.mxu0 0.0
        %5539 = vmatpush1.msra.mxu0 0.0
        %5540 = vmatprep.subr.mxu0 0.0
        %5541 = vmatpush1.msra.mxu0 0.0
        %5542 = vmatprep.subr.mxu0 0.0
        %5543 = vmatpush1.msra.mxu0 0.0
        %5544 = vmatprep.subr.mxu0 0.0
        %5545 = vmatpush1.msra.mxu0 0.0
        %5546 = vmatprep.subr.mxu0 0.0
        %5547 = vmatpush1.msra.mxu0 0.0
        %5548 = vmatprep.subr.mxu0 0.0
        %5549 = vmatpush1.msra.mxu0 0.0
        %5550 = vmatprep.subr.mxu0 0.0
        %5551 = vmatpush1.msra.mxu0 0.0
        %5552 = vmatprep.subr.mxu0 0.0
        %5553 = vmatpush1.msra.mxu0 0.0
        %5554 = vmatprep.subr.mxu0 0.0
        %5555 = vmatpush1.msra.mxu0 0.0
        %5556 = vmatprep.subr.mxu0 0.0
        %5557 = vmatpush1.msra.mxu0 0.0
        %5558 = vmatprep.subr.mxu0 0.0
        %5559 = vmatpush1.msra.mxu0 0.0
        %5560 = vmatprep.subr.mxu0 0.0
        %5561 = vmatpush1.msra.mxu0 0.0
        %5562 = vmatprep.mubr.f32.mxu0 0.0
        %v5563 = vand.u32 %v4499, 4294901760
        %5564 = vmatmul.mubr.f32.gmra.mrb[0].mxu0 %v5563
        %v5565 = vpop.f32.mrb[0].mxu0
        %v5566 = vadd.f32 %v5464, %v5565
        %v5567 = vpop.f32.mrb[0].mxu0
        %v5568 = vadd.f32 %v5466, %v5567
        %5569 = vdwg.mxu0
        %v5570 = vand.u32 %v4326, 4294901760
        %5571 = vmatprep.subr.mxu0 %v5570
        %v5572 = vand.u32 %v4311, 4294901760
        %5573 = vmatpush1.msra.mxu0 %v5572
        %v5574 = vand.u32 %v4327, 4294901760
        %5575 = vmatprep.subr.mxu0 %v5574
        %v5576 = vand.u32 %v4312, 4294901760
        %5577 = vmatpush1.msra.mxu0 %v5576
        %v5578 = vand.u32 %v4328, 4294901760
        %5579 = vmatprep.subr.mxu0 %v5578
        %v5580 = vand.u32 %v4313, 4294901760
        %5581 = vmatpush1.msra.mxu0 %v5580
        %v5582 = vand.u32 %v4329, 4294901760
        %5583 = vmatprep.subr.mxu0 %v5582
        %v5584 = vand.u32 %v4314, 4294901760
        %5585 = vmatpush1.msra.mxu0 %v5584
        %v5586 = vand.u32 %v4512, 4294901760
        %5587 = vmatprep.subr.mxu0 %v5586
        %v5588 = vand.u32 %v4509, 4294901760
        %5589 = vmatpush1.msra.mxu0 %v5588
        %5590 = vmatprep.subr.mxu0 0.0
        %5591 = vmatpush1.msra.mxu0 0.0
        %5592 = vmatprep.subr.mxu0 0.0
        %5593 = vmatpush1.msra.mxu0 0.0
        %5594 = vmatprep.subr.mxu0 0.0
        %5595 = vmatpush1.msra.mxu0 0.0
        %5596 = vmatprep.subr.mxu0 0.0
        %5597 = vmatpush1.msra.mxu0 0.0
        %5598 = vmatprep.subr.mxu0 0.0
        %5599 = vmatpush1.msra.mxu0 0.0
        %5600 = vmatprep.subr.mxu0 0.0
        %5601 = vmatpush1.msra.mxu0 0.0
        %5602 = vmatprep.subr.mxu0 0.0
        %5603 = vmatpush1.msra.mxu0 0.0
        %5604 = vmatprep.subr.mxu0 0.0
        %5605 = vmatpush1.msra.mxu0 0.0
        %5606 = vmatprep.subr.mxu0 0.0
        %5607 = vmatpush1.msra.mxu0 0.0
        %5608 = vmatprep.subr.mxu0 0.0
        %5609 = vmatpush1.msra.mxu0 0.0
        %5610 = vmatprep.subr.mxu0 0.0
        %5611 = vmatpush1.msra.mxu0 0.0
        %5612 = vmatprep.subr.mxu0 0.0
        %5613 = vmatpush1.msra.mxu0 0.0
        %5614 = vmatprep.subr.mxu0 0.0
        %5615 = vmatpush1.msra.mxu0 0.0
        %5616 = vmatprep.subr.mxu0 0.0
        %5617 = vmatpush1.msra.mxu0 0.0
        %5618 = vmatprep.subr.mxu0 0.0
        %5619 = vmatpush1.msra.mxu0 0.0
        %5620 = vmatprep.subr.mxu0 0.0
        %5621 = vmatpush1.msra.mxu0 0.0
        %5622 = vmatprep.subr.mxu0 0.0
        %5623 = vmatpush1.msra.mxu0 0.0
        %5624 = vmatprep.subr.mxu0 0.0
        %5625 = vmatpush1.msra.mxu0 0.0
        %5626 = vmatprep.subr.mxu0 0.0
        %5627 = vmatpush1.msra.mxu0 0.0
        %5628 = vmatprep.subr.mxu0 0.0
        %5629 = vmatpush1.msra.mxu0 0.0
        %5630 = vmatprep.subr.mxu0 0.0
        %5631 = vmatpush1.msra.mxu0 0.0
        %5632 = vmatprep.subr.mxu0 0.0
        %5633 = vmatpush1.msra.mxu0 0.0
        %5634 = vmatprep.subr.mxu0 0.0
        %5635 = vmatpush1.msra.mxu0 0.0
        %5636 = vmatprep.subr.mxu0 0.0
        %5637 = vmatpush1.msra.mxu0 0.0
        %5638 = vmatprep.subr.mxu0 0.0
        %5639 = vmatpush1.msra.mxu0 0.0
        %5640 = vmatprep.subr.mxu0 0.0
        %5641 = vmatpush1.msra.mxu0 0.0
        %5642 = vmatprep.subr.mxu0 0.0
        %5643 = vmatpush1.msra.mxu0 0.0
        %5644 = vmatprep.mubr.f32.mxu0 0.0
        %v5645 = vand.u32 %v4499, 4294901760
        %5646 = vmatmul.mubr.f32.gmra.mrb[0].mxu0 %v5645
        %v5647 = vpop.f32.mrb[0].mxu0
        %v5648 = vadd.f32 %v5566, %v5647
        %v5649 = vpop.f32.mrb[0].mxu0
        %v5650 = vadd.f32 %v5568, %v5649
        %5651 = vdwg.mxu0
        %5653 = vrot.lane.b32.xlu0 %v5079, 96
        %v5654 = vpop.permute.xlu0 %5653
        %5656 = vrot.lane.b32.xlu0 %v5079, 64
        %v5657 = vpop.permute.xlu0 %5656
        %5659 = vrot.lane.b32.xlu0 %v5079, 32
        %v5660 = vpop.permute.xlu0 %5659
        %5663 = vrot.lane.b32.xlu0 %v5081, 96
        %v5664 = vpop.permute.xlu0 %5663
        %5666 = vrot.lane.b32.xlu0 %v5081, 64
        %v5667 = vpop.permute.xlu0 %5666
        %5669 = vrot.lane.b32.xlu0 %v5081, 32
        %v5670 = vpop.permute.xlu0 %5669
        %5673 = vrot.lane.b32.xlu0 %v5648, 96
        %v5674 = vpop.permute.xlu0 %5673
        %5676 = vrot.lane.b32.xlu0 %v5648, 64
        %v5677 = vpop.permute.xlu0 %5676
        %5679 = vrot.lane.b32.xlu0 %v5648, 32
        %v5680 = vpop.permute.xlu0 %5679
        %5683 = vrot.lane.b32.xlu0 %v5650, 96
        %v5684 = vpop.permute.xlu0 %5683
        %5686 = vrot.lane.b32.xlu0 %v5650, 64
        %v5687 = vpop.permute.xlu0 %5686
        %5689 = vrot.lane.b32.xlu0 %v5650, 32
        %v5690 = vpop.permute.xlu0 %5689
        %v5692 = vcombine.low %v5079, %v5657
        %v5693 = vcombine.high %v5079, %v5657
        %v5695 = vunpack.c.l.s4 1983009808
        %v5696 = vunpack.c.0.s8 %v5695
        %v5697 = vlaneseq
        %v5698 = vshrl.u32 %v5697, 7
        %v5699 = vsub.s32 %v5696, %v5698
        %v5700 = vrot.slane %v5692, %v5699
        %v5702 = vunpack.c.l.s4 1983009808
        %v5703 = vunpack.c.0.s8 %v5702
        %v5704 = vlaneseq
        %v5705 = vshrl.u32 %v5704, 7
        %v5706 = vsub.s32 %v5703, %v5705
        %v5707 = vrot.slane %v5693, %v5706
        %v5708 = vcombine.low %v5654, %v5660
        %v5709 = vcombine.high %v5654, %v5660
        %v5711 = vunpack.c.l.s4 1983009808
        %v5712 = vunpack.c.0.s8 %v5711
        %v5713 = vlaneseq
        %v5714 = vshrl.u32 %v5713, 7
        %v5715 = vsub.s32 %v5712, %v5714
        %v5716 = vrot.slane %v5708, %v5715
        %v5718 = vunpack.c.l.s4 1983009808
        %v5719 = vunpack.c.0.s8 %v5718
        %v5720 = vlaneseq
        %v5721 = vshrl.u32 %v5720, 7
        %v5722 = vsub.s32 %v5719, %v5721
        %v5723 = vrot.slane %v5709, %v5722
        %v5724 = vcombine.low %v5081, %v5667
        %v5725 = vcombine.high %v5081, %v5667
        %v5727 = vunpack.c.l.s4 1983009808
        %v5728 = vunpack.c.0.s8 %v5727
        %v5729 = vlaneseq
        %v5730 = vshrl.u32 %v5729, 7
        %v5731 = vsub.s32 %v5728, %v5730
        %v5732 = vrot.slane %v5724, %v5731
        %v5734 = vunpack.c.l.s4 1983009808
        %v5735 = vunpack.c.0.s8 %v5734
        %v5736 = vlaneseq
        %v5737 = vshrl.u32 %v5736, 7
        %v5738 = vsub.s32 %v5735, %v5737
        %v5739 = vrot.slane %v5725, %v5738
        %v5740 = vcombine.low %v5664, %v5670
        %v5741 = vcombine.high %v5664, %v5670
        %v5743 = vunpack.c.l.s4 1983009808
        %v5744 = vunpack.c.0.s8 %v5743
        %v5745 = vlaneseq
        %v5746 = vshrl.u32 %v5745, 7
        %v5747 = vsub.s32 %v5744, %v5746
        %v5748 = vrot.slane %v5740, %v5747
        %v5750 = vunpack.c.l.s4 1983009808
        %v5751 = vunpack.c.0.s8 %v5750
        %v5752 = vlaneseq
        %v5753 = vshrl.u32 %v5752, 7
        %v5754 = vsub.s32 %v5751, %v5753
        %v5755 = vrot.slane %v5741, %v5754
        %v5756 = vcombine.low %v5700, %v5716
        %v5757 = vcombine.high %v5700, %v5716
        %v5759 = vunpack.c.l.s4 1934713408
        %v5760 = vunpack.c.0.s8 %v5759
        %v5761 = vlaneseq
        %v5762 = vshrl.u32 %v5761, 7
        %v5763 = vsub.s32 %v5760, %v5762
        %v5764 = vrot.slane %v5756, %v5763
        %v5766 = vunpack.c.l.s4 1934713408
        %v5767 = vunpack.c.0.s8 %v5766
        %v5768 = vlaneseq
        %v5769 = vshrl.u32 %v5768, 7
        %v5770 = vsub.s32 %v5767, %v5769
        %v5771 = vrot.slane %v5757, %v5770
        %v5772 = vcombine.low %v5707, %v5723
        %v5773 = vcombine.high %v5707, %v5723
        %v5775 = vunpack.c.l.s4 1934713408
        %v5776 = vunpack.c.0.s8 %v5775
        %v5777 = vlaneseq
        %v5778 = vshrl.u32 %v5777, 7
        %v5779 = vsub.s32 %v5776, %v5778
        %v5780 = vrot.slane %v5772, %v5779
        %v5782 = vunpack.c.l.s4 1934713408
        %v5783 = vunpack.c.0.s8 %v5782
        %v5784 = vlaneseq
        %v5785 = vshrl.u32 %v5784, 7
        %v5786 = vsub.s32 %v5783, %v5785
        %v5787 = vrot.slane %v5773, %v5786
        %v5788 = vcombine.low %v5732, %v5748
        %v5789 = vcombine.high %v5732, %v5748
        %v5791 = vunpack.c.l.s4 1934713408
        %v5792 = vunpack.c.0.s8 %v5791
        %v5793 = vlaneseq
        %v5794 = vshrl.u32 %v5793, 7
        %v5795 = vsub.s32 %v5792, %v5794
        %v5796 = vrot.slane %v5788, %v5795
        %v5798 = vunpack.c.l.s4 1934713408
        %v5799 = vunpack.c.0.s8 %v5798
        %v5800 = vlaneseq
        %v5801 = vshrl.u32 %v5800, 7
        %v5802 = vsub.s32 %v5799, %v5801
        %v5803 = vrot.slane %v5789, %v5802
        %v5804 = vcombine.low %v5739, %v5755
        %v5805 = vcombine.high %v5739, %v5755
        %v5807 = vunpack.c.l.s4 1934713408
        %v5808 = vunpack.c.0.s8 %v5807
        %v5809 = vlaneseq
        %v5810 = vshrl.u32 %v5809, 7
        %v5811 = vsub.s32 %v5808, %v5810
        %v5812 = vrot.slane %v5804, %v5811
        %v5814 = vunpack.c.l.s4 1934713408
        %v5815 = vunpack.c.0.s8 %v5814
        %v5816 = vlaneseq
        %v5817 = vshrl.u32 %v5816, 7
        %v5818 = vsub.s32 %v5815, %v5817
        %v5819 = vrot.slane %v5805, %v5818
        %v5820 = vcombine.low %v5764, %v5796
        %v5821 = vcombine.high %v5764, %v5796
        %v5822 = vcombine.low %v5771, %v5803
        %v5823 = vcombine.high %v5771, %v5803
        %v5824 = vcombine.low %v5780, %v5812
        %v5825 = vcombine.high %v5780, %v5812
        %v5826 = vcombine.low %v5787, %v5819
        %v5827 = vcombine.high %v5787, %v5819
        %v5828 = vcombine.low %v5648, %v5677
        %v5829 = vcombine.high %v5648, %v5677
        %v5831 = vunpack.c.l.s4 1983009808
        %v5832 = vunpack.c.0.s8 %v5831
        %v5833 = vlaneseq
        %v5834 = vshrl.u32 %v5833, 7
        %v5835 = vsub.s32 %v5832, %v5834
        %v5836 = vrot.slane %v5828, %v5835
        %v5838 = vunpack.c.l.s4 1983009808
        %v5839 = vunpack.c.0.s8 %v5838
        %v5840 = vlaneseq
        %v5841 = vshrl.u32 %v5840, 7
        %v5842 = vsub.s32 %v5839, %v5841
        %v5843 = vrot.slane %v5829, %v5842
        %v5844 = vcombine.low %v5674, %v5680
        %v5845 = vcombine.high %v5674, %v5680
        %v5847 = vunpack.c.l.s4 1983009808
        %v5848 = vunpack.c.0.s8 %v5847
        %v5849 = vlaneseq
        %v5850 = vshrl.u32 %v5849, 7
        %v5851 = vsub.s32 %v5848, %v5850
        %v5852 = vrot.slane %v5844, %v5851
        %v5854 = vunpack.c.l.s4 1983009808
        %v5855 = vunpack.c.0.s8 %v5854
        %v5856 = vlaneseq
        %v5857 = vshrl.u32 %v5856, 7
        %v5858 = vsub.s32 %v5855, %v5857
        %v5859 = vrot.slane %v5845, %v5858
        %v5860 = vcombine.low %v5650, %v5687
        %v5861 = vcombine.high %v5650, %v5687
        %v5863 = vunpack.c.l.s4 1983009808
        %v5864 = vunpack.c.0.s8 %v5863
        %v5865 = vlaneseq
        %v5866 = vshrl.u32 %v5865, 7
        %v5867 = vsub.s32 %v5864, %v5866
        %v5868 = vrot.slane %v5860, %v5867
        %v5870 = vunpack.c.l.s4 1983009808
        %v5871 = vunpack.c.0.s8 %v5870
        %v5872 = vlaneseq
        %v5873 = vshrl.u32 %v5872, 7
        %v5874 = vsub.s32 %v5871, %v5873
        %v5875 = vrot.slane %v5861, %v5874
        %v5876 = vcombine.low %v5684, %v5690
        %v5877 = vcombine.high %v5684, %v5690
        %v5879 = vunpack.c.l.s4 1983009808
        %v5880 = vunpack.c.0.s8 %v5879
        %v5881 = vlaneseq
        %v5882 = vshrl.u32 %v5881, 7
        %v5883 = vsub.s32 %v5880, %v5882
        %v5884 = vrot.slane %v5876, %v5883
        %v5886 = vunpack.c.l.s4 1983009808
        %v5887 = vunpack.c.0.s8 %v5886
        %v5888 = vlaneseq
        %v5889 = vshrl.u32 %v5888, 7
        %v5890 = vsub.s32 %v5887, %v5889
        %v5891 = vrot.slane %v5877, %v5890
        %v5892 = vcombine.low %v5836, %v5852
        %v5893 = vcombine.high %v5836, %v5852
        %v5895 = vunpack.c.l.s4 1934713408
        %v5896 = vunpack.c.0.s8 %v5895
        %v5897 = vlaneseq
        %v5898 = vshrl.u32 %v5897, 7
        %v5899 = vsub.s32 %v5896, %v5898
        %v5900 = vrot.slane %v5892, %v5899
        %v5902 = vunpack.c.l.s4 1934713408
        %v5903 = vunpack.c.0.s8 %v5902
        %v5904 = vlaneseq
        %v5905 = vshrl.u32 %v5904, 7
        %v5906 = vsub.s32 %v5903, %v5905
        %v5907 = vrot.slane %v5893, %v5906
        %v5908 = vcombine.low %v5843, %v5859
        %v5909 = vcombine.high %v5843, %v5859
        %v5911 = vunpack.c.l.s4 1934713408
        %v5912 = vunpack.c.0.s8 %v5911
        %v5913 = vlaneseq
        %v5914 = vshrl.u32 %v5913, 7
        %v5915 = vsub.s32 %v5912, %v5914
        %v5916 = vrot.slane %v5908, %v5915
        %v5918 = vunpack.c.l.s4 1934713408
        %v5919 = vunpack.c.0.s8 %v5918
        %v5920 = vlaneseq
        %v5921 = vshrl.u32 %v5920, 7
        %v5922 = vsub.s32 %v5919, %v5921
        %v5923 = vrot.slane %v5909, %v5922
        %v5924 = vcombine.low %v5868, %v5884
        %v5925 = vcombine.high %v5868, %v5884
        %v5927 = vunpack.c.l.s4 1934713408
        %v5928 = vunpack.c.0.s8 %v5927
        %v5929 = vlaneseq
        %v5930 = vshrl.u32 %v5929, 7
        %v5931 = vsub.s32 %v5928, %v5930
        %v5932 = vrot.slane %v5924, %v5931
        %v5934 = vunpack.c.l.s4 1934713408
        %v5935 = vunpack.c.0.s8 %v5934
        %v5936 = vlaneseq
        %v5937 = vshrl.u32 %v5936, 7
        %v5938 = vsub.s32 %v5935, %v5937
        %v5939 = vrot.slane %v5925, %v5938
        %v5940 = vcombine.low %v5875, %v5891
        %v5941 = vcombine.high %v5875, %v5891
        %v5943 = vunpack.c.l.s4 1934713408
        %v5944 = vunpack.c.0.s8 %v5943
        %v5945 = vlaneseq
        %v5946 = vshrl.u32 %v5945, 7
        %v5947 = vsub.s32 %v5944, %v5946
        %v5948 = vrot.slane %v5940, %v5947
        %v5950 = vunpack.c.l.s4 1934713408
        %v5951 = vunpack.c.0.s8 %v5950
        %v5952 = vlaneseq
        %v5953 = vshrl.u32 %v5952, 7
        %v5954 = vsub.s32 %v5951, %v5953
        %v5955 = vrot.slane %v5941, %v5954
        %v5956 = vcombine.low %v5900, %v5932
        %v5957 = vcombine.high %v5900, %v5932
        %v5958 = vcombine.low %v5907, %v5939
        %v5959 = vcombine.high %v5907, %v5939
        %v5960 = vcombine.low %v5916, %v5948
        %v5961 = vcombine.high %v5916, %v5948
        %v5962 = vcombine.low %v5923, %v5955
        %v5963 = vcombine.high %v5923, %v5955
        %5964 = vst.msk [vmem:[%s251] sm:$0xff] %vm4268, %v5820
        %5965 = vst.msk [vmem:[%s251 + $0x8] sm:$0xff] %vm4268, %v5956
        %5966 = vst.msk [vmem:[%s251 + $0x10] sm:$0xff] %vm4268, %v5821
        %5967 = vst.msk [vmem:[%s251 + $0x18] sm:$0xff] %vm4268, %v5957
        %5968 = vst.msk [vmem:[%s251 + $0x20] sm:$0xff] %vm4268, %v5822
        %5969 = vst.msk [vmem:[%s251 + $0x28] sm:$0xff] %vm4268, %v5958
        %5970 = vst.msk [vmem:[%s251 + $0x30] sm:$0xff] %vm4268, %v5823
        %5971 = vst.msk [vmem:[%s251 + $0x38] sm:$0xff] %vm4268, %v5959
        %5972 = vst.msk [vmem:[%s251 + $0x40] sm:$0xff] %vm4268, %v5824
        %5973 = vst.msk [vmem:[%s251 + $0x48] sm:$0xff] %vm4268, %v5960
        %5974 = vst.msk [vmem:[%s251 + $0x50] sm:$0xff] %vm4268, %v5825
        %5975 = vst.msk [vmem:[%s251 + $0x58] sm:$0xff] %vm4268, %v5961
        %5976 = vst.msk [vmem:[%s251 + $0x60] sm:$0xff] %vm4268, %v5826
        %5977 = vst.msk [vmem:[%s251 + $0x68] sm:$0xff] %vm4268, %v5962
        %5978 = vst.msk [vmem:[%s251 + $0x70] sm:$0xff] %vm4268, %v5827
        %5979 = vst.msk [vmem:[%s251 + $0x78] sm:$0xff] %vm4268, %v5963
        %s5980 = sand.u32 %s144, 1
        %s5981 = scalar_lea.sflag [#allocation6], %s5980
        %s5982 = sand.u32 %s144, 1
        %s5983 = smul.addr %s5982, 128
        %s5984 = scalar_lea.vmem [#allocation7], %s5983
        // Predicated region
        $region41: #{tpu_custom_call.1} parent=35 // pred_check
          %p5985 = pneg %p154
        $region42: #{tpu_custom_call.1} parent=35 // pred_check_branch
          %5987 = sbr.rel (%p5985) target = $region44
        $region43: #{tpu_custom_call.1} parent=35 // pred_region
          #allocation9 [shape = 'u32[6]{0}', space=smem, size = 0x18, scoped, tag = 'DMA stride descriptor']
          %s5988 = smul.u32 2, %s33
          %s5990 = ssub.s32 2048, 2048
          %5991 = vsyncadd %s5981, %s5990
          %s5992 = smul.addr %s32, 32
          %s5993 = sadd.s32 %s5988, %s5992
          %s5994 = smul.addr %s5993, 128
          %s5995 = scalar_lea.hbm %s5, %s5994
          %s5997 = sshll.u32 1, 14
          %s5998 = sxor.u32 4294967295, %s5997
          %s6001 = sshll.u32 7, 18
          %s6002 = sxor.u32 4294967295, %s6001
          %s6003 = sand.u32 0, %s6002
          %s6005 = sor.u32 %s6003, 0
          %s6007 = sshll.u32 3, 24
          %s6008 = sxor.u32 4294967295, %s6007
          %s6009 = sand.u32 %s6005, %s6008
          %s6011 = sor.u32 %s6009, 0
          %s6012 = sshll.u32 %s5984, 4
          %s6013 = int_to_ptr.vmem [resolvable:$true] %s6012
          %6019 = sst [smem:[#allocation9]] 256
          %s6020 = scalar_lea.smem [#allocation9], 1
          %6021 = sst [smem:[%s6020]] 512
          %s6022 = scalar_lea.smem [#allocation9], 2
          %6023 = sst [smem:[%s6022]] 2
          %s6024 = scalar_lea.smem [#allocation9], 3
          %6025 = sst [smem:[%s6024]] 128
          %s6026 = scalar_lea.smem [#allocation9], 4
          %6027 = sst [smem:[%s6026]] 128
          %s6028 = scalar_lea.smem [#allocation9], 5
          %6029 = sst [smem:[%s6028]] 8
          %6031 = dma.general %s6013, 2048, %s5995, %s5981, [#allocation8], [#allocation9], %s6011, 0
        $region44: #{tpu_custom_call.1} parent=35 // pred_fallthru
          _
      $region36: #{tpu_custom_call.1} parent=5 // pred_fallthru
        _
      %p6032 = scmp.le.s32.totalorder 2, %s23
      // Predicated region
      $region45: #{tpu_custom_call.1} parent=5 // pred_check
        %p6033 = pneg %p6032
      $region46: #{tpu_custom_call.1} parent=5 // pred_check_branch
        %6035 = sbr.rel (%p6033) target = $region48
      $region47: #{tpu_custom_call.1} parent=5 // pred_region
        %s6036 = ssub.s32 %s23, 2
        // Predicated region
        $region49: #{tpu_custom_call.1} parent=47 // pred_check
          %p6037 = pneg %p160
        $region50: #{tpu_custom_call.1} parent=47 // pred_check_branch
          %6039 = sbr.rel (%p6037) target = $region52
        $region51: #{tpu_custom_call.1} parent=47 // pred_region
          %s6040 = sand.u32 %s145, 1
          %s6041 = scalar_lea.sflag [#allocation6], %s6040
          %s6042 = sand.u32 %s145, 1
          %s6043 = smul.addr %s6042, 128
          %s6044 = scalar_lea.vmem [#allocation7], %s6043
          %6045 = dma.done %s6041, 2048
        $region52: #{tpu_custom_call.1} parent=47 // pred_fallthru
          _
      $region48: #{tpu_custom_call.1} parent=5 // pred_fallthru
        _
    $region6: #{tpu_custom_call.1} parent=1 // loop_footer
      %s27 = sadd.s32 1, %s23
    $region7: #{tpu_custom_call.1} parent=1 // loop_footer_branch
      %22 = sbr.rel target = $region3
    $region8: #{tpu_custom_call.1} parent=1 // loop_exit
      _
    %6046 = vsyncpa [#allocation5], 1
    %s6047 = scalar_lea.sflag [#allocation5], 1
    %6048 = vsyncpa %s6047, 1
    %6049 = vsyncpa [#allocation6], 1
    %s6050 = scalar_lea.sflag [#allocation6], 1
    %6051 = vsyncpa %s6050, 1

</llo_original>
